<compile_context>
chip_gen: v5e
topology: v5e:2x2
jax: 0.10.0
libtpu: 0.0.40
codegen_flags: <defaults>
</compile_context>

<pallas_src>
import jax
import jax.numpy as jnp
from jax import lax
from jax.experimental import pallas as pl
from jax.experimental.pallas import tpu as pltpu


def section2_kernel(x_ref, w3_ref, w4_ref, o_ref, xpad_ref):
    # x_ref   : (B, H, W, Cin)          unpadded NHWC input block
    # w3_ref  : (4, Cin, Co)            conv3 weights, tap-major (kh*2+kw)
    # w4_ref  : (4, Co, Co)             conv4 weights, pre-scaled by 0.25
    # o_ref   : (1, B, Co*PH*PW)        lane-dense NCHW-flattened output block
    # xpad_ref: (B, H+2, W+2, Cin)      VMEM scratch for conv3's padding=1
    B, H, W, Cin = x_ref.shape
    Co = w3_ref.shape[2]
    Hp, Wp = H + 2, W + 2
    OH1, OW1 = H + 1, W + 1            # conv3 output (k=2, s=1, p=1)
    OH2, OW2 = H, W                    # conv4 output (k=2, s=1)
    PH, PW = OH2 // 2, OW2 // 2        # AvgPool2d(2), floor semantics

    # ---- conv3's padding=1: zero only the 1-wide border strips (cheap and safe under
    # megacore 'parallel' grid splitting, unlike a program_id==0-guarded full zero);
    # the interior is fully overwritten every step.
    zrow = jnp.zeros((B, 1, Wp, Cin), xpad_ref.dtype)
    zcol = jnp.zeros((B, Hp, 1, Cin), xpad_ref.dtype)
    xpad_ref[:, 0:1, :, :] = zrow
    xpad_ref[:, Hp - 1:Hp, :, :] = zrow
    xpad_ref[:, :, 0:1, :] = zcol
    xpad_ref[:, :, Wp - 1:Wp, :] = zcol
    xpad_ref[:, 1:Hp - 1, 1:Wp - 1, :] = x_ref[...].astype(xpad_ref.dtype)

    # ---- 2x2 conv as 4 per-tap matmuls accumulated in registers (no lane-axis concat,
    # no accumulator scratch / zero-init). Tap order matches the (kh, kw) weight stack.
    def conv2x2(src, oh, ow, cin, w_ref):
        acc = None
        for t, (dy, dx) in enumerate(((0, 0), (0, 1), (1, 0), (1, 1))):
            tap = src[:, dy:dy + oh, dx:dx + ow, :].reshape(B * oh * ow, cin)
            part = jnp.dot(tap, w_ref[t], preferred_element_type=jnp.float32)
            acc = part if acc is None else acc + part
        return acc

    # conv3 + ReLU
    h1 = jnp.maximum(conv2x2(xpad_ref, OH1, OW1, Cin, w3_ref), 0.0)
    h1 = h1.reshape(B, OH1, OW1, Co)

    # conv4 + ReLU (w4 pre-scaled by 0.25 so the avg pool is a plain sum)
    h2 = jnp.maximum(conv2x2(h1, OH2, OW2, Co, w4_ref), 0.0)
    h2 = h2.reshape(B, OH2, OW2, Co)
    if (OH2 % 2) or (OW2 % 2):
        h2 = h2[:, :PH * 2, :PW * 2, :]

    # ---- AvgPool2d(2): two-stage slice-adds on the VPU (1/4 folded into w4).
    h2 = h2.reshape(B, PH * 2, PW, 2, Co)
    hw = h2[:, :, :, 0, :] + h2[:, :, :, 1, :]            # (B, 2*PH, PW, Co)
    hw = hw.reshape(B, PH, 2, PW, Co)
    pooled = hw[:, :, 0, :, :] + hw[:, :, 1, :, :]        # (B, PH, PW, Co)

    # Dropout(p=0.25): identity in eval mode.
    # TODO(synk): training-mode stochastic dropout (pltpu.prng_*) not implemented here.

    # ---- Lane-dense output in NCHW-flatten order: (B,PH,PW,Co) -> (B,Co,PH*PW) -> (B,F).
    # The small transpose runs on the otherwise-idle XLU; the final store is unmasked.
    pooled = jnp.swapaxes(pooled.reshape(B, PH * PW, Co), 1, 2)   # (B, Co, PH*PW)
    o_ref[0] = pooled.reshape(B, Co * PH * PW).astype(o_ref.dtype)


def section2_forward(x_nchw, w3_oihw, w4_oihw, *, block_n=None):
    """x_nchw: (N, 36, H, W); weights in torch OIHW layout. Returns (N, 64*(H//2)*(W//2))."""
    N, Cin, H, W = x_nchw.shape
    Co = w3_oihw.shape[0]                       # 64
    PH, PW = H // 2, W // 2
    F_out = Co * PH * PW

    try:
        kind = jax.devices()[0].device_kind.lower()
    except Exception:  # pragma: no cover
        kind = ""

    # Generation-aware block sizing:
    #  * v6e: single TensorCore, 128 MiB VMEM -> one big step (grid loop is sequential).
    #  * v5e / v7x / unknown: keep >= 2 grid steps so both v7x cores get work, capped at
    #    32 images/step (~0.4 MB lane-padded VMEM per image keeps us inside the scoped budget).
    if block_n is None:
        if "v6" in kind:
            block_n = max(1, min(64, N))
        else:
            block_n = max(1, min(32, (N + 1) // 2))
    G = -(-N // block_n)                        # ceil(N / block_n)
    N_pad = G * block_n

    # Scoped-VMEM limit: generous margin over the estimated per-step footprint, capped
    # below the physical VMEM of the smallest target (v7x has 64 MiB / core).
    vmem_needed = block_n * (512 << 10) + (8 << 20)
    vmem_cap = (100 << 20) if ("v5" in kind or "v6" in kind) else (40 << 20)
    vmem_limit = min(max(vmem_needed, 32 << 20), vmem_cap)

    # Layout glue: NCHW -> NHWC (channels on lanes).
    # TODO(synk): this input transpose is still a wrapper-side XLA pass (input is small).
    x = jnp.transpose(x_nchw, (0, 2, 3, 1)).astype(jnp.float32)
    if N_pad != N:
        x = jnp.pad(x, ((0, N_pad - N), (0, 0), (0, 0), (0, 0)))

    # Tap-stacked weight matrices, tap index = kh*2 + kw, each tap (Cin, Co).
    # Fold the avg-pool's 1/4 into w4 (exact: power-of-two scale commutes with ReLU/sum).
    w3_t = jnp.transpose(w3_oihw, (2, 3, 1, 0)).reshape(4, Cin, Co).astype(jnp.float32)
    w4_t = (jnp.transpose(w4_oihw, (2, 3, 1, 0)).reshape(4, Co, Co) * 0.25).astype(jnp.float32)

    flops = 2 * N_pad * ((H + 1) * (W + 1) * 4 * Cin * Co + H * W * 4 * Co * Co)
    bytes_accessed = 4 * (x.size + w3_t.size + w4_t.size + N_pad * F_out)

    pooled = pl.pallas_call(
        section2_kernel,
        out_shape=jax.ShapeDtypeStruct((G, block_n, F_out), jnp.float32),
        grid=(G,),
        in_specs=[
            pl.BlockSpec((block_n, H, W, Cin), lambda n: (n, 0, 0, 0)),
            pl.BlockSpec((4, Cin, Co), lambda n: (0, 0, 0)),
            pl.BlockSpec((4, Co, Co), lambda n: (0, 0, 0)),
        ],
        out_specs=pl.BlockSpec((1, block_n, F_out), lambda n: (n, 0, 0)),
        scratch_shapes=[pltpu.VMEM((block_n, H + 2, W + 2, Cin), jnp.float32)],
        compiler_params=pltpu.CompilerParams(
            dimension_semantics=("parallel",),
            vmem_limit_bytes=vmem_limit),
        cost_estimate=pl.CostEstimate(flops=flops, transcendentals=0,
                                      bytes_accessed=bytes_accessed),
    )(x, w3_t, w4_t)

    # Already in NCHW-flatten order; this reshape is a free metadata op.
    return pooled.reshape(N_pad, F_out)[:N]


def _reference(x_nchw, w3, w4):
    """Pure-JAX reference using lax.conv (NCHW / OIHW) for correctness checking."""
    dn = ("NCHW", "OIHW", "NCHW")
    h = lax.conv_general_dilated(x_nchw, w3, (1, 1), ((1, 1), (1, 1)),
                                 dimension_numbers=dn)
    h = jnp.maximum(h, 0.0)
    h = lax.conv_general_dilated(h, w4, (1, 1), ((0, 0), (0, 0)),
                                 dimension_numbers=dn)
    h = jnp.maximum(h, 0.0)
    N, Co, Hh, Ww = h.shape
    h = h[:, :, :(Hh // 2) * 2, :(Ww // 2) * 2]
    h = h.reshape(N, Co, Hh // 2, 2, Ww // 2, 2).mean(axis=(3, 5))
    return h.reshape(N, -1)


if __name__ == "__main__":
    key = jax.random.PRNGKey(0)
    k_x, k_w3, k_w4 = jax.random.split(key, 3)

    # Small shapes consistent with the module: Conv2d(36, 64, 2, padding=1) input.
    N, Cin, H, W = 4, 36, 8, 8
    x = jax.random.normal(k_x, (N, Cin, H, W), dtype=jnp.float32)
    w3 = jax.random.normal(k_w3, (64, 36, 2, 2), dtype=jnp.float32) * (1.0 / (36 * 4) ** 0.5)
    w4 = jax.random.normal(k_w4, (64, 64, 2, 2), dtype=jnp.float32) * (1.0 / (64 * 4) ** 0.5)

    out = jax.block_until_ready(section2_forward(x, w3, w4))
    ref = jax.block_until_ready(_reference(x, w3, w4))

    assert out.shape == (N, 64 * (H // 2) * (W // 2)), out.shape
    max_err = float(jnp.max(jnp.abs(out - ref)))
    assert jnp.allclose(out, ref, rtol=1e-4, atol=1e-4), max_err

    print("KERNEL_OK")
</pallas_src>

<mosaic_0001>
module attributes {stable_mosaic.version = 11 : i64} {
  func.func @section2_kernel(%arg0: i32, %arg1: memref<2x8x8x36xf32, #tpu.memory_space<vmem>>, %arg2: memref<4x36x64xf32, #tpu.memory_space<vmem>>, %arg3: memref<4x64x64xf32, #tpu.memory_space<vmem>>, %arg4: memref<1x2x1024xf32, #tpu.memory_space<vmem>>, %arg5: memref<2x10x10x36xf32, #tpu.memory_space<vmem>>) attributes {dimension_semantics = [#tpu.dimension_semantics<parallel>], iteration_bounds = array<i64: 2>, scalar_prefetch = 0 : i64, scratch_operands = 1 : i64, tpu.core_type = #tpu.core_type<tc>, window_params = [{transform_indices = @transform_0, window_bounds = array<i64: 2, 8, 8, 36>}, {pipeline_mode = #tpu.pipeline_mode<synchronous>, transform_indices = @transform_1, window_bounds = array<i64: 4, 36, 64>}, {pipeline_mode = #tpu.pipeline_mode<synchronous>, transform_indices = @transform_2, window_bounds = array<i64: 4, 64, 64>}, {transform_indices = @transform_3, window_bounds = array<i64: 1, 2, 1024>}]} {
    %cst = arith.constant 0.000000e+00 : f32
    %0 = vector.broadcast %cst : f32 to vector<2x1x10x36xf32>
    %cst_0 = arith.constant 0.000000e+00 : f32
    %1 = vector.broadcast %cst_0 : f32 to vector<2x10x1x36xf32>
    %c0 = arith.constant 0 : index
    %c0_1 = arith.constant 0 : index
    %c0_2 = arith.constant 0 : index
    %c0_3 = arith.constant 0 : index
    %2 = vector.load %arg5[%c0, %c0_1, %c0_2, %c0_3] : memref<2x10x10x36xf32, #tpu.memory_space<vmem>>, vector<2x1x10x36xf32>
    tpu.vector_store %arg5[%c0, %c0_1, %c0_2, %c0_3], %0 {strides = array<i32>} : memref<2x10x10x36xf32, #tpu.memory_space<vmem>>, vector<2x1x10x36xf32>,
    %c0_4 = arith.constant 0 : index
    %c9 = arith.constant 9 : index
    %c0_5 = arith.constant 0 : index
    %c0_6 = arith.constant 0 : index
    %3 = vector.load %arg5[%c0_4, %c9, %c0_5, %c0_6] : memref<2x10x10x36xf32, #tpu.memory_space<vmem>>, vector<2x1x10x36xf32>
    tpu.vector_store %arg5[%c0_4, %c9, %c0_5, %c0_6], %0 {strides = array<i32>} : memref<2x10x10x36xf32, #tpu.memory_space<vmem>>, vector<2x1x10x36xf32>,
    %c0_7 = arith.constant 0 : index
    %c0_8 = arith.constant 0 : index
    %c0_9 = arith.constant 0 : index
    %c0_10 = arith.constant 0 : index
    %4 = vector.load %arg5[%c0_7, %c0_8, %c0_9, %c0_10] : memref<2x10x10x36xf32, #tpu.memory_space<vmem>>, vector<2x10x1x36xf32>
    tpu.vector_store %arg5[%c0_7, %c0_8, %c0_9, %c0_10], %1 {strides = array<i32>} : memref<2x10x10x36xf32, #tpu.memory_space<vmem>>, vector<2x10x1x36xf32>,
    %c0_11 = arith.constant 0 : index
    %c0_12 = arith.constant 0 : index
    %c9_13 = arith.constant 9 : index
    %c0_14 = arith.constant 0 : index
    %5 = vector.load %arg5[%c0_11, %c0_12, %c9_13, %c0_14] : memref<2x10x10x36xf32, #tpu.memory_space<vmem>>, vector<2x10x1x36xf32>
    tpu.vector_store %arg5[%c0_11, %c0_12, %c9_13, %c0_14], %1 {strides = array<i32>} : memref<2x10x10x36xf32, #tpu.memory_space<vmem>>, vector<2x10x1x36xf32>,
    %c0_15 = arith.constant 0 : index
    %c0_16 = arith.constant 0 : index
    %c0_17 = arith.constant 0 : index
    %c0_18 = arith.constant 0 : index
    %6 = vector.load %arg1[%c0_15, %c0_16, %c0_17, %c0_18] : memref<2x8x8x36xf32, #tpu.memory_space<vmem>>, vector<2x8x8x36xf32>
    %c0_19 = arith.constant 0 : index
    %c1 = arith.constant 1 : index
    %c1_20 = arith.constant 1 : index
    %c0_21 = arith.constant 0 : index
    %7 = vector.load %arg5[%c0_19, %c1, %c1_20, %c0_21] : memref<2x10x10x36xf32, #tpu.memory_space<vmem>>, vector<2x8x8x36xf32>
    tpu.vector_store %arg5[%c0_19, %c1, %c1_20, %c0_21], %6 {strides = array<i32>} : memref<2x10x10x36xf32, #tpu.memory_space<vmem>>, vector<2x8x8x36xf32>,
    %c0_22 = arith.constant 0 : index
    %c0_23 = arith.constant 0 : index
    %c0_24 = arith.constant 0 : index
    %c0_25 = arith.constant 0 : index
    %8 = vector.load %arg5[%c0_22, %c0_23, %c0_24, %c0_25] : memref<2x10x10x36xf32, #tpu.memory_space<vmem>>, vector<2x9x9x36xf32>
    %9 = vector.shape_cast %8 : vector<2x9x9x36xf32> to vector<162x36xf32>
    %c0_26 = arith.constant 0 : index
    %c0_27 = arith.constant 0 : index
    %c0_28 = arith.constant 0 : index
    %10 = vector.load %arg2[%c0_26, %c0_27, %c0_28] : memref<4x36x64xf32, #tpu.memory_space<vmem>>, vector<1x36x64xf32>
    %11 = vector.shape_cast %10 : vector<1x36x64xf32> to vector<36x64xf32>
    %cst_29 = arith.constant dense<0.000000e+00> : vector<162x64xf32>
    %12 = tpu.matmul %9, %11, %cst_29 {dimension_numbers = #tpu.dot_dimension_numbers<[1], [0], [0], [1], [0, 0, 1, 1], [], []>} : vector<162x36xf32>, vector<36x64xf32>, vector<162x64xf32> -> vector<162x64xf32>
    %c0_30 = arith.constant 0 : index
    %c0_31 = arith.constant 0 : index
    %c1_32 = arith.constant 1 : index
    %c0_33 = arith.constant 0 : index
    %13 = vector.load %arg5[%c0_30, %c0_31, %c1_32, %c0_33] : memref<2x10x10x36xf32, #tpu.memory_space<vmem>>, vector<2x9x9x36xf32>
    %14 = vector.shape_cast %13 : vector<2x9x9x36xf32> to vector<162x36xf32>
    %c1_34 = arith.constant 1 : index
    %c0_35 = arith.constant 0 : index
    %c0_36 = arith.constant 0 : index
    %15 = vector.load %arg2[%c1_34, %c0_35, %c0_36] : memref<4x36x64xf32, #tpu.memory_space<vmem>>, vector<1x36x64xf32>
    %16 = vector.shape_cast %15 : vector<1x36x64xf32> to vector<36x64xf32>
    %cst_37 = arith.constant dense<0.000000e+00> : vector<162x64xf32>
    %17 = tpu.matmul %14, %16, %cst_37 {dimension_numbers = #tpu.dot_dimension_numbers<[1], [0], [0], [1], [0, 0, 1, 1], [], []>} : vector<162x36xf32>, vector<36x64xf32>, vector<162x64xf32> -> vector<162x64xf32>
    %18 = arith.addf %12, %17 : vector<162x64xf32>
    %c0_38 = arith.constant 0 : index
    %c1_39 = arith.constant 1 : index
    %c0_40 = arith.constant 0 : index
    %c0_41 = arith.constant 0 : index
    %19 = vector.load %arg5[%c0_38, %c1_39, %c0_40, %c0_41] : memref<2x10x10x36xf32, #tpu.memory_space<vmem>>, vector<2x9x9x36xf32>
    %20 = vector.shape_cast %19 : vector<2x9x9x36xf32> to vector<162x36xf32>
    %c2 = arith.constant 2 : index
    %c0_42 = arith.constant 0 : index
    %c0_43 = arith.constant 0 : index
    %21 = vector.load %arg2[%c2, %c0_42, %c0_43] : memref<4x36x64xf32, #tpu.memory_space<vmem>>, vector<1x36x64xf32>
    %22 = vector.shape_cast %21 : vector<1x36x64xf32> to vector<36x64xf32>
    %cst_44 = arith.constant dense<0.000000e+00> : vector<162x64xf32>
    %23 = tpu.matmul %20, %22, %cst_44 {dimension_numbers = #tpu.dot_dimension_numbers<[1], [0], [0], [1], [0, 0, 1, 1], [], []>} : vector<162x36xf32>, vector<36x64xf32>, vector<162x64xf32> -> vector<162x64xf32>
    %24 = arith.addf %18, %23 : vector<162x64xf32>
    %c0_45 = arith.constant 0 : index
    %c1_46 = arith.constant 1 : index
    %c1_47 = arith.constant 1 : index
    %c0_48 = arith.constant 0 : index
    %25 = vector.load %arg5[%c0_45, %c1_46, %c1_47, %c0_48] : memref<2x10x10x36xf32, #tpu.memory_space<vmem>>, vector<2x9x9x36xf32>
    %26 = vector.shape_cast %25 : vector<2x9x9x36xf32> to vector<162x36xf32>
    %c3 = arith.constant 3 : index
    %c0_49 = arith.constant 0 : index
    %c0_50 = arith.constant 0 : index
    %27 = vector.load %arg2[%c3, %c0_49, %c0_50] : memref<4x36x64xf32, #tpu.memory_space<vmem>>, vector<1x36x64xf32>
    %28 = vector.shape_cast %27 : vector<1x36x64xf32> to vector<36x64xf32>
    %cst_51 = arith.constant dense<0.000000e+00> : vector<162x64xf32>
    %29 = tpu.matmul %26, %28, %cst_51 {dimension_numbers = #tpu.dot_dimension_numbers<[1], [0], [0], [1], [0, 0, 1, 1], [], []>} : vector<162x36xf32>, vector<36x64xf32>, vector<162x64xf32> -> vector<162x64xf32>
    %30 = arith.addf %24, %29 : vector<162x64xf32>
    %cst_52 = arith.constant 0.000000e+00 : f32
    %31 = vector.broadcast %cst_52 : f32 to vector<162x64xf32>
    %32 = arith.maximumf %30, %31 : vector<162x64xf32>
    %33 = vector.shape_cast %32 : vector<162x64xf32> to vector<2x9x9x64xf32>
    %34 = vector.extract_strided_slice %33 {offsets = [0, 0, 0, 0], sizes = [2, 8, 8, 64], strides = [1, 1, 1, 1]} : vector<2x9x9x64xf32> to vector<2x8x8x64xf32>
    %35 = vector.shape_cast %34 : vector<2x8x8x64xf32> to vector<128x64xf32>
    %c0_53 = arith.constant 0 : index
    %c0_54 = arith.constant 0 : index
    %c0_55 = arith.constant 0 : index
    %36 = vector.load %arg3[%c0_53, %c0_54, %c0_55] : memref<4x64x64xf32, #tpu.memory_space<vmem>>, vector<1x64x64xf32>
    %37 = vector.shape_cast %36 : vector<1x64x64xf32> to vector<64x64xf32>
    %cst_56 = arith.constant dense<0.000000e+00> : vector<128x64xf32>
    %38 = tpu.matmul %35, %37, %cst_56 {dimension_numbers = #tpu.dot_dimension_numbers<[1], [0], [0], [1], [0, 0, 1, 1], [], []>} : vector<128x64xf32>, vector<64x64xf32>, vector<128x64xf32> -> vector<128x64xf32>
    %39 = vector.extract_strided_slice %33 {offsets = [0, 0, 1, 0], sizes = [2, 8, 8, 64], strides = [1, 1, 1, 1]} : vector<2x9x9x64xf32> to vector<2x8x8x64xf32>
    %40 = vector.shape_cast %39 : vector<2x8x8x64xf32> to vector<128x64xf32>
    %c1_57 = arith.constant 1 : index
    %c0_58 = arith.constant 0 : index
    %c0_59 = arith.constant 0 : index
    %41 = vector.load %arg3[%c1_57, %c0_58, %c0_59] : memref<4x64x64xf32, #tpu.memory_space<vmem>>, vector<1x64x64xf32>
    %42 = vector.shape_cast %41 : vector<1x64x64xf32> to vector<64x64xf32>
    %cst_60 = arith.constant dense<0.000000e+00> : vector<128x64xf32>
    %43 = tpu.matmul %40, %42, %cst_60 {dimension_numbers = #tpu.dot_dimension_numbers<[1], [0], [0], [1], [0, 0, 1, 1], [], []>} : vector<128x64xf32>, vector<64x64xf32>, vector<128x64xf32> -> vector<128x64xf32>
    %44 = arith.addf %38, %43 : vector<128x64xf32>
    %45 = vector.extract_strided_slice %33 {offsets = [0, 1, 0, 0], sizes = [2, 8, 8, 64], strides = [1, 1, 1, 1]} : vector<2x9x9x64xf32> to vector<2x8x8x64xf32>
    %46 = vector.shape_cast %45 : vector<2x8x8x64xf32> to vector<128x64xf32>
    %c2_61 = arith.constant 2 : index
    %c0_62 = arith.constant 0 : index
    %c0_63 = arith.constant 0 : index
    %47 = vector.load %arg3[%c2_61, %c0_62, %c0_63] : memref<4x64x64xf32, #tpu.memory_space<vmem>>, vector<1x64x64xf32>
    %48 = vector.shape_cast %47 : vector<1x64x64xf32> to vector<64x64xf32>
    %cst_64 = arith.constant dense<0.000000e+00> : vector<128x64xf32>
    %49 = tpu.matmul %46, %48, %cst_64 {dimension_numbers = #tpu.dot_dimension_numbers<[1], [0], [0], [1], [0, 0, 1, 1], [], []>} : vector<128x64xf32>, vector<64x64xf32>, vector<128x64xf32> -> vector<128x64xf32>
    %50 = arith.addf %44, %49 : vector<128x64xf32>
    %51 = vector.extract_strided_slice %33 {offsets = [0, 1, 1, 0], sizes = [2, 8, 8, 64], strides = [1, 1, 1, 1]} : vector<2x9x9x64xf32> to vector<2x8x8x64xf32>
    %52 = vector.shape_cast %51 : vector<2x8x8x64xf32> to vector<128x64xf32>
    %c3_65 = arith.constant 3 : index
    %c0_66 = arith.constant 0 : index
    %c0_67 = arith.constant 0 : index
    %53 = vector.load %arg3[%c3_65, %c0_66, %c0_67] : memref<4x64x64xf32, #tpu.memory_space<vmem>>, vector<1x64x64xf32>
    %54 = vector.shape_cast %53 : vector<1x64x64xf32> to vector<64x64xf32>
    %cst_68 = arith.constant dense<0.000000e+00> : vector<128x64xf32>
    %55 = tpu.matmul %52, %54, %cst_68 {dimension_numbers = #tpu.dot_dimension_numbers<[1], [0], [0], [1], [0, 0, 1, 1], [], []>} : vector<128x64xf32>, vector<64x64xf32>, vector<128x64xf32> -> vector<128x64xf32>
    %56 = arith.addf %50, %55 : vector<128x64xf32>
    %cst_69 = arith.constant 0.000000e+00 : f32
    %57 = vector.broadcast %cst_69 : f32 to vector<128x64xf32>
    %58 = arith.maximumf %56, %57 : vector<128x64xf32>
    %59 = vector.shape_cast %58 : vector<128x64xf32> to vector<2x8x8x64xf32>
    %60 = vector.shape_cast %59 : vector<2x8x8x64xf32> to vector<2x8x4x2x64xf32>
    %61 = vector.extract_strided_slice %60 {offsets = [0, 0, 0, 0, 0], sizes = [2, 8, 4, 1, 64], strides = [1, 1, 1, 1, 1]} : vector<2x8x4x2x64xf32> to vector<2x8x4x1x64xf32>
    %62 = vector.shape_cast %61 : vector<2x8x4x1x64xf32> to vector<2x8x4x64xf32>
    %63 = vector.extract_strided_slice %60 {offsets = [0, 0, 0, 1, 0], sizes = [2, 8, 4, 1, 64], strides = [1, 1, 1, 1, 1]} : vector<2x8x4x2x64xf32> to vector<2x8x4x1x64xf32>
    %64 = vector.shape_cast %63 : vector<2x8x4x1x64xf32> to vector<2x8x4x64xf32>
    %65 = arith.addf %62, %64 : vector<2x8x4x64xf32>
    %66 = vector.shape_cast %65 : vector<2x8x4x64xf32> to vector<2x4x2x4x64xf32>
    %67 = vector.extract_strided_slice %66 {offsets = [0, 0, 0, 0, 0], sizes = [2, 4, 1, 4, 64], strides = [1, 1, 1, 1, 1]} : vector<2x4x2x4x64xf32> to vector<2x4x1x4x64xf32>
    %68 = vector.shape_cast %67 : vector<2x4x1x4x64xf32> to vector<2x4x4x64xf32>
    %69 = vector.extract_strided_slice %66 {offsets = [0, 0, 1, 0, 0], sizes = [2, 4, 1, 4, 64], strides = [1, 1, 1, 1, 1]} : vector<2x4x2x4x64xf32> to vector<2x4x1x4x64xf32>
    %70 = vector.shape_cast %69 : vector<2x4x1x4x64xf32> to vector<2x4x4x64xf32>
    %71 = arith.addf %68, %70 : vector<2x4x4x64xf32>
    %72 = vector.shape_cast %71 : vector<2x4x4x64xf32> to vector<2x16x64xf32>
    %73 = tpu.transpose %72, [0, 2, 1] : vector<2x16x64xf32> -> vector<2x64x16xf32>
    %74 = vector.shape_cast %73 : vector<2x64x16xf32> to vector<2x1024xf32>
    %c0_70 = arith.constant 0 : index
    %c0_71 = arith.constant 0 : index
    %c0_72 = arith.constant 0 : index
    %75 = vector.load %arg4[%c0_70, %c0_71, %c0_72] : memref<1x2x1024xf32, #tpu.memory_space<vmem>>, vector<1x2x1024xf32>
    %76 = vector.shape_cast %75 : vector<1x2x1024xf32> to vector<2x1024xf32>
    %77 = vector.shape_cast %74 : vector<2x1024xf32> to vector<1x2x1024xf32>
    tpu.vector_store %arg4[%c0_70, %c0_71, %c0_72], %77 {strides = array<i32>} : memref<1x2x1024xf32, #tpu.memory_space<vmem>>, vector<1x2x1024xf32>,
    return
  }
  func.func @transform_0(%arg0: i32) -> (i32, i32, i32, i32) {
    %c0_i32 = arith.constant 0 : i32
    %c0_i32_0 = arith.constant 0 : i32
    %c0_i32_1 = arith.constant 0 : i32
    %c0_i32_2 = arith.constant 0 : i32
    return %arg0, %c0_i32, %c0_i32_0, %c0_i32_1 : i32, i32, i32, i32
  }
  func.func @transform_1(%arg0: i32) -> (i32, i32, i32) {
    %c0_i32 = arith.constant 0 : i32
    %c0_i32_0 = arith.constant 0 : i32
    %c0_i32_1 = arith.constant 0 : i32
    %c0_i32_2 = arith.constant 0 : i32
    return %c0_i32, %c0_i32_0, %c0_i32_1 : i32, i32, i32
  }
  func.func @transform_2(%arg0: i32) -> (i32, i32, i32) {
    %c0_i32 = arith.constant 0 : i32
    %c0_i32_0 = arith.constant 0 : i32
    %c0_i32_1 = arith.constant 0 : i32
    %c0_i32_2 = arith.constant 0 : i32
    return %c0_i32, %c0_i32_0, %c0_i32_1 : i32, i32, i32
  }
  func.func @transform_3(%arg0: i32) -> (i32, i32, i32) {
    %c0_i32 = arith.constant 0 : i32
    %c0_i32_0 = arith.constant 0 : i32
    %c0_i32_1 = arith.constant 0 : i32
    return %arg0, %c0_i32, %c0_i32_0 : i32, i32, i32
  }
}

</mosaic_0001>

<llo_original>
// kernel: tpu_custom_call.1
$region0: #{tpu_custom_call.1}
  #allocation0 [shape = 'u32[]', space=smem, size = 0x4, offset = 0x4, fixed_abs, tag = 'smem constant byte address 0x4 - core index']
  #allocation1 [shape = 'u32[72,128]{1,0:T(1,128)}', space=vmem, size = 0x9000, scoped, tag = 'internal scratch']
  #allocation2 [shape = 'f32[2,10,10,36]{3,2,1,0:T(8,128)}', space=vmem, size = 0x28000, scoped, tag = 'scratch operand']
  %s0 = inlined_call_operand.vmem [shape: f32[4,8,8,36], index: 0, kind: input, shape index: {}]
  %s1 = inlined_call_operand.vmem [shape: f32[4,36,64], index: 1, kind: input, shape index: {}]
  %s2 = inlined_call_operand.hbm [shape: f32[4,64,64], index: 2, kind: input, shape index: {}]
  %s3 = inlined_call_operand.hbm [shape: f32[2,2,1024], index: 3, kind: output, shape index: {}]
  %s4 = sld [smem:[#allocation0]]
  $region49: #{tpu_custom_call.1} parent=0
    _
  %s6 = ssub.s32 1, %s4
  %s7 = scalar_select 0, %s6, %s4
  $region1: #{tpu_custom_call.1} parent=0
    #allocation3 [shape = 'u8[131072]{0}', space=vmem, size = 0x20000, scoped, tag = 'input window, operand 2, single buffered']
    #allocation4 [shape = 's32[2]{0}', space=sflag, size = 0x8, scoped, tag = 'scoped memory for tpu_custom_call.1']
    #allocation5 [shape = 's32[2]{0}', space=sflag, size = 0x8, scoped, tag = 'scoped memory for tpu_custom_call.1']
    #allocation6 [shape = 'u8[16384]{0}', space=vmem, size = 0x4000, scoped, tag = 'output window, operand 0']
    %8 = vsyncpa [#allocation4], 0
    %9 = vsyncpa [#allocation5], 0
    %s10 = scalar_lea.sflag [#allocation5], 1
    %11 = vsyncpa %s10, 0
    loop: start=0, step=1, limit=4
    $region2: #{tpu_custom_call.1} parent=1 // loop_pre_header
      _
    $region3: #{tpu_custom_call.1} parent=1 // loop_header
      %s13 = sphi 0, %s17
      %p14 = scmp.ge.s32.totalorder %s13, 4
      %s23 = sphi 0, %s25
      %s26 = sphi 0, %s23
      %s27 = sphi 0, %s26
      %s43 = sphi 0, %s27
      %s47 = sphi 0, %s47
      %s49 = sphi 0, %s47
      %s50 = sphi 0, %s49
      %s64 = sphi 0, %s50
      %s68 = sphi 0, %s68
      %s70 = sphi 0, %s68
      %s71 = sphi 0, %s70
      %s85 = sphi 0, %s71
      %s91 = sphi 0, %s93
      %s94 = sphi 0, %s91
      %s95 = sphi 0, %s94
      %s111 = sphi 0, %s95
    $region4: #{tpu_custom_call.1} parent=1 // loop_header_branch
      %16 = sbr.rel (%p14) target = $region8
    $region5: #{tpu_custom_call.1} parent=1 // loop_body
      %s18 = ssub.s32 %s13, 1
      %s19 = ssub.s32 %s13, 2
      %s20 = sadd.s32 %s13, 1
      %s21 = ssub.s32 %s13, %s20
      %p22 = scmp.eq.s32.totalorder %s21, 0
      %s24 = sadd.s32 %s23, 1
      %s25 = scalar_select %p22, %s23, %s24
      %p28 = pneg %p22
      %p29 = scmp.eq.s32.totalorder %s13, 1
      %p30 = por %p28, %p29
      %p31 = scmp.ne.s32.totalorder %s23, %s26
      %p32 = scmp.eq.s32.totalorder %s13, 0
      %p33 = por %p31, %p32
      %p34 = scmp.ne.s32.totalorder %s23, %s26
      %p35 = scmp.eq.s32.totalorder %s18, 1
      %p36 = por %p34, %p35
      %p37 = scmp.ne.s32.totalorder %s26, %s27
      %p38 = scmp.eq.s32.totalorder %s18, 0
      %p39 = por %p37, %p38
      %p40 = scmp.ne.s32.totalorder %s26, %s27
      %p41 = scmp.eq.s32.totalorder %s19, 1
      %p42 = por %p40, %p41
      %p44 = scmp.ne.s32.totalorder %s27, %s43
      %p45 = scmp.eq.s32.totalorder %s19, 0
      %p46 = por %p44, %p45
      %s48 = sadd.s32 %s47, 1
      %p51 = scmp.eq.s32.totalorder %s13, 1
      %p52 = scmp.ne.s32.totalorder %s47, %s49
      %p53 = scmp.eq.s32.totalorder %s13, 0
      %p54 = por %p52, %p53
      %p55 = scmp.ne.s32.totalorder %s47, %s49
      %p56 = scmp.eq.s32.totalorder %s18, 1
      %p57 = por %p55, %p56
      %p58 = scmp.ne.s32.totalorder %s49, %s50
      %p59 = scmp.eq.s32.totalorder %s18, 0
      %p60 = por %p58, %p59
      %p61 = scmp.ne.s32.totalorder %s49, %s50
      %p62 = scmp.eq.s32.totalorder %s19, 1
      %p63 = por %p61, %p62
      %p65 = scmp.ne.s32.totalorder %s50, %s64
      %p66 = scmp.eq.s32.totalorder %s19, 0
      %p67 = por %p65, %p66
      %s69 = sadd.s32 %s68, 1
      %p72 = scmp.eq.s32.totalorder %s13, 1
      %p73 = scmp.ne.s32.totalorder %s68, %s70
      %p74 = scmp.eq.s32.totalorder %s13, 0
      %p75 = por %p73, %p74
      %p76 = scmp.ne.s32.totalorder %s68, %s70
      %p77 = scmp.eq.s32.totalorder %s18, 1
      %p78 = por %p76, %p77
      %p79 = scmp.ne.s32.totalorder %s70, %s71
      %p80 = scmp.eq.s32.totalorder %s18, 0
      %p81 = por %p79, %p80
      %p82 = scmp.ne.s32.totalorder %s70, %s71
      %p83 = scmp.eq.s32.totalorder %s19, 1
      %p84 = por %p82, %p83
      %p86 = scmp.ne.s32.totalorder %s71, %s85
      %p87 = scmp.eq.s32.totalorder %s19, 0
      %p88 = por %p86, %p87
      %s89 = ssub.s32 %s13, %s20
      %p90 = scmp.eq.s32.totalorder %s89, 0
      %s92 = sadd.s32 %s91, 1
      %s93 = scalar_select %p90, %s91, %s92
      %p96 = pneg %p90
      %p97 = scmp.eq.s32.totalorder %s13, 1
      %p98 = por %p96, %p97
      %p99 = scmp.ne.s32.totalorder %s91, %s94
      %p100 = scmp.eq.s32.totalorder %s13, 0
      %p101 = por %p99, %p100
      %p102 = scmp.ne.s32.totalorder %s91, %s94
      %p103 = scmp.eq.s32.totalorder %s18, 1
      %p104 = por %p102, %p103
      %p105 = scmp.ne.s32.totalorder %s94, %s95
      %p106 = scmp.eq.s32.totalorder %s18, 0
      %p107 = por %p105, %p106
      %p108 = scmp.ne.s32.totalorder %s94, %s95
      %p109 = scmp.eq.s32.totalorder %s19, 1
      %p110 = por %p108, %p109
      %p112 = scmp.ne.s32.totalorder %s95, %s111
      %p113 = scmp.eq.s32.totalorder %s19, 0
      %p114 = por %p112, %p113
      %p115 = scmp.le.s32.totalorder 1, %s13
      %p116 = scmp.lt.s32.totalorder %s13, 3
      %p117 = pnand %p115, %p116
      %p118 = pneg %p117
      // Predicated region
      $region9: #{tpu_custom_call.1} parent=5 // pred_check
        _
      $region10: #{tpu_custom_call.1} parent=5 // pred_check_branch
        %120 = sbr.rel (%p117) target = $region12
      $region11: #{tpu_custom_call.1} parent=5 // pred_region
        %s121 = ssub.s32 %s13, 1
        // Predicated region
        $region13: #{tpu_custom_call.1} parent=11 // pred_check
          %p122 = pneg %p60
        $region14: #{tpu_custom_call.1} parent=11 // pred_check_branch
          %124 = sbr.rel (%p122) target = $region16
        $region15: #{tpu_custom_call.1} parent=11 // pred_region
          _
        $region16: #{tpu_custom_call.1} parent=11 // pred_fallthru
          _
        // Predicated region
        $region17: #{tpu_custom_call.1} parent=11 // pred_check
          %p125 = pneg %p81
        $region18: #{tpu_custom_call.1} parent=11 // pred_check_branch
          %127 = sbr.rel (%p125) target = $region20
        $region19: #{tpu_custom_call.1} parent=11 // pred_region
          %129 = vsyncadd [#allocation4], 0
          %s130 = sshll.u32 %s2, 4
          %s131 = int_to_ptr.hbm [resolvable:$true] %s130
          %s132 = sshll.u32 [#allocation3], 4
          %s133 = int_to_ptr.vmem [resolvable:$true] %s132
          %138 = dma.hbm_to_vmem [thread:$0]  %s131, 4096, %s133, [#allocation4], 128, 128, 8
        $region20: #{tpu_custom_call.1} parent=11 // pred_fallthru
          _
      $region12: #{tpu_custom_call.1} parent=5 // pred_fallthru
        _
      %p139 = scmp.lt.s32.totalorder %s13, 2
      // Predicated region
      $region21: #{tpu_custom_call.1} parent=5 // pred_check
        %p140 = pneg %p139
      $region22: #{tpu_custom_call.1} parent=5 // pred_check_branch
        %142 = sbr.rel (%p140) target = $region24
      $region23: #{tpu_custom_call.1} parent=5 // pred_region
        // Predicated region
        $region25: #{tpu_custom_call.1} parent=23 // pred_check
          %p143 = pneg %p33
        $region26: #{tpu_custom_call.1} parent=23 // pred_check_branch
          %145 = sbr.rel (%p143) target = $region28
        $region27: #{tpu_custom_call.1} parent=23 // pred_region
          %s146 = smul.u32 2, %s13
          %p147 = scmp.lt.s32.totalorder %s146, 3
          %s148 = scalar_select %p147, %s146, 3
          %s149 = smul.addr %s148, 8
          %s150 = smul.addr %s149, 8
          %s151 = scalar_lea.vmem %s0, %s150
          %s152 = smul.u32 2, %s13
        $region28: #{tpu_custom_call.1} parent=23 // pred_fallthru
          _
      $region24: #{tpu_custom_call.1} parent=5 // pred_fallthru
        _
      %p153 = scmp.le.s32.totalorder 1, %s13
      %p154 = scmp.lt.s32.totalorder %s13, 3
      %p155 = pnand %p153, %p154
      %p156 = pneg %p155
      // Predicated region
      $region29: #{tpu_custom_call.1} parent=5 // pred_check
        _
      $region30: #{tpu_custom_call.1} parent=5 // pred_check_branch
        %158 = sbr.rel (%p155) target = $region32
      $region31: #{tpu_custom_call.1} parent=5 // pred_region
        %s159 = ssub.s32 %s13, 1
        // Predicated region
        $region33: #{tpu_custom_call.1} parent=31 // pred_check
          %p160 = pneg %p81
        $region34: #{tpu_custom_call.1} parent=31 // pred_check_branch
          %162 = sbr.rel (%p160) target = $region36
        $region35: #{tpu_custom_call.1} parent=31 // pred_region
          %164 = dma.done [#allocation4], 4096
        $region36: #{tpu_custom_call.1} parent=31 // pred_fallthru
          _
        %s165 = smul.u32 2, %s18
        %p166 = scmp.lt.s32.totalorder %s165, 3
        %s167 = scalar_select %p166, %s165, 3
        %s168 = smul.addr %s167, 8
        %s169 = smul.addr %s168, 8
        %s170 = scalar_lea.vmem %s0, %s169
        %p171 = pneg %p39
        %p172 = pneg %p36
        %p173 = pneg %p60
        %p174 = pneg %p57
        %p175 = pneg %p81
        %p176 = pneg %p78
        %p177 = pneg %p107
        %p178 = pneg %p104
        %s179 = sand.u32 %s94, 1
        %s180 = scalar_lea.sflag [#allocation5], %s179
        %s181 = sand.u32 %s94, 1
        %s182 = smul.addr %s181, 16
        %s183 = scalar_lea.vmem [#allocation6], %s182
        %s184 = smul.u32 2, %s18
        %p185 = scmp.lt.s32.totalorder %s184, 3
        %s186 = scalar_select %p185, %s184, 3
        %s187 = smul.addr %s186, 8
        %s188 = smul.addr %s187, 8
        %s189 = scalar_lea.vmem %s0, %s188
        %s190 = smul.u32 2, %s18
        %vm191 = vcmask 293888
        %192 = vst.msk [vmem:[#allocation2] sm:$0xff] %vm191, 0.0
        %vm193 = vcmask 287744
        %194 = vst.msk [vmem:[#allocation2 + $0x8] sm:$0x3] %vm193, 0.0
        %195 = vst.msk [vmem:[#allocation2 + $0xa0] sm:$0xff] %vm191, 0.0
        %196 = vst.msk [vmem:[#allocation2 + $0xa8] sm:$0x3] %vm193, 0.0
        %s197 = scalar_lea.vmem [#allocation2], 144
        %198 = vst.msk [vmem:[%s197] sm:$0xff] %vm191, 0.0
        %199 = vst.msk [vmem:[%s197 + $0x8] sm:$0x3] %vm193, 0.0
        %200 = vst.msk [vmem:[%s197 + $0xa0] sm:$0xff] %vm191, 0.0
        %201 = vst.msk [vmem:[%s197 + $0xa8] sm:$0x3] %vm193, 0.0
        %vm202 = vcmask 286720
        %203 = vst.msk [vmem:[#allocation2] sm:$0x1] %vm202, 0.0
        %204 = vst.msk [vmem:[#allocation2 + $0x10] sm:$0x1] %vm202, 0.0
        %205 = vst.msk [vmem:[#allocation2 + $0x20] sm:$0x1] %vm202, 0.0
        %206 = vst.msk [vmem:[#allocation2 + $0x30] sm:$0x1] %vm202, 0.0
        %207 = vst.msk [vmem:[#allocation2 + $0x40] sm:$0x1] %vm202, 0.0
        %208 = vst.msk [vmem:[#allocation2 + $0x50] sm:$0x1] %vm202, 0.0
        %209 = vst.msk [vmem:[#allocation2 + $0x60] sm:$0x1] %vm202, 0.0
        %210 = vst.msk [vmem:[#allocation2 + $0x70] sm:$0x1] %vm202, 0.0
        %211 = vst.msk [vmem:[#allocation2 + $0x80] sm:$0x1] %vm202, 0.0
        %212 = vst.msk [vmem:[#allocation2 + $0x90] sm:$0x1] %vm202, 0.0
        %213 = vst.msk [vmem:[#allocation2 + $0xa0] sm:$0x1] %vm202, 0.0
        %214 = vst.msk [vmem:[#allocation2 + $0xb0] sm:$0x1] %vm202, 0.0
        %215 = vst.msk [vmem:[#allocation2 + $0xc0] sm:$0x1] %vm202, 0.0
        %216 = vst.msk [vmem:[#allocation2 + $0xd0] sm:$0x1] %vm202, 0.0
        %217 = vst.msk [vmem:[#allocation2 + $0xe0] sm:$0x1] %vm202, 0.0
        %218 = vst.msk [vmem:[#allocation2 + $0xf0] sm:$0x1] %vm202, 0.0
        %219 = vst.msk [vmem:[#allocation2 + $0x100] sm:$0x1] %vm202, 0.0
        %220 = vst.msk [vmem:[#allocation2 + $0x110] sm:$0x1] %vm202, 0.0
        %221 = vst.msk [vmem:[#allocation2 + $0x120] sm:$0x1] %vm202, 0.0
        %222 = vst.msk [vmem:[#allocation2 + $0x130] sm:$0x1] %vm202, 0.0
        %223 = vst.msk [vmem:[#allocation2 + $0x9] sm:$0x1] %vm202, 0.0
        %224 = vst.msk [vmem:[#allocation2 + $0x19] sm:$0x1] %vm202, 0.0
        %225 = vst.msk [vmem:[#allocation2 + $0x29] sm:$0x1] %vm202, 0.0
        %226 = vst.msk [vmem:[#allocation2 + $0x39] sm:$0x1] %vm202, 0.0
        %227 = vst.msk [vmem:[#allocation2 + $0x49] sm:$0x1] %vm202, 0.0
        %228 = vst.msk [vmem:[#allocation2 + $0x59] sm:$0x1] %vm202, 0.0
        %229 = vst.msk [vmem:[#allocation2 + $0x69] sm:$0x1] %vm202, 0.0
        %230 = vst.msk [vmem:[#allocation2 + $0x79] sm:$0x1] %vm202, 0.0
        %231 = vst.msk [vmem:[#allocation2 + $0x89] sm:$0x1] %vm202, 0.0
        %232 = vst.msk [vmem:[#allocation2 + $0x99] sm:$0x1] %vm202, 0.0
        %233 = vst.msk [vmem:[#allocation2 + $0xa9] sm:$0x1] %vm202, 0.0
        %234 = vst.msk [vmem:[#allocation2 + $0xb9] sm:$0x1] %vm202, 0.0
        %235 = vst.msk [vmem:[#allocation2 + $0xc9] sm:$0x1] %vm202, 0.0
        %236 = vst.msk [vmem:[#allocation2 + $0xd9] sm:$0x1] %vm202, 0.0
        %237 = vst.msk [vmem:[#allocation2 + $0xe9] sm:$0x1] %vm202, 0.0
        %238 = vst.msk [vmem:[#allocation2 + $0xf9] sm:$0x1] %vm202, 0.0
        %239 = vst.msk [vmem:[#allocation2 + $0x109] sm:$0x1] %vm202, 0.0
        %240 = vst.msk [vmem:[#allocation2 + $0x119] sm:$0x1] %vm202, 0.0
        %241 = vst.msk [vmem:[#allocation2 + $0x129] sm:$0x1] %vm202, 0.0
        %242 = vst.msk [vmem:[#allocation2 + $0x139] sm:$0x1] %vm202, 0.0
        %v243 = vld [vmem:[%s189] sm:$0xff]
        %v244 = vld [vmem:[%s189 + $0x8] sm:$0xff]
        %v245 = vld [vmem:[%s189 + $0x10] sm:$0xff]
        %v246 = vld [vmem:[%s189 + $0x18] sm:$0xff]
        %v247 = vld [vmem:[%s189 + $0x20] sm:$0xff]
        %v248 = vld [vmem:[%s189 + $0x28] sm:$0xff]
        %v249 = vld [vmem:[%s189 + $0x30] sm:$0xff]
        %v250 = vld [vmem:[%s189 + $0x38] sm:$0xff]
        %v251 = vld [vmem:[%s189 + $0x40] sm:$0xff]
        %v252 = vld [vmem:[%s189 + $0x48] sm:$0xff]
        %v253 = vld [vmem:[%s189 + $0x50] sm:$0xff]
        %v254 = vld [vmem:[%s189 + $0x58] sm:$0xff]
        %v255 = vld [vmem:[%s189 + $0x60] sm:$0xff]
        %v256 = vld [vmem:[%s189 + $0x68] sm:$0xff]
        %v257 = vld [vmem:[%s189 + $0x70] sm:$0xff]
        %v258 = vld [vmem:[%s189 + $0x78] sm:$0xff]
        %s259 = scalar_lea.vmem [#allocation2], 16
        %260 = vst.msk [vmem:[%s259 + $0x1] sm:$0xff] %vm191, %v243
        %261 = vst.msk [vmem:[%s259 + $0x11] sm:$0xff] %vm191, %v244
        %262 = vst.msk [vmem:[%s259 + $0x21] sm:$0xff] %vm191, %v245
        %263 = vst.msk [vmem:[%s259 + $0x31] sm:$0xff] %vm191, %v246
        %264 = vst.msk [vmem:[%s259 + $0x41] sm:$0xff] %vm191, %v247
        %265 = vst.msk [vmem:[%s259 + $0x51] sm:$0xff] %vm191, %v248
        %266 = vst.msk [vmem:[%s259 + $0x61] sm:$0xff] %vm191, %v249
        %267 = vst.msk [vmem:[%s259 + $0x71] sm:$0xff] %vm191, %v250
        %268 = vst.msk [vmem:[%s259 + $0xa1] sm:$0xff] %vm191, %v251
        %269 = vst.msk [vmem:[%s259 + $0xb1] sm:$0xff] %vm191, %v252
        %270 = vst.msk [vmem:[%s259 + $0xc1] sm:$0xff] %vm191, %v253
        %271 = vst.msk [vmem:[%s259 + $0xd1] sm:$0xff] %vm191, %v254
        %272 = vst.msk [vmem:[%s259 + $0xe1] sm:$0xff] %vm191, %v255
        %273 = vst.msk [vmem:[%s259 + $0xf1] sm:$0xff] %vm191, %v256
        %274 = vst.msk [vmem:[%s259 + $0x101] sm:$0xff] %vm191, %v257
        %275 = vst.msk [vmem:[%s259 + $0x111] sm:$0xff] %vm191, %v258
        %v276 = vld [vmem:[#allocation2] sm:$0xff]
        %v277 = vld [vmem:[#allocation2 + $0x8] sm:$0x1]
        %v278 = vld [vmem:[#allocation2 + $0x10] sm:$0xff]
        %v279 = vld [vmem:[#allocation2 + $0x18] sm:$0x1]
        %v280 = vld [vmem:[#allocation2 + $0x20] sm:$0xff]
        %v281 = vld [vmem:[#allocation2 + $0x28] sm:$0x1]
        %v282 = vld [vmem:[#allocation2 + $0x30] sm:$0xff]
        %v283 = vld [vmem:[#allocation2 + $0x38] sm:$0x1]
        %v284 = vld [vmem:[#allocation2 + $0x40] sm:$0xff]
        %v285 = vld [vmem:[#allocation2 + $0x48] sm:$0x1]
        %v286 = vld [vmem:[#allocation2 + $0x50] sm:$0xff]
        %v287 = vld [vmem:[#allocation2 + $0x58] sm:$0x1]
        %v288 = vld [vmem:[#allocation2 + $0x60] sm:$0xff]
        %v289 = vld [vmem:[#allocation2 + $0x68] sm:$0x1]
        %v290 = vld [vmem:[#allocation2 + $0x70] sm:$0xff]
        %v291 = vld [vmem:[#allocation2 + $0x78] sm:$0x1]
        %v292 = vld [vmem:[#allocation2 + $0x80] sm:$0xff]
        %v293 = vld [vmem:[#allocation2 + $0x88] sm:$0x1]
        %v294 = vld [vmem:[#allocation2 + $0xa0] sm:$0xff]
        %v295 = vld [vmem:[#allocation2 + $0xa8] sm:$0x1]
        %v296 = vld [vmem:[#allocation2 + $0xb0] sm:$0xff]
        %v297 = vld [vmem:[#allocation2 + $0xb8] sm:$0x1]
        %v298 = vld [vmem:[#allocation2 + $0xc0] sm:$0xff]
        %v299 = vld [vmem:[#allocation2 + $0xc8] sm:$0x1]
        %v300 = vld [vmem:[#allocation2 + $0xd0] sm:$0xff]
        %v301 = vld [vmem:[#allocation2 + $0xd8] sm:$0x1]
        %v302 = vld [vmem:[#allocation2 + $0xe0] sm:$0xff]
        %v303 = vld [vmem:[#allocation2 + $0xe8] sm:$0x1]
        %v304 = vld [vmem:[#allocation2 + $0xf0] sm:$0xff]
        %v305 = vld [vmem:[#allocation2 + $0xf8] sm:$0x1]
        %v306 = vld [vmem:[#allocation2 + $0x100] sm:$0xff]
        %v307 = vld [vmem:[#allocation2 + $0x108] sm:$0x1]
        %v308 = vld [vmem:[#allocation2 + $0x110] sm:$0xff]
        %v309 = vld [vmem:[#allocation2 + $0x118] sm:$0x1]
        %v310 = vld [vmem:[#allocation2 + $0x120] sm:$0xff]
        %v311 = vld [vmem:[#allocation2 + $0x128] sm:$0x1]
        %v348 = vrot.slane %v276, 1
        %v349 = vrot.slane %v276, 2
        %v350 = vrot.slane %v276, 3
        %v351 = vrot.slane %v276, 4
        %v352 = vrot.slane %v276, 5
        %v353 = vrot.slane %v276, 6
        %v354 = vrot.slane %v276, 7
        %v355 = vrot.slane %v278, 1
        %v356 = vrot.slane %v278, 2
        %v357 = vrot.slane %v278, 3
        %v358 = vrot.slane %v278, 4
        %v359 = vrot.slane %v278, 5
        %v360 = vrot.slane %v278, 6
        %v361 = vrot.slane %v278, 7
        %v362 = vrot.slane %v280, 1
        %v363 = vrot.slane %v280, 2
        %v364 = vrot.slane %v280, 3
        %v365 = vrot.slane %v280, 4
        %v366 = vrot.slane %v280, 5
        %v367 = vrot.slane %v280, 6
        %v368 = vrot.slane %v280, 7
        %v369 = vrot.slane %v282, 1
        %v370 = vrot.slane %v282, 2
        %v371 = vrot.slane %v282, 3
        %v372 = vrot.slane %v282, 4
        %v373 = vrot.slane %v282, 5
        %v374 = vrot.slane %v282, 6
        %v375 = vrot.slane %v282, 7
        %v376 = vrot.slane %v284, 1
        %v377 = vrot.slane %v284, 2
        %v378 = vrot.slane %v284, 3
        %v379 = vrot.slane %v284, 4
        %v380 = vrot.slane %v284, 5
        %v381 = vrot.slane %v284, 6
        %v382 = vrot.slane %v284, 7
        %v383 = vrot.slane %v286, 1
        %v384 = vrot.slane %v286, 2
        %v385 = vrot.slane %v286, 3
        %v386 = vrot.slane %v286, 4
        %v387 = vrot.slane %v286, 5
        %v388 = vrot.slane %v286, 6
        %v389 = vrot.slane %v286, 7
        %v390 = vrot.slane %v288, 1
        %v391 = vrot.slane %v288, 2
        %v392 = vrot.slane %v288, 3
        %v393 = vrot.slane %v288, 4
        %v394 = vrot.slane %v288, 5
        %v395 = vrot.slane %v288, 6
        %v396 = vrot.slane %v288, 7
        %v397 = vrot.slane %v290, 1
        %v398 = vrot.slane %v290, 2
        %v399 = vrot.slane %v290, 3
        %v400 = vrot.slane %v290, 4
        %v401 = vrot.slane %v290, 5
        %v402 = vrot.slane %v290, 6
        %v403 = vrot.slane %v290, 7
        %v404 = vrot.slane %v292, 1
        %v405 = vrot.slane %v292, 2
        %v406 = vrot.slane %v292, 3
        %v407 = vrot.slane %v292, 4
        %v408 = vrot.slane %v292, 5
        %v409 = vrot.slane %v292, 6
        %v410 = vrot.slane %v292, 7
        %v411 = vrot.slane %v294, 1
        %v412 = vrot.slane %v294, 2
        %v413 = vrot.slane %v294, 3
        %v414 = vrot.slane %v294, 4
        %v415 = vrot.slane %v294, 5
        %v416 = vrot.slane %v294, 6
        %v417 = vrot.slane %v294, 7
        %v418 = vrot.slane %v296, 1
        %v419 = vrot.slane %v296, 2
        %v420 = vrot.slane %v296, 3
        %v421 = vrot.slane %v296, 4
        %v422 = vrot.slane %v296, 5
        %v423 = vrot.slane %v296, 6
        %v424 = vrot.slane %v296, 7
        %v425 = vrot.slane %v298, 1
        %v426 = vrot.slane %v298, 2
        %v427 = vrot.slane %v298, 3
        %v428 = vrot.slane %v298, 4
        %v429 = vrot.slane %v298, 5
        %v430 = vrot.slane %v298, 6
        %v431 = vrot.slane %v298, 7
        %v432 = vrot.slane %v300, 1
        %v433 = vrot.slane %v300, 2
        %v434 = vrot.slane %v300, 3
        %v435 = vrot.slane %v300, 4
        %v436 = vrot.slane %v300, 5
        %v437 = vrot.slane %v300, 6
        %v438 = vrot.slane %v300, 7
        %v439 = vrot.slane %v302, 1
        %v440 = vrot.slane %v302, 2
        %v441 = vrot.slane %v302, 3
        %v442 = vrot.slane %v302, 4
        %v443 = vrot.slane %v302, 5
        %v444 = vrot.slane %v302, 6
        %v445 = vrot.slane %v302, 7
        %v446 = vrot.slane %v304, 1
        %v447 = vrot.slane %v304, 2
        %v448 = vrot.slane %v304, 3
        %v449 = vrot.slane %v304, 4
        %v450 = vrot.slane %v304, 5
        %v451 = vrot.slane %v304, 6
        %v452 = vrot.slane %v304, 7
        %v453 = vrot.slane %v306, 1
        %v454 = vrot.slane %v306, 2
        %v455 = vrot.slane %v306, 3
        %v456 = vrot.slane %v306, 4
        %v457 = vrot.slane %v306, 5
        %v458 = vrot.slane %v306, 6
        %v459 = vrot.slane %v306, 7
        %v460 = vrot.slane %v308, 1
        %v461 = vrot.slane %v308, 2
        %v462 = vrot.slane %v308, 3
        %v463 = vrot.slane %v308, 4
        %v464 = vrot.slane %v308, 5
        %v465 = vrot.slane %v308, 6
        %v466 = vrot.slane %v308, 7
        %v467 = vrot.slane %v310, 1
        %v468 = vrot.slane %v310, 2
        %v469 = vrot.slane %v310, 3
        %v470 = vrot.slane %v310, 4
        %v471 = vrot.slane %v310, 5
        %v472 = vrot.slane %v310, 6
        %v473 = vrot.slane %v310, 7
        %v474 = vld [vmem:[%s1] sm:$0xff]
        %v475 = vld [vmem:[%s1 + $0x8] sm:$0xff]
        %v476 = vld [vmem:[%s1 + $0x10] sm:$0xff]
        %v477 = vld [vmem:[%s1 + $0x18] sm:$0xff]
        %v478 = vld [vmem:[%s1 + $0x20] sm:$0xf]
        %v479 = vld [vmem:[#allocation2 + $0x1] sm:$0xff]
        %v480 = vld [vmem:[#allocation2 + $0x9] sm:$0x1]
        %v481 = vld [vmem:[#allocation2 + $0x11] sm:$0xff]
        %v482 = vld [vmem:[#allocation2 + $0x19] sm:$0x1]
        %v483 = vld [vmem:[#allocation2 + $0x21] sm:$0xff]
        %v484 = vld [vmem:[#allocation2 + $0x29] sm:$0x1]
        %v485 = vld [vmem:[#allocation2 + $0x31] sm:$0xff]
        %v486 = vld [vmem:[#allocation2 + $0x39] sm:$0x1]
        %v487 = vld [vmem:[#allocation2 + $0x41] sm:$0xff]
        %v488 = vld [vmem:[#allocation2 + $0x49] sm:$0x1]
        %v489 = vld [vmem:[#allocation2 + $0x51] sm:$0xff]
        %v490 = vld [vmem:[#allocation2 + $0x59] sm:$0x1]
        %v491 = vld [vmem:[#allocation2 + $0x61] sm:$0xff]
        %v492 = vld [vmem:[#allocation2 + $0x69] sm:$0x1]
        %v493 = vld [vmem:[#allocation2 + $0x71] sm:$0xff]
        %v494 = vld [vmem:[#allocation2 + $0x79] sm:$0x1]
        %v495 = vld [vmem:[#allocation2 + $0x81] sm:$0xff]
        %v496 = vld [vmem:[#allocation2 + $0x89] sm:$0x1]
        %v497 = vld [vmem:[#allocation2 + $0xa1] sm:$0xff]
        %v498 = vld [vmem:[#allocation2 + $0xa9] sm:$0x1]
        %v499 = vld [vmem:[#allocation2 + $0xb1] sm:$0xff]
        %v500 = vld [vmem:[#allocation2 + $0xb9] sm:$0x1]
        %v501 = vld [vmem:[#allocation2 + $0xc1] sm:$0xff]
        %v502 = vld [vmem:[#allocation2 + $0xc9] sm:$0x1]
        %v503 = vld [vmem:[#allocation2 + $0xd1] sm:$0xff]
        %v504 = vld [vmem:[#allocation2 + $0xd9] sm:$0x1]
        %v505 = vld [vmem:[#allocation2 + $0xe1] sm:$0xff]
        %v506 = vld [vmem:[#allocation2 + $0xe9] sm:$0x1]
        %v507 = vld [vmem:[#allocation2 + $0xf1] sm:$0xff]
        %v508 = vld [vmem:[#allocation2 + $0xf9] sm:$0x1]
        %v509 = vld [vmem:[#allocation2 + $0x101] sm:$0xff]
        %v510 = vld [vmem:[#allocation2 + $0x109] sm:$0x1]
        %v511 = vld [vmem:[#allocation2 + $0x111] sm:$0xff]
        %v512 = vld [vmem:[#allocation2 + $0x119] sm:$0x1]
        %v513 = vld [vmem:[#allocation2 + $0x121] sm:$0xff]
        %v514 = vld [vmem:[#allocation2 + $0x129] sm:$0x1]
        %v551 = vrot.slane %v479, 1
        %v552 = vrot.slane %v479, 2
        %v553 = vrot.slane %v479, 3
        %v554 = vrot.slane %v479, 4
        %v555 = vrot.slane %v479, 5
        %v556 = vrot.slane %v479, 6
        %v557 = vrot.slane %v479, 7
        %v558 = vrot.slane %v481, 1
        %v559 = vrot.slane %v481, 2
        %v560 = vrot.slane %v481, 3
        %v561 = vrot.slane %v481, 4
        %v562 = vrot.slane %v481, 5
        %v563 = vrot.slane %v481, 6
        %v564 = vrot.slane %v481, 7
        %v565 = vrot.slane %v483, 1
        %v566 = vrot.slane %v483, 2
        %v567 = vrot.slane %v483, 3
        %v568 = vrot.slane %v483, 4
        %v569 = vrot.slane %v483, 5
        %v570 = vrot.slane %v483, 6
        %v571 = vrot.slane %v483, 7
        %v572 = vrot.slane %v485, 1
        %v573 = vrot.slane %v485, 2
        %v574 = vrot.slane %v485, 3
        %v575 = vrot.slane %v485, 4
        %v576 = vrot.slane %v485, 5
        %v577 = vrot.slane %v485, 6
        %v578 = vrot.slane %v485, 7
        %v579 = vrot.slane %v487, 1
        %v580 = vrot.slane %v487, 2
        %v581 = vrot.slane %v487, 3
        %v582 = vrot.slane %v487, 4
        %v583 = vrot.slane %v487, 5
        %v584 = vrot.slane %v487, 6
        %v585 = vrot.slane %v487, 7
        %v586 = vrot.slane %v489, 1
        %v587 = vrot.slane %v489, 2
        %v588 = vrot.slane %v489, 3
        %v589 = vrot.slane %v489, 4
        %v590 = vrot.slane %v489, 5
        %v591 = vrot.slane %v489, 6
        %v592 = vrot.slane %v489, 7
        %v593 = vrot.slane %v491, 1
        %v594 = vrot.slane %v491, 2
        %v595 = vrot.slane %v491, 3
        %v596 = vrot.slane %v491, 4
        %v597 = vrot.slane %v491, 5
        %v598 = vrot.slane %v491, 6
        %v599 = vrot.slane %v491, 7
        %v600 = vrot.slane %v493, 1
        %v601 = vrot.slane %v493, 2
        %v602 = vrot.slane %v493, 3
        %v603 = vrot.slane %v493, 4
        %v604 = vrot.slane %v493, 5
        %v605 = vrot.slane %v493, 6
        %v606 = vrot.slane %v493, 7
        %v607 = vrot.slane %v495, 1
        %v608 = vrot.slane %v495, 2
        %v609 = vrot.slane %v495, 3
        %v610 = vrot.slane %v495, 4
        %v611 = vrot.slane %v495, 5
        %v612 = vrot.slane %v495, 6
        %v613 = vrot.slane %v495, 7
        %v614 = vrot.slane %v497, 1
        %v615 = vrot.slane %v497, 2
        %v616 = vrot.slane %v497, 3
        %v617 = vrot.slane %v497, 4
        %v618 = vrot.slane %v497, 5
        %v619 = vrot.slane %v497, 6
        %v620 = vrot.slane %v497, 7
        %v621 = vrot.slane %v499, 1
        %v622 = vrot.slane %v499, 2
        %v623 = vrot.slane %v499, 3
        %v624 = vrot.slane %v499, 4
        %v625 = vrot.slane %v499, 5
        %v626 = vrot.slane %v499, 6
        %v627 = vrot.slane %v499, 7
        %v628 = vrot.slane %v501, 1
        %v629 = vrot.slane %v501, 2
        %v630 = vrot.slane %v501, 3
        %v631 = vrot.slane %v501, 4
        %v632 = vrot.slane %v501, 5
        %v633 = vrot.slane %v501, 6
        %v634 = vrot.slane %v501, 7
        %v635 = vrot.slane %v503, 1
        %v636 = vrot.slane %v503, 2
        %v637 = vrot.slane %v503, 3
        %v638 = vrot.slane %v503, 4
        %v639 = vrot.slane %v503, 5
        %v640 = vrot.slane %v503, 6
        %v641 = vrot.slane %v503, 7
        %v642 = vrot.slane %v505, 1
        %v643 = vrot.slane %v505, 2
        %v644 = vrot.slane %v505, 3
        %v645 = vrot.slane %v505, 4
        %v646 = vrot.slane %v505, 5
        %v647 = vrot.slane %v505, 6
        %v648 = vrot.slane %v505, 7
        %v649 = vrot.slane %v507, 1
        %v650 = vrot.slane %v507, 2
        %v651 = vrot.slane %v507, 3
        %v652 = vrot.slane %v507, 4
        %v653 = vrot.slane %v507, 5
        %v654 = vrot.slane %v507, 6
        %v655 = vrot.slane %v507, 7
        %v656 = vrot.slane %v509, 1
        %v657 = vrot.slane %v509, 2
        %v658 = vrot.slane %v509, 3
        %v659 = vrot.slane %v509, 4
        %v660 = vrot.slane %v509, 5
        %v661 = vrot.slane %v509, 6
        %v662 = vrot.slane %v509, 7
        %v663 = vrot.slane %v511, 1
        %v664 = vrot.slane %v511, 2
        %v665 = vrot.slane %v511, 3
        %v666 = vrot.slane %v511, 4
        %v667 = vrot.slane %v511, 5
        %v668 = vrot.slane %v511, 6
        %v669 = vrot.slane %v511, 7
        %v670 = vrot.slane %v513, 1
        %v671 = vrot.slane %v513, 2
        %v672 = vrot.slane %v513, 3
        %v673 = vrot.slane %v513, 4
        %v674 = vrot.slane %v513, 5
        %v675 = vrot.slane %v513, 6
        %v676 = vrot.slane %v513, 7
        %s677 = scalar_lea.vmem %s1, 40
        %v678 = vld [vmem:[%s677] sm:$0xff]
        %v679 = vld [vmem:[%s677 + $0x8] sm:$0xff]
        %v680 = vld [vmem:[%s677 + $0x10] sm:$0xff]
        %v681 = vld [vmem:[%s677 + $0x18] sm:$0xff]
        %v682 = vld [vmem:[%s677 + $0x20] sm:$0xf]
        %683 = vst [vmem:[#allocation1] ss:$9 sm:$0xff] %v479
        %s684 = scalar_lea.vmem [#allocation1], 1
        %685 = vst [vmem:[%s684] ss:$9 sm:$0xff] %v551
        %s686 = scalar_lea.vmem [#allocation1], 2
        %687 = vst [vmem:[%s686] ss:$9 sm:$0xff] %v552
        %s688 = scalar_lea.vmem [#allocation1], 3
        %689 = vst [vmem:[%s688] ss:$9 sm:$0xff] %v553
        %s690 = scalar_lea.vmem [#allocation1], 4
        %691 = vst [vmem:[%s690] ss:$9 sm:$0xff] %v554
        %s692 = scalar_lea.vmem [#allocation1], 5
        %693 = vst [vmem:[%s692] ss:$9 sm:$0xff] %v555
        %s694 = scalar_lea.vmem [#allocation1], 6
        %695 = vst [vmem:[%s694] ss:$9 sm:$0xff] %v556
        %s696 = scalar_lea.vmem [#allocation1], 7
        %697 = vst [vmem:[%s696] ss:$9 sm:$0xff] %v557
        %v698 = vld [vmem:[#allocation1] sm:$0xff]
        %699 = vst [vmem:[#allocation1] ss:$9 sm:$0xff] %v480
        %700 = vst [vmem:[%s684] ss:$9 sm:$0xff] %v481
        %701 = vst [vmem:[%s686] ss:$9 sm:$0xff] %v558
        %702 = vst [vmem:[%s688] ss:$9 sm:$0xff] %v559
        %703 = vst [vmem:[%s690] ss:$9 sm:$0xff] %v560
        %704 = vst [vmem:[%s692] ss:$9 sm:$0xff] %v561
        %705 = vst [vmem:[%s694] ss:$9 sm:$0xff] %v562
        %706 = vst [vmem:[%s696] ss:$9 sm:$0xff] %v563
        %v707 = vld [vmem:[#allocation1] sm:$0xff]
        %708 = vst [vmem:[#allocation1] ss:$9 sm:$0xff] %v564
        %709 = vst [vmem:[%s684] ss:$9 sm:$0xff] %v482
        %710 = vst [vmem:[%s686] ss:$9 sm:$0xff] %v483
        %711 = vst [vmem:[%s688] ss:$9 sm:$0xff] %v565
        %712 = vst [vmem:[%s690] ss:$9 sm:$0xff] %v566
        %713 = vst [vmem:[%s692] ss:$9 sm:$0xff] %v567
        %714 = vst [vmem:[%s694] ss:$9 sm:$0xff] %v568
        %715 = vst [vmem:[%s696] ss:$9 sm:$0xff] %v569
        %v716 = vld [vmem:[#allocation1] sm:$0xff]
        %717 = vst [vmem:[#allocation1] ss:$9 sm:$0xff] %v570
        %718 = vst [vmem:[%s684] ss:$9 sm:$0xff] %v571
        %719 = vst [vmem:[%s686] ss:$9 sm:$0xff] %v484
        %720 = vst [vmem:[%s688] ss:$9 sm:$0xff] %v485
        %721 = vst [vmem:[%s690] ss:$9 sm:$0xff] %v572
        %722 = vst [vmem:[%s692] ss:$9 sm:$0xff] %v573
        %723 = vst [vmem:[%s694] ss:$9 sm:$0xff] %v574
        %724 = vst [vmem:[%s696] ss:$9 sm:$0xff] %v575
        %v725 = vld [vmem:[#allocation1] sm:$0xff]
        %726 = vst [vmem:[#allocation1] ss:$9 sm:$0xff] %v576
        %727 = vst [vmem:[%s684] ss:$9 sm:$0xff] %v577
        %728 = vst [vmem:[%s686] ss:$9 sm:$0xff] %v578
        %729 = vst [vmem:[%s688] ss:$9 sm:$0xff] %v486
        %730 = vst [vmem:[%s690] ss:$9 sm:$0xff] %v487
        %731 = vst [vmem:[%s692] ss:$9 sm:$0xff] %v579
        %732 = vst [vmem:[%s694] ss:$9 sm:$0xff] %v580
        %733 = vst [vmem:[%s696] ss:$9 sm:$0xff] %v581
        %v734 = vld [vmem:[#allocation1] sm:$0xff]
        %735 = vst [vmem:[#allocation1] ss:$9 sm:$0xff] %v582
        %736 = vst [vmem:[%s684] ss:$9 sm:$0xff] %v583
        %737 = vst [vmem:[%s686] ss:$9 sm:$0xff] %v584
        %738 = vst [vmem:[%s688] ss:$9 sm:$0xff] %v585
        %739 = vst [vmem:[%s690] ss:$9 sm:$0xff] %v488
        %740 = vst [vmem:[%s692] ss:$9 sm:$0xff] %v489
        %741 = vst [vmem:[%s694] ss:$9 sm:$0xff] %v586
        %742 = vst [vmem:[%s696] ss:$9 sm:$0xff] %v587
        %v743 = vld [vmem:[#allocation1] sm:$0xff]
        %744 = vst [vmem:[#allocation1] ss:$9 sm:$0xff] %v588
        %745 = vst [vmem:[%s684] ss:$9 sm:$0xff] %v589
        %746 = vst [vmem:[%s686] ss:$9 sm:$0xff] %v590
        %747 = vst [vmem:[%s688] ss:$9 sm:$0xff] %v591
        %748 = vst [vmem:[%s690] ss:$9 sm:$0xff] %v592
        %749 = vst [vmem:[%s692] ss:$9 sm:$0xff] %v490
        %750 = vst [vmem:[%s694] ss:$9 sm:$0xff] %v491
        %751 = vst [vmem:[%s696] ss:$9 sm:$0xff] %v593
        %v752 = vld [vmem:[#allocation1] sm:$0xff]
        %753 = vst [vmem:[#allocation1] ss:$9 sm:$0xff] %v594
        %754 = vst [vmem:[%s684] ss:$9 sm:$0xff] %v595
        %755 = vst [vmem:[%s686] ss:$9 sm:$0xff] %v596
        %756 = vst [vmem:[%s688] ss:$9 sm:$0xff] %v597
        %757 = vst [vmem:[%s690] ss:$9 sm:$0xff] %v598
        %758 = vst [vmem:[%s692] ss:$9 sm:$0xff] %v599
        %759 = vst [vmem:[%s694] ss:$9 sm:$0xff] %v492
        %760 = vst [vmem:[%s696] ss:$9 sm:$0xff] %v493
        %v761 = vld [vmem:[#allocation1] sm:$0xff]
        %762 = vst [vmem:[#allocation1] ss:$9 sm:$0xff] %v600
        %763 = vst [vmem:[%s684] ss:$9 sm:$0xff] %v601
        %764 = vst [vmem:[%s686] ss:$9 sm:$0xff] %v602
        %765 = vst [vmem:[%s688] ss:$9 sm:$0xff] %v603
        %766 = vst [vmem:[%s690] ss:$9 sm:$0xff] %v604
        %767 = vst [vmem:[%s692] ss:$9 sm:$0xff] %v605
        %768 = vst [vmem:[%s694] ss:$9 sm:$0xff] %v606
        %769 = vst [vmem:[%s696] ss:$9 sm:$0xff] %v494
        %v770 = vld [vmem:[#allocation1] sm:$0xff]
        %771 = vst [vmem:[#allocation1] ss:$9 sm:$0xff] %v495
        %772 = vst [vmem:[%s684] ss:$9 sm:$0xff] %v607
        %773 = vst [vmem:[%s686] ss:$9 sm:$0xff] %v608
        %774 = vst [vmem:[%s688] ss:$9 sm:$0xff] %v609
        %775 = vst [vmem:[%s690] ss:$9 sm:$0xff] %v610
        %776 = vst [vmem:[%s692] ss:$9 sm:$0xff] %v611
        %777 = vst [vmem:[%s694] ss:$9 sm:$0xff] %v612
        %778 = vst [vmem:[%s696] ss:$9 sm:$0xff] %v613
        %v779 = vld [vmem:[#allocation1] sm:$0xff]
        %780 = vst [vmem:[#allocation1] ss:$9 sm:$0xff] %v496
        %781 = vst [vmem:[%s684] ss:$9 sm:$0xff] %v497
        %782 = vst [vmem:[%s686] ss:$9 sm:$0xff] %v614
        %783 = vst [vmem:[%s688] ss:$9 sm:$0xff] %v615
        %784 = vst [vmem:[%s690] ss:$9 sm:$0xff] %v616
        %785 = vst [vmem:[%s692] ss:$9 sm:$0xff] %v617
        %786 = vst [vmem:[%s694] ss:$9 sm:$0xff] %v618
        %787 = vst [vmem:[%s696] ss:$9 sm:$0xff] %v619
        %v788 = vld [vmem:[#allocation1] sm:$0xff]
        %789 = vst [vmem:[#allocation1] ss:$9 sm:$0xff] %v620
        %790 = vst [vmem:[%s684] ss:$9 sm:$0xff] %v498
        %791 = vst [vmem:[%s686] ss:$9 sm:$0xff] %v499
        %792 = vst [vmem:[%s688] ss:$9 sm:$0xff] %v621
        %793 = vst [vmem:[%s690] ss:$9 sm:$0xff] %v622
        %794 = vst [vmem:[%s692] ss:$9 sm:$0xff] %v623
        %795 = vst [vmem:[%s694] ss:$9 sm:$0xff] %v624
        %796 = vst [vmem:[%s696] ss:$9 sm:$0xff] %v625
        %v797 = vld [vmem:[#allocation1] sm:$0xff]
        %798 = vst [vmem:[#allocation1] ss:$9 sm:$0xff] %v626
        %799 = vst [vmem:[%s684] ss:$9 sm:$0xff] %v627
        %800 = vst [vmem:[%s686] ss:$9 sm:$0xff] %v500
        %801 = vst [vmem:[%s688] ss:$9 sm:$0xff] %v501
        %802 = vst [vmem:[%s690] ss:$9 sm:$0xff] %v628
        %803 = vst [vmem:[%s692] ss:$9 sm:$0xff] %v629
        %804 = vst [vmem:[%s694] ss:$9 sm:$0xff] %v630
        %805 = vst [vmem:[%s696] ss:$9 sm:$0xff] %v631
        %v806 = vld [vmem:[#allocation1] sm:$0xff]
        %807 = vst [vmem:[#allocation1] ss:$9 sm:$0xff] %v632
        %808 = vst [vmem:[%s684] ss:$9 sm:$0xff] %v633
        %809 = vst [vmem:[%s686] ss:$9 sm:$0xff] %v634
        %810 = vst [vmem:[%s688] ss:$9 sm:$0xff] %v502
        %811 = vst [vmem:[%s690] ss:$9 sm:$0xff] %v503
        %812 = vst [vmem:[%s692] ss:$9 sm:$0xff] %v635
        %813 = vst [vmem:[%s694] ss:$9 sm:$0xff] %v636
        %814 = vst [vmem:[%s696] ss:$9 sm:$0xff] %v637
        %v815 = vld [vmem:[#allocation1] sm:$0xff]
        %816 = vst [vmem:[#allocation1] ss:$9 sm:$0xff] %v638
        %817 = vst [vmem:[%s684] ss:$9 sm:$0xff] %v639
        %818 = vst [vmem:[%s686] ss:$9 sm:$0xff] %v640
        %819 = vst [vmem:[%s688] ss:$9 sm:$0xff] %v641
        %820 = vst [vmem:[%s690] ss:$9 sm:$0xff] %v504
        %821 = vst [vmem:[%s692] ss:$9 sm:$0xff] %v505
        %822 = vst [vmem:[%s694] ss:$9 sm:$0xff] %v642
        %823 = vst [vmem:[%s696] ss:$9 sm:$0xff] %v643
        %v824 = vld [vmem:[#allocation1] sm:$0xff]
        %825 = vst [vmem:[#allocation1] ss:$9 sm:$0xff] %v644
        %826 = vst [vmem:[%s684] ss:$9 sm:$0xff] %v645
        %827 = vst [vmem:[%s686] ss:$9 sm:$0xff] %v646
        %828 = vst [vmem:[%s688] ss:$9 sm:$0xff] %v647
        %829 = vst [vmem:[%s690] ss:$9 sm:$0xff] %v648
        %830 = vst [vmem:[%s692] ss:$9 sm:$0xff] %v506
        %831 = vst [vmem:[%s694] ss:$9 sm:$0xff] %v507
        %832 = vst [vmem:[%s696] ss:$9 sm:$0xff] %v649
        %v833 = vld [vmem:[#allocation1] sm:$0xff]
        %834 = vst [vmem:[#allocation1] ss:$9 sm:$0xff] %v650
        %835 = vst [vmem:[%s684] ss:$9 sm:$0xff] %v651
        %836 = vst [vmem:[%s686] ss:$9 sm:$0xff] %v652
        %837 = vst [vmem:[%s688] ss:$9 sm:$0xff] %v653
        %838 = vst [vmem:[%s690] ss:$9 sm:$0xff] %v654
        %839 = vst [vmem:[%s692] ss:$9 sm:$0xff] %v655
        %840 = vst [vmem:[%s694] ss:$9 sm:$0xff] %v508
        %841 = vst [vmem:[%s696] ss:$9 sm:$0xff] %v509
        %v842 = vld [vmem:[#allocation1] sm:$0xff]
        %843 = vst [vmem:[#allocation1] ss:$9 sm:$0xff] %v656
        %844 = vst [vmem:[%s684] ss:$9 sm:$0xff] %v657
        %845 = vst [vmem:[%s686] ss:$9 sm:$0xff] %v658
        %846 = vst [vmem:[%s688] ss:$9 sm:$0xff] %v659
        %847 = vst [vmem:[%s690] ss:$9 sm:$0xff] %v660
        %848 = vst [vmem:[%s692] ss:$9 sm:$0xff] %v661
        %849 = vst [vmem:[%s694] ss:$9 sm:$0xff] %v662
        %850 = vst [vmem:[%s696] ss:$9 sm:$0xff] %v510
        %v851 = vld [vmem:[#allocation1] sm:$0xff]
        %852 = vst [vmem:[#allocation1] ss:$9 sm:$0xff] %v511
        %853 = vst [vmem:[%s684] ss:$9 sm:$0xff] %v663
        %854 = vst [vmem:[%s686] ss:$9 sm:$0xff] %v664
        %855 = vst [vmem:[%s688] ss:$9 sm:$0xff] %v665
        %856 = vst [vmem:[%s690] ss:$9 sm:$0xff] %v666
        %857 = vst [vmem:[%s692] ss:$9 sm:$0xff] %v667
        %858 = vst [vmem:[%s694] ss:$9 sm:$0xff] %v668
        %859 = vst [vmem:[%s696] ss:$9 sm:$0xff] %v669
        %v860 = vld [vmem:[#allocation1] sm:$0xff]
        %861 = vst [vmem:[#allocation1] ss:$9 sm:$0xff] %v512
        %862 = vst [vmem:[%s684] ss:$9 sm:$0xff] %v513
        %863 = vst [vmem:[%s686] ss:$9 sm:$0xff] %v670
        %864 = vst [vmem:[%s688] ss:$9 sm:$0xff] %v671
        %865 = vst [vmem:[%s690] ss:$9 sm:$0xff] %v672
        %866 = vst [vmem:[%s692] ss:$9 sm:$0xff] %v673
        %867 = vst [vmem:[%s694] ss:$9 sm:$0xff] %v674
        %868 = vst [vmem:[%s696] ss:$9 sm:$0xff] %v675
        %v869 = vld [vmem:[#allocation1] sm:$0xff]
        %870 = vst [vmem:[#allocation1] ss:$9 sm:$0xff] %v676
        %871 = vst [vmem:[%s684] ss:$9 sm:$0xff] %v514
        %v872 = vld [vmem:[#allocation1] sm:$0xff]
        %v873 = vsel %vm191, %v698, 0
        %v875 = vsel %vm191, %v707, 0
        %v877 = vsel %vm191, %v716, 0
        %v879 = vsel %vm191, %v725, 0
        %v881 = vsel %vm191, %v734, 0
        %v883 = vsel %vm191, %v743, 0
        %v885 = vsel %vm191, %v752, 0
        %v887 = vsel %vm191, %v761, 0
        %v889 = vsel %vm191, %v770, 0
        %v891 = vsel %vm191, %v779, 0
        %v893 = vsel %vm191, %v788, 0
        %v895 = vsel %vm191, %v797, 0
        %v897 = vsel %vm191, %v806, 0
        %v899 = vsel %vm191, %v815, 0
        %v901 = vsel %vm191, %v824, 0
        %v903 = vsel %vm191, %v833, 0
        %v905 = vsel %vm191, %v842, 0
        %v907 = vsel %vm191, %v851, 0
        %v909 = vsel %vm191, %v860, 0
        %v911 = vsel %vm191, %v869, 0
        %v913 = vsel %vm191, %v872, 0
        %vm915 = vcmask 1043456
        %v917 = vsel %vm915, %v682, 0
        %919 = vmatpush.msra.mxu0 0.0
        %920 = vmatpush.msra.mxu0 0.0
        %921 = vmatpush.msra.mxu0 0.0
        %922 = vmatpush.msra.mxu0 0.0
        %923 = vmatpush.msra.mxu0 0.0
        %924 = vmatpush.msra.mxu0 0.0
        %925 = vmatpush.msra.mxu0 0.0
        %926 = vmatpush.msra.mxu0 0.0
        %927 = vmatpush.msra.mxu0 0.0
        %928 = vmatpush.msra.mxu0 0.0
        %929 = vmatpush.msra.mxu0 0.0
        %930 = vmatpush.msra.mxu0 %v917
        %931 = vmatpush.msra.mxu0 %v681
        %932 = vmatpush.msra.mxu0 %v680
        %933 = vmatpush.msra.mxu0 %v679
        %934 = vmatpush.msra.mxu0 %v678
        %935 = vmatmul.f32.gmra.mxu0 %v873
        %v936 = vpop.f32.mrf.mxu0
        %v937 = vadd.f32 0.0, %v936
        %938 = vmatmul.f32.gmra.mxu0 %v875
        %v939 = vpop.f32.mrf.mxu0
        %v940 = vadd.f32 0.0, %v939
        %941 = vmatmul.f32.gmra.mxu0 %v877
        %v942 = vpop.f32.mrf.mxu0
        %v943 = vadd.f32 0.0, %v942
        %944 = vmatmul.f32.gmra.mxu0 %v879
        %v945 = vpop.f32.mrf.mxu0
        %v946 = vadd.f32 0.0, %v945
        %947 = vmatmul.f32.gmra.mxu0 %v881
        %v948 = vpop.f32.mrf.mxu0
        %v949 = vadd.f32 0.0, %v948
        %950 = vmatmul.f32.gmra.mxu0 %v883
        %v951 = vpop.f32.mrf.mxu0
        %v952 = vadd.f32 0.0, %v951
        %953 = vmatmul.f32.gmra.mxu0 %v885
        %v954 = vpop.f32.mrf.mxu0
        %v955 = vadd.f32 0.0, %v954
        %956 = vmatmul.f32.gmra.mxu0 %v887
        %v957 = vpop.f32.mrf.mxu0
        %v958 = vadd.f32 0.0, %v957
        %959 = vmatmul.f32.gmra.mxu0 %v889
        %v960 = vpop.f32.mrf.mxu0
        %v961 = vadd.f32 0.0, %v960
        %962 = vmatmul.f32.gmra.mxu0 %v891
        %v963 = vpop.f32.mrf.mxu0
        %v964 = vadd.f32 0.0, %v963
        %965 = vmatmul.f32.gmra.mxu0 %v893
        %v966 = vpop.f32.mrf.mxu0
        %v967 = vadd.f32 0.0, %v966
        %968 = vmatmul.f32.gmra.mxu0 %v895
        %v969 = vpop.f32.mrf.mxu0
        %v970 = vadd.f32 0.0, %v969
        %971 = vmatmul.f32.gmra.mxu0 %v897
        %v972 = vpop.f32.mrf.mxu0
        %v973 = vadd.f32 0.0, %v972
        %974 = vmatmul.f32.gmra.mxu0 %v899
        %v975 = vpop.f32.mrf.mxu0
        %v976 = vadd.f32 0.0, %v975
        %977 = vmatmul.f32.gmra.mxu0 %v901
        %v978 = vpop.f32.mrf.mxu0
        %v979 = vadd.f32 0.0, %v978
        %980 = vmatmul.f32.gmra.mxu0 %v903
        %v981 = vpop.f32.mrf.mxu0
        %v982 = vadd.f32 0.0, %v981
        %983 = vmatmul.f32.gmra.mxu0 %v905
        %v984 = vpop.f32.mrf.mxu0
        %v985 = vadd.f32 0.0, %v984
        %986 = vmatmul.f32.gmra.mxu0 %v907
        %v987 = vpop.f32.mrf.mxu0
        %v988 = vadd.f32 0.0, %v987
        %989 = vmatmul.f32.gmra.mxu0 %v909
        %v990 = vpop.f32.mrf.mxu0
        %v991 = vadd.f32 0.0, %v990
        %992 = vmatmul.f32.gmra.mxu0 %v911
        %v993 = vpop.f32.mrf.mxu0
        %v994 = vadd.f32 0.0, %v993
        %995 = vmatmul.f32.gmra.mxu0 %v913
        %v996 = vpop.f32.mrf.mxu0
        %v997 = vadd.f32 0.0, %v996
        %998 = vdwg.mxu0
        %999 = vst [vmem:[#allocation1] ss:$9 sm:$0xff] %v276
        %s1000 = scalar_lea.vmem [#allocation1], 1
        %1001 = vst [vmem:[%s1000] ss:$9 sm:$0xff] %v348
        %s1002 = scalar_lea.vmem [#allocation1], 2
        %1003 = vst [vmem:[%s1002] ss:$9 sm:$0xff] %v349
        %s1004 = scalar_lea.vmem [#allocation1], 3
        %1005 = vst [vmem:[%s1004] ss:$9 sm:$0xff] %v350
        %s1006 = scalar_lea.vmem [#allocation1], 4
        %1007 = vst [vmem:[%s1006] ss:$9 sm:$0xff] %v351
        %s1008 = scalar_lea.vmem [#allocation1], 5
        %1009 = vst [vmem:[%s1008] ss:$9 sm:$0xff] %v352
        %s1010 = scalar_lea.vmem [#allocation1], 6
        %1011 = vst [vmem:[%s1010] ss:$9 sm:$0xff] %v353
        %s1012 = scalar_lea.vmem [#allocation1], 7
        %1013 = vst [vmem:[%s1012] ss:$9 sm:$0xff] %v354
        %v1014 = vld [vmem:[#allocation1] sm:$0xff]
        %1015 = vst [vmem:[#allocation1] ss:$9 sm:$0xff] %v277
        %1016 = vst [vmem:[%s1000] ss:$9 sm:$0xff] %v278
        %1017 = vst [vmem:[%s1002] ss:$9 sm:$0xff] %v355
        %1018 = vst [vmem:[%s1004] ss:$9 sm:$0xff] %v356
        %1019 = vst [vmem:[%s1006] ss:$9 sm:$0xff] %v357
        %1020 = vst [vmem:[%s1008] ss:$9 sm:$0xff] %v358
        %1021 = vst [vmem:[%s1010] ss:$9 sm:$0xff] %v359
        %1022 = vst [vmem:[%s1012] ss:$9 sm:$0xff] %v360
        %v1023 = vld [vmem:[#allocation1] sm:$0xff]
        %1024 = vst [vmem:[#allocation1] ss:$9 sm:$0xff] %v361
        %1025 = vst [vmem:[%s1000] ss:$9 sm:$0xff] %v279
        %1026 = vst [vmem:[%s1002] ss:$9 sm:$0xff] %v280
        %1027 = vst [vmem:[%s1004] ss:$9 sm:$0xff] %v362
        %1028 = vst [vmem:[%s1006] ss:$9 sm:$0xff] %v363
        %1029 = vst [vmem:[%s1008] ss:$9 sm:$0xff] %v364
        %1030 = vst [vmem:[%s1010] ss:$9 sm:$0xff] %v365
        %1031 = vst [vmem:[%s1012] ss:$9 sm:$0xff] %v366
        %v1032 = vld [vmem:[#allocation1] sm:$0xff]
        %1033 = vst [vmem:[#allocation1] ss:$9 sm:$0xff] %v367
        %1034 = vst [vmem:[%s1000] ss:$9 sm:$0xff] %v368
        %1035 = vst [vmem:[%s1002] ss:$9 sm:$0xff] %v281
        %1036 = vst [vmem:[%s1004] ss:$9 sm:$0xff] %v282
        %1037 = vst [vmem:[%s1006] ss:$9 sm:$0xff] %v369
        %1038 = vst [vmem:[%s1008] ss:$9 sm:$0xff] %v370
        %1039 = vst [vmem:[%s1010] ss:$9 sm:$0xff] %v371
        %1040 = vst [vmem:[%s1012] ss:$9 sm:$0xff] %v372
        %v1041 = vld [vmem:[#allocation1] sm:$0xff]
        %1042 = vst [vmem:[#allocation1] ss:$9 sm:$0xff] %v373
        %1043 = vst [vmem:[%s1000] ss:$9 sm:$0xff] %v374
        %1044 = vst [vmem:[%s1002] ss:$9 sm:$0xff] %v375
        %1045 = vst [vmem:[%s1004] ss:$9 sm:$0xff] %v283
        %1046 = vst [vmem:[%s1006] ss:$9 sm:$0xff] %v284
        %1047 = vst [vmem:[%s1008] ss:$9 sm:$0xff] %v376
        %1048 = vst [vmem:[%s1010] ss:$9 sm:$0xff] %v377
        %1049 = vst [vmem:[%s1012] ss:$9 sm:$0xff] %v378
        %v1050 = vld [vmem:[#allocation1] sm:$0xff]
        %1051 = vst [vmem:[#allocation1] ss:$9 sm:$0xff] %v379
        %1052 = vst [vmem:[%s1000] ss:$9 sm:$0xff] %v380
        %1053 = vst [vmem:[%s1002] ss:$9 sm:$0xff] %v381
        %1054 = vst [vmem:[%s1004] ss:$9 sm:$0xff] %v382
        %1055 = vst [vmem:[%s1006] ss:$9 sm:$0xff] %v285
        %1056 = vst [vmem:[%s1008] ss:$9 sm:$0xff] %v286
        %1057 = vst [vmem:[%s1010] ss:$9 sm:$0xff] %v383
        %1058 = vst [vmem:[%s1012] ss:$9 sm:$0xff] %v384
        %v1059 = vld [vmem:[#allocation1] sm:$0xff]
        %1060 = vst [vmem:[#allocation1] ss:$9 sm:$0xff] %v385
        %1061 = vst [vmem:[%s1000] ss:$9 sm:$0xff] %v386
        %1062 = vst [vmem:[%s1002] ss:$9 sm:$0xff] %v387
        %1063 = vst [vmem:[%s1004] ss:$9 sm:$0xff] %v388
        %1064 = vst [vmem:[%s1006] ss:$9 sm:$0xff] %v389
        %1065 = vst [vmem:[%s1008] ss:$9 sm:$0xff] %v287
        %1066 = vst [vmem:[%s1010] ss:$9 sm:$0xff] %v288
        %1067 = vst [vmem:[%s1012] ss:$9 sm:$0xff] %v390
        %v1068 = vld [vmem:[#allocation1] sm:$0xff]
        %1069 = vst [vmem:[#allocation1] ss:$9 sm:$0xff] %v391
        %1070 = vst [vmem:[%s1000] ss:$9 sm:$0xff] %v392
        %1071 = vst [vmem:[%s1002] ss:$9 sm:$0xff] %v393
        %1072 = vst [vmem:[%s1004] ss:$9 sm:$0xff] %v394
        %1073 = vst [vmem:[%s1006] ss:$9 sm:$0xff] %v395
        %1074 = vst [vmem:[%s1008] ss:$9 sm:$0xff] %v396
        %1075 = vst [vmem:[%s1010] ss:$9 sm:$0xff] %v289
        %1076 = vst [vmem:[%s1012] ss:$9 sm:$0xff] %v290
        %v1077 = vld [vmem:[#allocation1] sm:$0xff]
        %1078 = vst [vmem:[#allocation1] ss:$9 sm:$0xff] %v397
        %1079 = vst [vmem:[%s1000] ss:$9 sm:$0xff] %v398
        %1080 = vst [vmem:[%s1002] ss:$9 sm:$0xff] %v399
        %1081 = vst [vmem:[%s1004] ss:$9 sm:$0xff] %v400
        %1082 = vst [vmem:[%s1006] ss:$9 sm:$0xff] %v401
        %1083 = vst [vmem:[%s1008] ss:$9 sm:$0xff] %v402
        %1084 = vst [vmem:[%s1010] ss:$9 sm:$0xff] %v403
        %1085 = vst [vmem:[%s1012] ss:$9 sm:$0xff] %v291
        %v1086 = vld [vmem:[#allocation1] sm:$0xff]
        %1087 = vst [vmem:[#allocation1] ss:$9 sm:$0xff] %v292
        %1088 = vst [vmem:[%s1000] ss:$9 sm:$0xff] %v404
        %1089 = vst [vmem:[%s1002] ss:$9 sm:$0xff] %v405
        %1090 = vst [vmem:[%s1004] ss:$9 sm:$0xff] %v406
        %1091 = vst [vmem:[%s1006] ss:$9 sm:$0xff] %v407
        %1092 = vst [vmem:[%s1008] ss:$9 sm:$0xff] %v408
        %1093 = vst [vmem:[%s1010] ss:$9 sm:$0xff] %v409
        %1094 = vst [vmem:[%s1012] ss:$9 sm:$0xff] %v410
        %v1095 = vld [vmem:[#allocation1] sm:$0xff]
        %1096 = vst [vmem:[#allocation1] ss:$9 sm:$0xff] %v293
        %1097 = vst [vmem:[%s1000] ss:$9 sm:$0xff] %v294
        %1098 = vst [vmem:[%s1002] ss:$9 sm:$0xff] %v411
        %1099 = vst [vmem:[%s1004] ss:$9 sm:$0xff] %v412
        %1100 = vst [vmem:[%s1006] ss:$9 sm:$0xff] %v413
        %1101 = vst [vmem:[%s1008] ss:$9 sm:$0xff] %v414
        %1102 = vst [vmem:[%s1010] ss:$9 sm:$0xff] %v415
        %1103 = vst [vmem:[%s1012] ss:$9 sm:$0xff] %v416
        %v1104 = vld [vmem:[#allocation1] sm:$0xff]
        %1105 = vst [vmem:[#allocation1] ss:$9 sm:$0xff] %v417
        %1106 = vst [vmem:[%s1000] ss:$9 sm:$0xff] %v295
        %1107 = vst [vmem:[%s1002] ss:$9 sm:$0xff] %v296
        %1108 = vst [vmem:[%s1004] ss:$9 sm:$0xff] %v418
        %1109 = vst [vmem:[%s1006] ss:$9 sm:$0xff] %v419
        %1110 = vst [vmem:[%s1008] ss:$9 sm:$0xff] %v420
        %1111 = vst [vmem:[%s1010] ss:$9 sm:$0xff] %v421
        %1112 = vst [vmem:[%s1012] ss:$9 sm:$0xff] %v422
        %v1113 = vld [vmem:[#allocation1] sm:$0xff]
        %1114 = vst [vmem:[#allocation1] ss:$9 sm:$0xff] %v423
        %1115 = vst [vmem:[%s1000] ss:$9 sm:$0xff] %v424
        %1116 = vst [vmem:[%s1002] ss:$9 sm:$0xff] %v297
        %1117 = vst [vmem:[%s1004] ss:$9 sm:$0xff] %v298
        %1118 = vst [vmem:[%s1006] ss:$9 sm:$0xff] %v425
        %1119 = vst [vmem:[%s1008] ss:$9 sm:$0xff] %v426
        %1120 = vst [vmem:[%s1010] ss:$9 sm:$0xff] %v427
        %1121 = vst [vmem:[%s1012] ss:$9 sm:$0xff] %v428
        %v1122 = vld [vmem:[#allocation1] sm:$0xff]
        %1123 = vst [vmem:[#allocation1] ss:$9 sm:$0xff] %v429
        %1124 = vst [vmem:[%s1000] ss:$9 sm:$0xff] %v430
        %1125 = vst [vmem:[%s1002] ss:$9 sm:$0xff] %v431
        %1126 = vst [vmem:[%s1004] ss:$9 sm:$0xff] %v299
        %1127 = vst [vmem:[%s1006] ss:$9 sm:$0xff] %v300
        %1128 = vst [vmem:[%s1008] ss:$9 sm:$0xff] %v432
        %1129 = vst [vmem:[%s1010] ss:$9 sm:$0xff] %v433
        %1130 = vst [vmem:[%s1012] ss:$9 sm:$0xff] %v434
        %v1131 = vld [vmem:[#allocation1] sm:$0xff]
        %1132 = vst [vmem:[#allocation1] ss:$9 sm:$0xff] %v435
        %1133 = vst [vmem:[%s1000] ss:$9 sm:$0xff] %v436
        %1134 = vst [vmem:[%s1002] ss:$9 sm:$0xff] %v437
        %1135 = vst [vmem:[%s1004] ss:$9 sm:$0xff] %v438
        %1136 = vst [vmem:[%s1006] ss:$9 sm:$0xff] %v301
        %1137 = vst [vmem:[%s1008] ss:$9 sm:$0xff] %v302
        %1138 = vst [vmem:[%s1010] ss:$9 sm:$0xff] %v439
        %1139 = vst [vmem:[%s1012] ss:$9 sm:$0xff] %v440
        %v1140 = vld [vmem:[#allocation1] sm:$0xff]
        %1141 = vst [vmem:[#allocation1] ss:$9 sm:$0xff] %v441
        %1142 = vst [vmem:[%s1000] ss:$9 sm:$0xff] %v442
        %1143 = vst [vmem:[%s1002] ss:$9 sm:$0xff] %v443
        %1144 = vst [vmem:[%s1004] ss:$9 sm:$0xff] %v444
        %1145 = vst [vmem:[%s1006] ss:$9 sm:$0xff] %v445
        %1146 = vst [vmem:[%s1008] ss:$9 sm:$0xff] %v303
        %1147 = vst [vmem:[%s1010] ss:$9 sm:$0xff] %v304
        %1148 = vst [vmem:[%s1012] ss:$9 sm:$0xff] %v446
        %v1149 = vld [vmem:[#allocation1] sm:$0xff]
        %1150 = vst [vmem:[#allocation1] ss:$9 sm:$0xff] %v447
        %1151 = vst [vmem:[%s1000] ss:$9 sm:$0xff] %v448
        %1152 = vst [vmem:[%s1002] ss:$9 sm:$0xff] %v449
        %1153 = vst [vmem:[%s1004] ss:$9 sm:$0xff] %v450
        %1154 = vst [vmem:[%s1006] ss:$9 sm:$0xff] %v451
        %1155 = vst [vmem:[%s1008] ss:$9 sm:$0xff] %v452
        %1156 = vst [vmem:[%s1010] ss:$9 sm:$0xff] %v305
        %1157 = vst [vmem:[%s1012] ss:$9 sm:$0xff] %v306
        %v1158 = vld [vmem:[#allocation1] sm:$0xff]
        %1159 = vst [vmem:[#allocation1] ss:$9 sm:$0xff] %v453
        %1160 = vst [vmem:[%s1000] ss:$9 sm:$0xff] %v454
        %1161 = vst [vmem:[%s1002] ss:$9 sm:$0xff] %v455
        %1162 = vst [vmem:[%s1004] ss:$9 sm:$0xff] %v456
        %1163 = vst [vmem:[%s1006] ss:$9 sm:$0xff] %v457
        %1164 = vst [vmem:[%s1008] ss:$9 sm:$0xff] %v458
        %1165 = vst [vmem:[%s1010] ss:$9 sm:$0xff] %v459
        %1166 = vst [vmem:[%s1012] ss:$9 sm:$0xff] %v307
        %v1167 = vld [vmem:[#allocation1] sm:$0xff]
        %1168 = vst [vmem:[#allocation1] ss:$9 sm:$0xff] %v308
        %1169 = vst [vmem:[%s1000] ss:$9 sm:$0xff] %v460
        %1170 = vst [vmem:[%s1002] ss:$9 sm:$0xff] %v461
        %1171 = vst [vmem:[%s1004] ss:$9 sm:$0xff] %v462
        %1172 = vst [vmem:[%s1006] ss:$9 sm:$0xff] %v463
        %1173 = vst [vmem:[%s1008] ss:$9 sm:$0xff] %v464
        %1174 = vst [vmem:[%s1010] ss:$9 sm:$0xff] %v465
        %1175 = vst [vmem:[%s1012] ss:$9 sm:$0xff] %v466
        %v1176 = vld [vmem:[#allocation1] sm:$0xff]
        %1177 = vst [vmem:[#allocation1] ss:$9 sm:$0xff] %v309
        %1178 = vst [vmem:[%s1000] ss:$9 sm:$0xff] %v310
        %1179 = vst [vmem:[%s1002] ss:$9 sm:$0xff] %v467
        %1180 = vst [vmem:[%s1004] ss:$9 sm:$0xff] %v468
        %1181 = vst [vmem:[%s1006] ss:$9 sm:$0xff] %v469
        %1182 = vst [vmem:[%s1008] ss:$9 sm:$0xff] %v470
        %1183 = vst [vmem:[%s1010] ss:$9 sm:$0xff] %v471
        %1184 = vst [vmem:[%s1012] ss:$9 sm:$0xff] %v472
        %v1185 = vld [vmem:[#allocation1] sm:$0xff]
        %1186 = vst [vmem:[#allocation1] ss:$9 sm:$0xff] %v473
        %1187 = vst [vmem:[%s1000] ss:$9 sm:$0xff] %v311
        %v1188 = vld [vmem:[#allocation1] sm:$0xff]
        %v1189 = vsel %vm191, %v1014, 0
        %v1191 = vsel %vm191, %v1023, 0
        %v1193 = vsel %vm191, %v1032, 0
        %v1195 = vsel %vm191, %v1041, 0
        %v1197 = vsel %vm191, %v1050, 0
        %v1199 = vsel %vm191, %v1059, 0
        %v1201 = vsel %vm191, %v1068, 0
        %v1203 = vsel %vm191, %v1077, 0
        %v1205 = vsel %vm191, %v1086, 0
        %v1207 = vsel %vm191, %v1095, 0
        %v1209 = vsel %vm191, %v1104, 0
        %v1211 = vsel %vm191, %v1113, 0
        %v1213 = vsel %vm191, %v1122, 0
        %v1215 = vsel %vm191, %v1131, 0
        %v1217 = vsel %vm191, %v1140, 0
        %v1219 = vsel %vm191, %v1149, 0
        %v1221 = vsel %vm191, %v1158, 0
        %v1223 = vsel %vm191, %v1167, 0
        %v1225 = vsel %vm191, %v1176, 0
        %v1227 = vsel %vm191, %v1185, 0
        %v1229 = vsel %vm191, %v1188, 0
        %v1232 = vsel %vm915, %v478, 0
        %1234 = vmatpush.msra.mxu0 0.0
        %1235 = vmatpush.msra.mxu0 0.0
        %1236 = vmatpush.msra.mxu0 0.0
        %1237 = vmatpush.msra.mxu0 0.0
        %1238 = vmatpush.msra.mxu0 0.0
        %1239 = vmatpush.msra.mxu0 0.0
        %1240 = vmatpush.msra.mxu0 0.0
        %1241 = vmatpush.msra.mxu0 0.0
        %1242 = vmatpush.msra.mxu0 0.0
        %1243 = vmatpush.msra.mxu0 0.0
        %1244 = vmatpush.msra.mxu0 0.0
        %1245 = vmatpush.msra.mxu0 %v1232
        %1246 = vmatpush.msra.mxu0 %v477
        %1247 = vmatpush.msra.mxu0 %v476
        %1248 = vmatpush.msra.mxu0 %v475
        %1249 = vmatpush.msra.mxu0 %v474
        %1250 = vmatmul.f32.gmra.mxu0 %v1189
        %v1251 = vpop.f32.mrf.mxu0
        %v1252 = vadd.f32 %v937, %v1251
        %1253 = vmatmul.f32.gmra.mxu0 %v1191
        %v1254 = vpop.f32.mrf.mxu0
        %v1255 = vadd.f32 %v940, %v1254
        %1256 = vmatmul.f32.gmra.mxu0 %v1193
        %v1257 = vpop.f32.mrf.mxu0
        %v1258 = vadd.f32 %v943, %v1257
        %1259 = vmatmul.f32.gmra.mxu0 %v1195
        %v1260 = vpop.f32.mrf.mxu0
        %v1261 = vadd.f32 %v946, %v1260
        %1262 = vmatmul.f32.gmra.mxu0 %v1197
        %v1263 = vpop.f32.mrf.mxu0
        %v1264 = vadd.f32 %v949, %v1263
        %1265 = vmatmul.f32.gmra.mxu0 %v1199
        %v1266 = vpop.f32.mrf.mxu0
        %v1267 = vadd.f32 %v952, %v1266
        %1268 = vmatmul.f32.gmra.mxu0 %v1201
        %v1269 = vpop.f32.mrf.mxu0
        %v1270 = vadd.f32 %v955, %v1269
        %1271 = vmatmul.f32.gmra.mxu0 %v1203
        %v1272 = vpop.f32.mrf.mxu0
        %v1273 = vadd.f32 %v958, %v1272
        %1274 = vmatmul.f32.gmra.mxu0 %v1205
        %v1275 = vpop.f32.mrf.mxu0
        %v1276 = vadd.f32 %v961, %v1275
        %1277 = vmatmul.f32.gmra.mxu0 %v1207
        %v1278 = vpop.f32.mrf.mxu0
        %v1279 = vadd.f32 %v964, %v1278
        %1280 = vmatmul.f32.gmra.mxu0 %v1209
        %v1281 = vpop.f32.mrf.mxu0
        %v1282 = vadd.f32 %v967, %v1281
        %1283 = vmatmul.f32.gmra.mxu0 %v1211
        %v1284 = vpop.f32.mrf.mxu0
        %v1285 = vadd.f32 %v970, %v1284
        %1286 = vmatmul.f32.gmra.mxu0 %v1213
        %v1287 = vpop.f32.mrf.mxu0
        %v1288 = vadd.f32 %v973, %v1287
        %1289 = vmatmul.f32.gmra.mxu0 %v1215
        %v1290 = vpop.f32.mrf.mxu0
        %v1291 = vadd.f32 %v976, %v1290
        %1292 = vmatmul.f32.gmra.mxu0 %v1217
        %v1293 = vpop.f32.mrf.mxu0
        %v1294 = vadd.f32 %v979, %v1293
        %1295 = vmatmul.f32.gmra.mxu0 %v1219
        %v1296 = vpop.f32.mrf.mxu0
        %v1297 = vadd.f32 %v982, %v1296
        %1298 = vmatmul.f32.gmra.mxu0 %v1221
        %v1299 = vpop.f32.mrf.mxu0
        %v1300 = vadd.f32 %v985, %v1299
        %1301 = vmatmul.f32.gmra.mxu0 %v1223
        %v1302 = vpop.f32.mrf.mxu0
        %v1303 = vadd.f32 %v988, %v1302
        %1304 = vmatmul.f32.gmra.mxu0 %v1225
        %v1305 = vpop.f32.mrf.mxu0
        %v1306 = vadd.f32 %v991, %v1305
        %1307 = vmatmul.f32.gmra.mxu0 %v1227
        %v1308 = vpop.f32.mrf.mxu0
        %v1309 = vadd.f32 %v994, %v1308
        %1310 = vmatmul.f32.gmra.mxu0 %v1229
        %v1311 = vpop.f32.mrf.mxu0
        %v1312 = vadd.f32 %v997, %v1311
        %1313 = vdwg.mxu0
        %v1314 = vld [vmem:[%s259] sm:$0xff]
        %v1315 = vld [vmem:[%s259 + $0x8] sm:$0x1]
        %v1316 = vld [vmem:[%s259 + $0x10] sm:$0xff]
        %v1317 = vld [vmem:[%s259 + $0x18] sm:$0x1]
        %v1318 = vld [vmem:[%s259 + $0x20] sm:$0xff]
        %v1319 = vld [vmem:[%s259 + $0x28] sm:$0x1]
        %v1320 = vld [vmem:[%s259 + $0x30] sm:$0xff]
        %v1321 = vld [vmem:[%s259 + $0x38] sm:$0x1]
        %v1322 = vld [vmem:[%s259 + $0x40] sm:$0xff]
        %v1323 = vld [vmem:[%s259 + $0x48] sm:$0x1]
        %v1324 = vld [vmem:[%s259 + $0x50] sm:$0xff]
        %v1325 = vld [vmem:[%s259 + $0x58] sm:$0x1]
        %v1326 = vld [vmem:[%s259 + $0x60] sm:$0xff]
        %v1327 = vld [vmem:[%s259 + $0x68] sm:$0x1]
        %v1328 = vld [vmem:[%s259 + $0x70] sm:$0xff]
        %v1329 = vld [vmem:[%s259 + $0x78] sm:$0x1]
        %v1330 = vld [vmem:[%s259 + $0x80] sm:$0xff]
        %v1331 = vld [vmem:[%s259 + $0x88] sm:$0x1]
        %v1332 = vld [vmem:[%s259 + $0xa0] sm:$0xff]
        %v1333 = vld [vmem:[%s259 + $0xa8] sm:$0x1]
        %v1334 = vld [vmem:[%s259 + $0xb0] sm:$0xff]
        %v1335 = vld [vmem:[%s259 + $0xb8] sm:$0x1]
        %v1336 = vld [vmem:[%s259 + $0xc0] sm:$0xff]
        %v1337 = vld [vmem:[%s259 + $0xc8] sm:$0x1]
        %v1338 = vld [vmem:[%s259 + $0xd0] sm:$0xff]
        %v1339 = vld [vmem:[%s259 + $0xd8] sm:$0x1]
        %v1340 = vld [vmem:[%s259 + $0xe0] sm:$0xff]
        %v1341 = vld [vmem:[%s259 + $0xe8] sm:$0x1]
        %v1342 = vld [vmem:[%s259 + $0xf0] sm:$0xff]
        %v1343 = vld [vmem:[%s259 + $0xf8] sm:$0x1]
        %v1344 = vld [vmem:[%s259 + $0x100] sm:$0xff]
        %v1345 = vld [vmem:[%s259 + $0x108] sm:$0x1]
        %v1346 = vld [vmem:[%s259 + $0x110] sm:$0xff]
        %v1347 = vld [vmem:[%s259 + $0x118] sm:$0x1]
        %v1348 = vld [vmem:[%s259 + $0x120] sm:$0xff]
        %v1349 = vld [vmem:[%s259 + $0x128] sm:$0x1]
        %v1386 = vrot.slane %v1314, 1
        %v1387 = vrot.slane %v1314, 2
        %v1388 = vrot.slane %v1314, 3
        %v1389 = vrot.slane %v1314, 4
        %v1390 = vrot.slane %v1314, 5
        %v1391 = vrot.slane %v1314, 6
        %v1392 = vrot.slane %v1314, 7
        %v1393 = vrot.slane %v1316, 1
        %v1394 = vrot.slane %v1316, 2
        %v1395 = vrot.slane %v1316, 3
        %v1396 = vrot.slane %v1316, 4
        %v1397 = vrot.slane %v1316, 5
        %v1398 = vrot.slane %v1316, 6
        %v1399 = vrot.slane %v1316, 7
        %v1400 = vrot.slane %v1318, 1
        %v1401 = vrot.slane %v1318, 2
        %v1402 = vrot.slane %v1318, 3
        %v1403 = vrot.slane %v1318, 4
        %v1404 = vrot.slane %v1318, 5
        %v1405 = vrot.slane %v1318, 6
        %v1406 = vrot.slane %v1318, 7
        %v1407 = vrot.slane %v1320, 1
        %v1408 = vrot.slane %v1320, 2
        %v1409 = vrot.slane %v1320, 3
        %v1410 = vrot.slane %v1320, 4
        %v1411 = vrot.slane %v1320, 5
        %v1412 = vrot.slane %v1320, 6
        %v1413 = vrot.slane %v1320, 7
        %v1414 = vrot.slane %v1322, 1
        %v1415 = vrot.slane %v1322, 2
        %v1416 = vrot.slane %v1322, 3
        %v1417 = vrot.slane %v1322, 4
        %v1418 = vrot.slane %v1322, 5
        %v1419 = vrot.slane %v1322, 6
        %v1420 = vrot.slane %v1322, 7
        %v1421 = vrot.slane %v1324, 1
        %v1422 = vrot.slane %v1324, 2
        %v1423 = vrot.slane %v1324, 3
        %v1424 = vrot.slane %v1324, 4
        %v1425 = vrot.slane %v1324, 5
        %v1426 = vrot.slane %v1324, 6
        %v1427 = vrot.slane %v1324, 7
        %v1428 = vrot.slane %v1326, 1
        %v1429 = vrot.slane %v1326, 2
        %v1430 = vrot.slane %v1326, 3
        %v1431 = vrot.slane %v1326, 4
        %v1432 = vrot.slane %v1326, 5
        %v1433 = vrot.slane %v1326, 6
        %v1434 = vrot.slane %v1326, 7
        %v1435 = vrot.slane %v1328, 1
        %v1436 = vrot.slane %v1328, 2
        %v1437 = vrot.slane %v1328, 3
        %v1438 = vrot.slane %v1328, 4
        %v1439 = vrot.slane %v1328, 5
        %v1440 = vrot.slane %v1328, 6
        %v1441 = vrot.slane %v1328, 7
        %v1442 = vrot.slane %v1330, 1
        %v1443 = vrot.slane %v1330, 2
        %v1444 = vrot.slane %v1330, 3
        %v1445 = vrot.slane %v1330, 4
        %v1446 = vrot.slane %v1330, 5
        %v1447 = vrot.slane %v1330, 6
        %v1448 = vrot.slane %v1330, 7
        %v1449 = vrot.slane %v1332, 1
        %v1450 = vrot.slane %v1332, 2
        %v1451 = vrot.slane %v1332, 3
        %v1452 = vrot.slane %v1332, 4
        %v1453 = vrot.slane %v1332, 5
        %v1454 = vrot.slane %v1332, 6
        %v1455 = vrot.slane %v1332, 7
        %v1456 = vrot.slane %v1334, 1
        %v1457 = vrot.slane %v1334, 2
        %v1458 = vrot.slane %v1334, 3
        %v1459 = vrot.slane %v1334, 4
        %v1460 = vrot.slane %v1334, 5
        %v1461 = vrot.slane %v1334, 6
        %v1462 = vrot.slane %v1334, 7
        %v1463 = vrot.slane %v1336, 1
        %v1464 = vrot.slane %v1336, 2
        %v1465 = vrot.slane %v1336, 3
        %v1466 = vrot.slane %v1336, 4
        %v1467 = vrot.slane %v1336, 5
        %v1468 = vrot.slane %v1336, 6
        %v1469 = vrot.slane %v1336, 7
        %v1470 = vrot.slane %v1338, 1
        %v1471 = vrot.slane %v1338, 2
        %v1472 = vrot.slane %v1338, 3
        %v1473 = vrot.slane %v1338, 4
        %v1474 = vrot.slane %v1338, 5
        %v1475 = vrot.slane %v1338, 6
        %v1476 = vrot.slane %v1338, 7
        %v1477 = vrot.slane %v1340, 1
        %v1478 = vrot.slane %v1340, 2
        %v1479 = vrot.slane %v1340, 3
        %v1480 = vrot.slane %v1340, 4
        %v1481 = vrot.slane %v1340, 5
        %v1482 = vrot.slane %v1340, 6
        %v1483 = vrot.slane %v1340, 7
        %v1484 = vrot.slane %v1342, 1
        %v1485 = vrot.slane %v1342, 2
        %v1486 = vrot.slane %v1342, 3
        %v1487 = vrot.slane %v1342, 4
        %v1488 = vrot.slane %v1342, 5
        %v1489 = vrot.slane %v1342, 6
        %v1490 = vrot.slane %v1342, 7
        %v1491 = vrot.slane %v1344, 1
        %v1492 = vrot.slane %v1344, 2
        %v1493 = vrot.slane %v1344, 3
        %v1494 = vrot.slane %v1344, 4
        %v1495 = vrot.slane %v1344, 5
        %v1496 = vrot.slane %v1344, 6
        %v1497 = vrot.slane %v1344, 7
        %v1498 = vrot.slane %v1346, 1
        %v1499 = vrot.slane %v1346, 2
        %v1500 = vrot.slane %v1346, 3
        %v1501 = vrot.slane %v1346, 4
        %v1502 = vrot.slane %v1346, 5
        %v1503 = vrot.slane %v1346, 6
        %v1504 = vrot.slane %v1346, 7
        %v1505 = vrot.slane %v1348, 1
        %v1506 = vrot.slane %v1348, 2
        %v1507 = vrot.slane %v1348, 3
        %v1508 = vrot.slane %v1348, 4
        %v1509 = vrot.slane %v1348, 5
        %v1510 = vrot.slane %v1348, 6
        %v1511 = vrot.slane %v1348, 7
        %s1512 = scalar_lea.vmem %s1, 80
        %v1513 = vld [vmem:[%s1512] sm:$0xff]
        %v1514 = vld [vmem:[%s1512 + $0x8] sm:$0xff]
        %v1515 = vld [vmem:[%s1512 + $0x10] sm:$0xff]
        %v1516 = vld [vmem:[%s1512 + $0x18] sm:$0xff]
        %v1517 = vld [vmem:[%s1512 + $0x20] sm:$0xf]
        %1518 = vst [vmem:[#allocation1] ss:$9 sm:$0xff] %v1314
        %s1519 = scalar_lea.vmem [#allocation1], 1
        %1520 = vst [vmem:[%s1519] ss:$9 sm:$0xff] %v1386
        %s1521 = scalar_lea.vmem [#allocation1], 2
        %1522 = vst [vmem:[%s1521] ss:$9 sm:$0xff] %v1387
        %s1523 = scalar_lea.vmem [#allocation1], 3
        %1524 = vst [vmem:[%s1523] ss:$9 sm:$0xff] %v1388
        %s1525 = scalar_lea.vmem [#allocation1], 4
        %1526 = vst [vmem:[%s1525] ss:$9 sm:$0xff] %v1389
        %s1527 = scalar_lea.vmem [#allocation1], 5
        %1528 = vst [vmem:[%s1527] ss:$9 sm:$0xff] %v1390
        %s1529 = scalar_lea.vmem [#allocation1], 6
        %1530 = vst [vmem:[%s1529] ss:$9 sm:$0xff] %v1391
        %s1531 = scalar_lea.vmem [#allocation1], 7
        %1532 = vst [vmem:[%s1531] ss:$9 sm:$0xff] %v1392
        %v1533 = vld [vmem:[#allocation1] sm:$0xff]
        %1534 = vst [vmem:[#allocation1] ss:$9 sm:$0xff] %v1315
        %1535 = vst [vmem:[%s1519] ss:$9 sm:$0xff] %v1316
        %1536 = vst [vmem:[%s1521] ss:$9 sm:$0xff] %v1393
        %1537 = vst [vmem:[%s1523] ss:$9 sm:$0xff] %v1394
        %1538 = vst [vmem:[%s1525] ss:$9 sm:$0xff] %v1395
        %1539 = vst [vmem:[%s1527] ss:$9 sm:$0xff] %v1396
        %1540 = vst [vmem:[%s1529] ss:$9 sm:$0xff] %v1397
        %1541 = vst [vmem:[%s1531] ss:$9 sm:$0xff] %v1398
        %v1542 = vld [vmem:[#allocation1] sm:$0xff]
        %1543 = vst [vmem:[#allocation1] ss:$9 sm:$0xff] %v1399
        %1544 = vst [vmem:[%s1519] ss:$9 sm:$0xff] %v1317
        %1545 = vst [vmem:[%s1521] ss:$9 sm:$0xff] %v1318
        %1546 = vst [vmem:[%s1523] ss:$9 sm:$0xff] %v1400
        %1547 = vst [vmem:[%s1525] ss:$9 sm:$0xff] %v1401
        %1548 = vst [vmem:[%s1527] ss:$9 sm:$0xff] %v1402
        %1549 = vst [vmem:[%s1529] ss:$9 sm:$0xff] %v1403
        %1550 = vst [vmem:[%s1531] ss:$9 sm:$0xff] %v1404
        %v1551 = vld [vmem:[#allocation1] sm:$0xff]
        %1552 = vst [vmem:[#allocation1] ss:$9 sm:$0xff] %v1405
        %1553 = vst [vmem:[%s1519] ss:$9 sm:$0xff] %v1406
        %1554 = vst [vmem:[%s1521] ss:$9 sm:$0xff] %v1319
        %1555 = vst [vmem:[%s1523] ss:$9 sm:$0xff] %v1320
        %1556 = vst [vmem:[%s1525] ss:$9 sm:$0xff] %v1407
        %1557 = vst [vmem:[%s1527] ss:$9 sm:$0xff] %v1408
        %1558 = vst [vmem:[%s1529] ss:$9 sm:$0xff] %v1409
        %1559 = vst [vmem:[%s1531] ss:$9 sm:$0xff] %v1410
        %v1560 = vld [vmem:[#allocation1] sm:$0xff]
        %1561 = vst [vmem:[#allocation1] ss:$9 sm:$0xff] %v1411
        %1562 = vst [vmem:[%s1519] ss:$9 sm:$0xff] %v1412
        %1563 = vst [vmem:[%s1521] ss:$9 sm:$0xff] %v1413
        %1564 = vst [vmem:[%s1523] ss:$9 sm:$0xff] %v1321
        %1565 = vst [vmem:[%s1525] ss:$9 sm:$0xff] %v1322
        %1566 = vst [vmem:[%s1527] ss:$9 sm:$0xff] %v1414
        %1567 = vst [vmem:[%s1529] ss:$9 sm:$0xff] %v1415
        %1568 = vst [vmem:[%s1531] ss:$9 sm:$0xff] %v1416
        %v1569 = vld [vmem:[#allocation1] sm:$0xff]
        %1570 = vst [vmem:[#allocation1] ss:$9 sm:$0xff] %v1417
        %1571 = vst [vmem:[%s1519] ss:$9 sm:$0xff] %v1418
        %1572 = vst [vmem:[%s1521] ss:$9 sm:$0xff] %v1419
        %1573 = vst [vmem:[%s1523] ss:$9 sm:$0xff] %v1420
        %1574 = vst [vmem:[%s1525] ss:$9 sm:$0xff] %v1323
        %1575 = vst [vmem:[%s1527] ss:$9 sm:$0xff] %v1324
        %1576 = vst [vmem:[%s1529] ss:$9 sm:$0xff] %v1421
        %1577 = vst [vmem:[%s1531] ss:$9 sm:$0xff] %v1422
        %v1578 = vld [vmem:[#allocation1] sm:$0xff]
        %1579 = vst [vmem:[#allocation1] ss:$9 sm:$0xff] %v1423
        %1580 = vst [vmem:[%s1519] ss:$9 sm:$0xff] %v1424
        %1581 = vst [vmem:[%s1521] ss:$9 sm:$0xff] %v1425
        %1582 = vst [vmem:[%s1523] ss:$9 sm:$0xff] %v1426
        %1583 = vst [vmem:[%s1525] ss:$9 sm:$0xff] %v1427
        %1584 = vst [vmem:[%s1527] ss:$9 sm:$0xff] %v1325
        %1585 = vst [vmem:[%s1529] ss:$9 sm:$0xff] %v1326
        %1586 = vst [vmem:[%s1531] ss:$9 sm:$0xff] %v1428
        %v1587 = vld [vmem:[#allocation1] sm:$0xff]
        %1588 = vst [vmem:[#allocation1] ss:$9 sm:$0xff] %v1429
        %1589 = vst [vmem:[%s1519] ss:$9 sm:$0xff] %v1430
        %1590 = vst [vmem:[%s1521] ss:$9 sm:$0xff] %v1431
        %1591 = vst [vmem:[%s1523] ss:$9 sm:$0xff] %v1432
        %1592 = vst [vmem:[%s1525] ss:$9 sm:$0xff] %v1433
        %1593 = vst [vmem:[%s1527] ss:$9 sm:$0xff] %v1434
        %1594 = vst [vmem:[%s1529] ss:$9 sm:$0xff] %v1327
        %1595 = vst [vmem:[%s1531] ss:$9 sm:$0xff] %v1328
        %v1596 = vld [vmem:[#allocation1] sm:$0xff]
        %1597 = vst [vmem:[#allocation1] ss:$9 sm:$0xff] %v1435
        %1598 = vst [vmem:[%s1519] ss:$9 sm:$0xff] %v1436
        %1599 = vst [vmem:[%s1521] ss:$9 sm:$0xff] %v1437
        %1600 = vst [vmem:[%s1523] ss:$9 sm:$0xff] %v1438
        %1601 = vst [vmem:[%s1525] ss:$9 sm:$0xff] %v1439
        %1602 = vst [vmem:[%s1527] ss:$9 sm:$0xff] %v1440
        %1603 = vst [vmem:[%s1529] ss:$9 sm:$0xff] %v1441
        %1604 = vst [vmem:[%s1531] ss:$9 sm:$0xff] %v1329
        %v1605 = vld [vmem:[#allocation1] sm:$0xff]
        %1606 = vst [vmem:[#allocation1] ss:$9 sm:$0xff] %v1330
        %1607 = vst [vmem:[%s1519] ss:$9 sm:$0xff] %v1442
        %1608 = vst [vmem:[%s1521] ss:$9 sm:$0xff] %v1443
        %1609 = vst [vmem:[%s1523] ss:$9 sm:$0xff] %v1444
        %1610 = vst [vmem:[%s1525] ss:$9 sm:$0xff] %v1445
        %1611 = vst [vmem:[%s1527] ss:$9 sm:$0xff] %v1446
        %1612 = vst [vmem:[%s1529] ss:$9 sm:$0xff] %v1447
        %1613 = vst [vmem:[%s1531] ss:$9 sm:$0xff] %v1448
        %v1614 = vld [vmem:[#allocation1] sm:$0xff]
        %1615 = vst [vmem:[#allocation1] ss:$9 sm:$0xff] %v1331
        %1616 = vst [vmem:[%s1519] ss:$9 sm:$0xff] %v1332
        %1617 = vst [vmem:[%s1521] ss:$9 sm:$0xff] %v1449
        %1618 = vst [vmem:[%s1523] ss:$9 sm:$0xff] %v1450
        %1619 = vst [vmem:[%s1525] ss:$9 sm:$0xff] %v1451
        %1620 = vst [vmem:[%s1527] ss:$9 sm:$0xff] %v1452
        %1621 = vst [vmem:[%s1529] ss:$9 sm:$0xff] %v1453
        %1622 = vst [vmem:[%s1531] ss:$9 sm:$0xff] %v1454
        %v1623 = vld [vmem:[#allocation1] sm:$0xff]
        %1624 = vst [vmem:[#allocation1] ss:$9 sm:$0xff] %v1455
        %1625 = vst [vmem:[%s1519] ss:$9 sm:$0xff] %v1333
        %1626 = vst [vmem:[%s1521] ss:$9 sm:$0xff] %v1334
        %1627 = vst [vmem:[%s1523] ss:$9 sm:$0xff] %v1456
        %1628 = vst [vmem:[%s1525] ss:$9 sm:$0xff] %v1457
        %1629 = vst [vmem:[%s1527] ss:$9 sm:$0xff] %v1458
        %1630 = vst [vmem:[%s1529] ss:$9 sm:$0xff] %v1459
        %1631 = vst [vmem:[%s1531] ss:$9 sm:$0xff] %v1460
        %v1632 = vld [vmem:[#allocation1] sm:$0xff]
        %1633 = vst [vmem:[#allocation1] ss:$9 sm:$0xff] %v1461
        %1634 = vst [vmem:[%s1519] ss:$9 sm:$0xff] %v1462
        %1635 = vst [vmem:[%s1521] ss:$9 sm:$0xff] %v1335
        %1636 = vst [vmem:[%s1523] ss:$9 sm:$0xff] %v1336
        %1637 = vst [vmem:[%s1525] ss:$9 sm:$0xff] %v1463
        %1638 = vst [vmem:[%s1527] ss:$9 sm:$0xff] %v1464
        %1639 = vst [vmem:[%s1529] ss:$9 sm:$0xff] %v1465
        %1640 = vst [vmem:[%s1531] ss:$9 sm:$0xff] %v1466
        %v1641 = vld [vmem:[#allocation1] sm:$0xff]
        %1642 = vst [vmem:[#allocation1] ss:$9 sm:$0xff] %v1467
        %1643 = vst [vmem:[%s1519] ss:$9 sm:$0xff] %v1468
        %1644 = vst [vmem:[%s1521] ss:$9 sm:$0xff] %v1469
        %1645 = vst [vmem:[%s1523] ss:$9 sm:$0xff] %v1337
        %1646 = vst [vmem:[%s1525] ss:$9 sm:$0xff] %v1338
        %1647 = vst [vmem:[%s1527] ss:$9 sm:$0xff] %v1470
        %1648 = vst [vmem:[%s1529] ss:$9 sm:$0xff] %v1471
        %1649 = vst [vmem:[%s1531] ss:$9 sm:$0xff] %v1472
        %v1650 = vld [vmem:[#allocation1] sm:$0xff]
        %1651 = vst [vmem:[#allocation1] ss:$9 sm:$0xff] %v1473
        %1652 = vst [vmem:[%s1519] ss:$9 sm:$0xff] %v1474
        %1653 = vst [vmem:[%s1521] ss:$9 sm:$0xff] %v1475
        %1654 = vst [vmem:[%s1523] ss:$9 sm:$0xff] %v1476
        %1655 = vst [vmem:[%s1525] ss:$9 sm:$0xff] %v1339
        %1656 = vst [vmem:[%s1527] ss:$9 sm:$0xff] %v1340
        %1657 = vst [vmem:[%s1529] ss:$9 sm:$0xff] %v1477
        %1658 = vst [vmem:[%s1531] ss:$9 sm:$0xff] %v1478
        %v1659 = vld [vmem:[#allocation1] sm:$0xff]
        %1660 = vst [vmem:[#allocation1] ss:$9 sm:$0xff] %v1479
        %1661 = vst [vmem:[%s1519] ss:$9 sm:$0xff] %v1480
        %1662 = vst [vmem:[%s1521] ss:$9 sm:$0xff] %v1481
        %1663 = vst [vmem:[%s1523] ss:$9 sm:$0xff] %v1482
        %1664 = vst [vmem:[%s1525] ss:$9 sm:$0xff] %v1483
        %1665 = vst [vmem:[%s1527] ss:$9 sm:$0xff] %v1341
        %1666 = vst [vmem:[%s1529] ss:$9 sm:$0xff] %v1342
        %1667 = vst [vmem:[%s1531] ss:$9 sm:$0xff] %v1484
        %v1668 = vld [vmem:[#allocation1] sm:$0xff]
        %1669 = vst [vmem:[#allocation1] ss:$9 sm:$0xff] %v1485
        %1670 = vst [vmem:[%s1519] ss:$9 sm:$0xff] %v1486
        %1671 = vst [vmem:[%s1521] ss:$9 sm:$0xff] %v1487
        %1672 = vst [vmem:[%s1523] ss:$9 sm:$0xff] %v1488
        %1673 = vst [vmem:[%s1525] ss:$9 sm:$0xff] %v1489
        %1674 = vst [vmem:[%s1527] ss:$9 sm:$0xff] %v1490
        %1675 = vst [vmem:[%s1529] ss:$9 sm:$0xff] %v1343
        %1676 = vst [vmem:[%s1531] ss:$9 sm:$0xff] %v1344
        %v1677 = vld [vmem:[#allocation1] sm:$0xff]
        %1678 = vst [vmem:[#allocation1] ss:$9 sm:$0xff] %v1491
        %1679 = vst [vmem:[%s1519] ss:$9 sm:$0xff] %v1492
        %1680 = vst [vmem:[%s1521] ss:$9 sm:$0xff] %v1493
        %1681 = vst [vmem:[%s1523] ss:$9 sm:$0xff] %v1494
        %1682 = vst [vmem:[%s1525] ss:$9 sm:$0xff] %v1495
        %1683 = vst [vmem:[%s1527] ss:$9 sm:$0xff] %v1496
        %1684 = vst [vmem:[%s1529] ss:$9 sm:$0xff] %v1497
        %1685 = vst [vmem:[%s1531] ss:$9 sm:$0xff] %v1345
        %v1686 = vld [vmem:[#allocation1] sm:$0xff]
        %1687 = vst [vmem:[#allocation1] ss:$9 sm:$0xff] %v1346
        %1688 = vst [vmem:[%s1519] ss:$9 sm:$0xff] %v1498
        %1689 = vst [vmem:[%s1521] ss:$9 sm:$0xff] %v1499
        %1690 = vst [vmem:[%s1523] ss:$9 sm:$0xff] %v1500
        %1691 = vst [vmem:[%s1525] ss:$9 sm:$0xff] %v1501
        %1692 = vst [vmem:[%s1527] ss:$9 sm:$0xff] %v1502
        %1693 = vst [vmem:[%s1529] ss:$9 sm:$0xff] %v1503
        %1694 = vst [vmem:[%s1531] ss:$9 sm:$0xff] %v1504
        %v1695 = vld [vmem:[#allocation1] sm:$0xff]
        %1696 = vst [vmem:[#allocation1] ss:$9 sm:$0xff] %v1347
        %1697 = vst [vmem:[%s1519] ss:$9 sm:$0xff] %v1348
        %1698 = vst [vmem:[%s1521] ss:$9 sm:$0xff] %v1505
        %1699 = vst [vmem:[%s1523] ss:$9 sm:$0xff] %v1506
        %1700 = vst [vmem:[%s1525] ss:$9 sm:$0xff] %v1507
        %1701 = vst [vmem:[%s1527] ss:$9 sm:$0xff] %v1508
        %1702 = vst [vmem:[%s1529] ss:$9 sm:$0xff] %v1509
        %1703 = vst [vmem:[%s1531] ss:$9 sm:$0xff] %v1510
        %v1704 = vld [vmem:[#allocation1] sm:$0xff]
        %1705 = vst [vmem:[#allocation1] ss:$9 sm:$0xff] %v1511
        %1706 = vst [vmem:[%s1519] ss:$9 sm:$0xff] %v1349
        %v1707 = vld [vmem:[#allocation1] sm:$0xff]
        %v1708 = vsel %vm191, %v1533, 0
        %v1710 = vsel %vm191, %v1542, 0
        %v1712 = vsel %vm191, %v1551, 0
        %v1714 = vsel %vm191, %v1560, 0
        %v1716 = vsel %vm191, %v1569, 0
        %v1718 = vsel %vm191, %v1578, 0
        %v1720 = vsel %vm191, %v1587, 0
        %v1722 = vsel %vm191, %v1596, 0
        %v1724 = vsel %vm191, %v1605, 0
        %v1726 = vsel %vm191, %v1614, 0
        %v1728 = vsel %vm191, %v1623, 0
        %v1730 = vsel %vm191, %v1632, 0
        %v1732 = vsel %vm191, %v1641, 0
        %v1734 = vsel %vm191, %v1650, 0
        %v1736 = vsel %vm191, %v1659, 0
        %v1738 = vsel %vm191, %v1668, 0
        %v1740 = vsel %vm191, %v1677, 0
        %v1742 = vsel %vm191, %v1686, 0
        %v1744 = vsel %vm191, %v1695, 0
        %v1746 = vsel %vm191, %v1704, 0
        %v1748 = vsel %vm191, %v1707, 0
        %v1751 = vsel %vm915, %v1517, 0
        %1753 = vmatpush.msra.mxu0 0.0
        %1754 = vmatpush.msra.mxu0 0.0
        %1755 = vmatpush.msra.mxu0 0.0
        %1756 = vmatpush.msra.mxu0 0.0
        %1757 = vmatpush.msra.mxu0 0.0
        %1758 = vmatpush.msra.mxu0 0.0
        %1759 = vmatpush.msra.mxu0 0.0
        %1760 = vmatpush.msra.mxu0 0.0
        %1761 = vmatpush.msra.mxu0 0.0
        %1762 = vmatpush.msra.mxu0 0.0
        %1763 = vmatpush.msra.mxu0 0.0
        %1764 = vmatpush.msra.mxu0 %v1751
        %1765 = vmatpush.msra.mxu0 %v1516
        %1766 = vmatpush.msra.mxu0 %v1515
        %1767 = vmatpush.msra.mxu0 %v1514
        %1768 = vmatpush.msra.mxu0 %v1513
        %1769 = vmatmul.f32.gmra.mxu0 %v1708
        %v1770 = vpop.f32.mrf.mxu0
        %v1771 = vadd.f32 0.0, %v1770
        %1772 = vmatmul.f32.gmra.mxu0 %v1710
        %v1773 = vpop.f32.mrf.mxu0
        %v1774 = vadd.f32 0.0, %v1773
        %1775 = vmatmul.f32.gmra.mxu0 %v1712
        %v1776 = vpop.f32.mrf.mxu0
        %v1777 = vadd.f32 0.0, %v1776
        %1778 = vmatmul.f32.gmra.mxu0 %v1714
        %v1779 = vpop.f32.mrf.mxu0
        %v1780 = vadd.f32 0.0, %v1779
        %1781 = vmatmul.f32.gmra.mxu0 %v1716
        %v1782 = vpop.f32.mrf.mxu0
        %v1783 = vadd.f32 0.0, %v1782
        %1784 = vmatmul.f32.gmra.mxu0 %v1718
        %v1785 = vpop.f32.mrf.mxu0
        %v1786 = vadd.f32 0.0, %v1785
        %1787 = vmatmul.f32.gmra.mxu0 %v1720
        %v1788 = vpop.f32.mrf.mxu0
        %v1789 = vadd.f32 0.0, %v1788
        %1790 = vmatmul.f32.gmra.mxu0 %v1722
        %v1791 = vpop.f32.mrf.mxu0
        %v1792 = vadd.f32 0.0, %v1791
        %1793 = vmatmul.f32.gmra.mxu0 %v1724
        %v1794 = vpop.f32.mrf.mxu0
        %v1795 = vadd.f32 0.0, %v1794
        %1796 = vmatmul.f32.gmra.mxu0 %v1726
        %v1797 = vpop.f32.mrf.mxu0
        %v1798 = vadd.f32 0.0, %v1797
        %1799 = vmatmul.f32.gmra.mxu0 %v1728
        %v1800 = vpop.f32.mrf.mxu0
        %v1801 = vadd.f32 0.0, %v1800
        %1802 = vmatmul.f32.gmra.mxu0 %v1730
        %v1803 = vpop.f32.mrf.mxu0
        %v1804 = vadd.f32 0.0, %v1803
        %1805 = vmatmul.f32.gmra.mxu0 %v1732
        %v1806 = vpop.f32.mrf.mxu0
        %v1807 = vadd.f32 0.0, %v1806
        %1808 = vmatmul.f32.gmra.mxu0 %v1734
        %v1809 = vpop.f32.mrf.mxu0
        %v1810 = vadd.f32 0.0, %v1809
        %1811 = vmatmul.f32.gmra.mxu0 %v1736
        %v1812 = vpop.f32.mrf.mxu0
        %v1813 = vadd.f32 0.0, %v1812
        %1814 = vmatmul.f32.gmra.mxu0 %v1738
        %v1815 = vpop.f32.mrf.mxu0
        %v1816 = vadd.f32 0.0, %v1815
        %1817 = vmatmul.f32.gmra.mxu0 %v1740
        %v1818 = vpop.f32.mrf.mxu0
        %v1819 = vadd.f32 0.0, %v1818
        %1820 = vmatmul.f32.gmra.mxu0 %v1742
        %v1821 = vpop.f32.mrf.mxu0
        %v1822 = vadd.f32 0.0, %v1821
        %1823 = vmatmul.f32.gmra.mxu0 %v1744
        %v1824 = vpop.f32.mrf.mxu0
        %v1825 = vadd.f32 0.0, %v1824
        %1826 = vmatmul.f32.gmra.mxu0 %v1746
        %v1827 = vpop.f32.mrf.mxu0
        %v1828 = vadd.f32 0.0, %v1827
        %1829 = vmatmul.f32.gmra.mxu0 %v1748
        %v1830 = vpop.f32.mrf.mxu0
        %v1831 = vadd.f32 0.0, %v1830
        %1832 = vdwg.mxu0
        %v1833 = vadd.f32 %v1252, %v1771
        %v1834 = vadd.f32 %v1255, %v1774
        %v1835 = vadd.f32 %v1258, %v1777
        %v1836 = vadd.f32 %v1261, %v1780
        %v1837 = vadd.f32 %v1264, %v1783
        %v1838 = vadd.f32 %v1267, %v1786
        %v1839 = vadd.f32 %v1270, %v1789
        %v1840 = vadd.f32 %v1273, %v1792
        %v1841 = vadd.f32 %v1276, %v1795
        %v1842 = vadd.f32 %v1279, %v1798
        %v1843 = vadd.f32 %v1282, %v1801
        %v1844 = vadd.f32 %v1285, %v1804
        %v1845 = vadd.f32 %v1288, %v1807
        %v1846 = vadd.f32 %v1291, %v1810
        %v1847 = vadd.f32 %v1294, %v1813
        %v1848 = vadd.f32 %v1297, %v1816
        %v1849 = vadd.f32 %v1300, %v1819
        %v1850 = vadd.f32 %v1303, %v1822
        %v1851 = vadd.f32 %v1306, %v1825
        %v1852 = vadd.f32 %v1309, %v1828
        %v1853 = vadd.f32 %v1312, %v1831
        %v1854 = vld [vmem:[%s259 + $0x1] sm:$0xff]
        %v1855 = vld [vmem:[%s259 + $0x9] sm:$0x1]
        %v1856 = vld [vmem:[%s259 + $0x11] sm:$0xff]
        %v1857 = vld [vmem:[%s259 + $0x19] sm:$0x1]
        %v1858 = vld [vmem:[%s259 + $0x21] sm:$0xff]
        %v1859 = vld [vmem:[%s259 + $0x29] sm:$0x1]
        %v1860 = vld [vmem:[%s259 + $0x31] sm:$0xff]
        %v1861 = vld [vmem:[%s259 + $0x39] sm:$0x1]
        %v1862 = vld [vmem:[%s259 + $0x41] sm:$0xff]
        %v1863 = vld [vmem:[%s259 + $0x49] sm:$0x1]
        %v1864 = vld [vmem:[%s259 + $0x51] sm:$0xff]
        %v1865 = vld [vmem:[%s259 + $0x59] sm:$0x1]
        %v1866 = vld [vmem:[%s259 + $0x61] sm:$0xff]
        %v1867 = vld [vmem:[%s259 + $0x69] sm:$0x1]
        %v1868 = vld [vmem:[%s259 + $0x71] sm:$0xff]
        %v1869 = vld [vmem:[%s259 + $0x79] sm:$0x1]
        %v1870 = vld [vmem:[%s259 + $0x81] sm:$0xff]
        %v1871 = vld [vmem:[%s259 + $0x89] sm:$0x1]
        %v1872 = vld [vmem:[%s259 + $0xa1] sm:$0xff]
        %v1873 = vld [vmem:[%s259 + $0xa9] sm:$0x1]
        %v1874 = vld [vmem:[%s259 + $0xb1] sm:$0xff]
        %v1875 = vld [vmem:[%s259 + $0xb9] sm:$0x1]
        %v1876 = vld [vmem:[%s259 + $0xc1] sm:$0xff]
        %v1877 = vld [vmem:[%s259 + $0xc9] sm:$0x1]
        %v1878 = vld [vmem:[%s259 + $0xd1] sm:$0xff]
        %v1879 = vld [vmem:[%s259 + $0xd9] sm:$0x1]
        %v1880 = vld [vmem:[%s259 + $0xe1] sm:$0xff]
        %v1881 = vld [vmem:[%s259 + $0xe9] sm:$0x1]
        %v1882 = vld [vmem:[%s259 + $0xf1] sm:$0xff]
        %v1883 = vld [vmem:[%s259 + $0xf9] sm:$0x1]
        %v1884 = vld [vmem:[%s259 + $0x101] sm:$0xff]
        %v1885 = vld [vmem:[%s259 + $0x109] sm:$0x1]
        %v1886 = vld [vmem:[%s259 + $0x111] sm:$0xff]
        %v1887 = vld [vmem:[%s259 + $0x119] sm:$0x1]
        %v1888 = vld [vmem:[%s259 + $0x121] sm:$0xff]
        %v1889 = vld [vmem:[%s259 + $0x129] sm:$0x1]
        %v1926 = vrot.slane %v1854, 1
        %v1927 = vrot.slane %v1854, 2
        %v1928 = vrot.slane %v1854, 3
        %v1929 = vrot.slane %v1854, 4
        %v1930 = vrot.slane %v1854, 5
        %v1931 = vrot.slane %v1854, 6
        %v1932 = vrot.slane %v1854, 7
        %v1933 = vrot.slane %v1856, 1
        %v1934 = vrot.slane %v1856, 2
        %v1935 = vrot.slane %v1856, 3
        %v1936 = vrot.slane %v1856, 4
        %v1937 = vrot.slane %v1856, 5
        %v1938 = vrot.slane %v1856, 6
        %v1939 = vrot.slane %v1856, 7
        %v1940 = vrot.slane %v1858, 1
        %v1941 = vrot.slane %v1858, 2
        %v1942 = vrot.slane %v1858, 3
        %v1943 = vrot.slane %v1858, 4
        %v1944 = vrot.slane %v1858, 5
        %v1945 = vrot.slane %v1858, 6
        %v1946 = vrot.slane %v1858, 7
        %v1947 = vrot.slane %v1860, 1
        %v1948 = vrot.slane %v1860, 2
        %v1949 = vrot.slane %v1860, 3
        %v1950 = vrot.slane %v1860, 4
        %v1951 = vrot.slane %v1860, 5
        %v1952 = vrot.slane %v1860, 6
        %v1953 = vrot.slane %v1860, 7
        %v1954 = vrot.slane %v1862, 1
        %v1955 = vrot.slane %v1862, 2
        %v1956 = vrot.slane %v1862, 3
        %v1957 = vrot.slane %v1862, 4
        %v1958 = vrot.slane %v1862, 5
        %v1959 = vrot.slane %v1862, 6
        %v1960 = vrot.slane %v1862, 7
        %v1961 = vrot.slane %v1864, 1
        %v1962 = vrot.slane %v1864, 2
        %v1963 = vrot.slane %v1864, 3
        %v1964 = vrot.slane %v1864, 4
        %v1965 = vrot.slane %v1864, 5
        %v1966 = vrot.slane %v1864, 6
        %v1967 = vrot.slane %v1864, 7
        %v1968 = vrot.slane %v1866, 1
        %v1969 = vrot.slane %v1866, 2
        %v1970 = vrot.slane %v1866, 3
        %v1971 = vrot.slane %v1866, 4
        %v1972 = vrot.slane %v1866, 5
        %v1973 = vrot.slane %v1866, 6
        %v1974 = vrot.slane %v1866, 7
        %v1975 = vrot.slane %v1868, 1
        %v1976 = vrot.slane %v1868, 2
        %v1977 = vrot.slane %v1868, 3
        %v1978 = vrot.slane %v1868, 4
        %v1979 = vrot.slane %v1868, 5
        %v1980 = vrot.slane %v1868, 6
        %v1981 = vrot.slane %v1868, 7
        %v1982 = vrot.slane %v1870, 1
        %v1983 = vrot.slane %v1870, 2
        %v1984 = vrot.slane %v1870, 3
        %v1985 = vrot.slane %v1870, 4
        %v1986 = vrot.slane %v1870, 5
        %v1987 = vrot.slane %v1870, 6
        %v1988 = vrot.slane %v1870, 7
        %v1989 = vrot.slane %v1872, 1
        %v1990 = vrot.slane %v1872, 2
        %v1991 = vrot.slane %v1872, 3
        %v1992 = vrot.slane %v1872, 4
        %v1993 = vrot.slane %v1872, 5
        %v1994 = vrot.slane %v1872, 6
        %v1995 = vrot.slane %v1872, 7
        %v1996 = vrot.slane %v1874, 1
        %v1997 = vrot.slane %v1874, 2
        %v1998 = vrot.slane %v1874, 3
        %v1999 = vrot.slane %v1874, 4
        %v2000 = vrot.slane %v1874, 5
        %v2001 = vrot.slane %v1874, 6
        %v2002 = vrot.slane %v1874, 7
        %v2003 = vrot.slane %v1876, 1
        %v2004 = vrot.slane %v1876, 2
        %v2005 = vrot.slane %v1876, 3
        %v2006 = vrot.slane %v1876, 4
        %v2007 = vrot.slane %v1876, 5
        %v2008 = vrot.slane %v1876, 6
        %v2009 = vrot.slane %v1876, 7
        %v2010 = vrot.slane %v1878, 1
        %v2011 = vrot.slane %v1878, 2
        %v2012 = vrot.slane %v1878, 3
        %v2013 = vrot.slane %v1878, 4
        %v2014 = vrot.slane %v1878, 5
        %v2015 = vrot.slane %v1878, 6
        %v2016 = vrot.slane %v1878, 7
        %v2017 = vrot.slane %v1880, 1
        %v2018 = vrot.slane %v1880, 2
        %v2019 = vrot.slane %v1880, 3
        %v2020 = vrot.slane %v1880, 4
        %v2021 = vrot.slane %v1880, 5
        %v2022 = vrot.slane %v1880, 6
        %v2023 = vrot.slane %v1880, 7
        %v2024 = vrot.slane %v1882, 1
        %v2025 = vrot.slane %v1882, 2
        %v2026 = vrot.slane %v1882, 3
        %v2027 = vrot.slane %v1882, 4
        %v2028 = vrot.slane %v1882, 5
        %v2029 = vrot.slane %v1882, 6
        %v2030 = vrot.slane %v1882, 7
        %v2031 = vrot.slane %v1884, 1
        %v2032 = vrot.slane %v1884, 2
        %v2033 = vrot.slane %v1884, 3
        %v2034 = vrot.slane %v1884, 4
        %v2035 = vrot.slane %v1884, 5
        %v2036 = vrot.slane %v1884, 6
        %v2037 = vrot.slane %v1884, 7
        %v2038 = vrot.slane %v1886, 1
        %v2039 = vrot.slane %v1886, 2
        %v2040 = vrot.slane %v1886, 3
        %v2041 = vrot.slane %v1886, 4
        %v2042 = vrot.slane %v1886, 5
        %v2043 = vrot.slane %v1886, 6
        %v2044 = vrot.slane %v1886, 7
        %v2045 = vrot.slane %v1888, 1
        %v2046 = vrot.slane %v1888, 2
        %v2047 = vrot.slane %v1888, 3
        %v2048 = vrot.slane %v1888, 4
        %v2049 = vrot.slane %v1888, 5
        %v2050 = vrot.slane %v1888, 6
        %v2051 = vrot.slane %v1888, 7
        %s2052 = scalar_lea.vmem %s1, 120
        %v2053 = vld [vmem:[%s2052] sm:$0xff]
        %v2054 = vld [vmem:[%s2052 + $0x8] sm:$0xff]
        %v2055 = vld [vmem:[%s2052 + $0x10] sm:$0xff]
        %v2056 = vld [vmem:[%s2052 + $0x18] sm:$0xff]
        %v2057 = vld [vmem:[%s2052 + $0x20] sm:$0xf]
        %2058 = vst [vmem:[#allocation1] ss:$9 sm:$0xff] %v1854
        %s2059 = scalar_lea.vmem [#allocation1], 1
        %2060 = vst [vmem:[%s2059] ss:$9 sm:$0xff] %v1926
        %s2061 = scalar_lea.vmem [#allocation1], 2
        %2062 = vst [vmem:[%s2061] ss:$9 sm:$0xff] %v1927
        %s2063 = scalar_lea.vmem [#allocation1], 3
        %2064 = vst [vmem:[%s2063] ss:$9 sm:$0xff] %v1928
        %s2065 = scalar_lea.vmem [#allocation1], 4
        %2066 = vst [vmem:[%s2065] ss:$9 sm:$0xff] %v1929
        %s2067 = scalar_lea.vmem [#allocation1], 5
        %2068 = vst [vmem:[%s2067] ss:$9 sm:$0xff] %v1930
        %s2069 = scalar_lea.vmem [#allocation1], 6
        %2070 = vst [vmem:[%s2069] ss:$9 sm:$0xff] %v1931
        %s2071 = scalar_lea.vmem [#allocation1], 7
        %2072 = vst [vmem:[%s2071] ss:$9 sm:$0xff] %v1932
        %v2073 = vld [vmem:[#allocation1] sm:$0xff]
        %2074 = vst [vmem:[#allocation1] ss:$9 sm:$0xff] %v1855
        %2075 = vst [vmem:[%s2059] ss:$9 sm:$0xff] %v1856
        %2076 = vst [vmem:[%s2061] ss:$9 sm:$0xff] %v1933
        %2077 = vst [vmem:[%s2063] ss:$9 sm:$0xff] %v1934
        %2078 = vst [vmem:[%s2065] ss:$9 sm:$0xff] %v1935
        %2079 = vst [vmem:[%s2067] ss:$9 sm:$0xff] %v1936
        %2080 = vst [vmem:[%s2069] ss:$9 sm:$0xff] %v1937
        %2081 = vst [vmem:[%s2071] ss:$9 sm:$0xff] %v1938
        %v2082 = vld [vmem:[#allocation1] sm:$0xff]
        %2083 = vst [vmem:[#allocation1] ss:$9 sm:$0xff] %v1939
        %2084 = vst [vmem:[%s2059] ss:$9 sm:$0xff] %v1857
        %2085 = vst [vmem:[%s2061] ss:$9 sm:$0xff] %v1858
        %2086 = vst [vmem:[%s2063] ss:$9 sm:$0xff] %v1940
        %2087 = vst [vmem:[%s2065] ss:$9 sm:$0xff] %v1941
        %2088 = vst [vmem:[%s2067] ss:$9 sm:$0xff] %v1942
        %2089 = vst [vmem:[%s2069] ss:$9 sm:$0xff] %v1943
        %2090 = vst [vmem:[%s2071] ss:$9 sm:$0xff] %v1944
        %v2091 = vld [vmem:[#allocation1] sm:$0xff]
        %2092 = vst [vmem:[#allocation1] ss:$9 sm:$0xff] %v1945
        %2093 = vst [vmem:[%s2059] ss:$9 sm:$0xff] %v1946
        %2094 = vst [vmem:[%s2061] ss:$9 sm:$0xff] %v1859
        %2095 = vst [vmem:[%s2063] ss:$9 sm:$0xff] %v1860
        %2096 = vst [vmem:[%s2065] ss:$9 sm:$0xff] %v1947
        %2097 = vst [vmem:[%s2067] ss:$9 sm:$0xff] %v1948
        %2098 = vst [vmem:[%s2069] ss:$9 sm:$0xff] %v1949
        %2099 = vst [vmem:[%s2071] ss:$9 sm:$0xff] %v1950
        %v2100 = vld [vmem:[#allocation1] sm:$0xff]
        %2101 = vst [vmem:[#allocation1] ss:$9 sm:$0xff] %v1951
        %2102 = vst [vmem:[%s2059] ss:$9 sm:$0xff] %v1952
        %2103 = vst [vmem:[%s2061] ss:$9 sm:$0xff] %v1953
        %2104 = vst [vmem:[%s2063] ss:$9 sm:$0xff] %v1861
        %2105 = vst [vmem:[%s2065] ss:$9 sm:$0xff] %v1862
        %2106 = vst [vmem:[%s2067] ss:$9 sm:$0xff] %v1954
        %2107 = vst [vmem:[%s2069] ss:$9 sm:$0xff] %v1955
        %2108 = vst [vmem:[%s2071] ss:$9 sm:$0xff] %v1956
        %v2109 = vld [vmem:[#allocation1] sm:$0xff]
        %2110 = vst [vmem:[#allocation1] ss:$9 sm:$0xff] %v1957
        %2111 = vst [vmem:[%s2059] ss:$9 sm:$0xff] %v1958
        %2112 = vst [vmem:[%s2061] ss:$9 sm:$0xff] %v1959
        %2113 = vst [vmem:[%s2063] ss:$9 sm:$0xff] %v1960
        %2114 = vst [vmem:[%s2065] ss:$9 sm:$0xff] %v1863
        %2115 = vst [vmem:[%s2067] ss:$9 sm:$0xff] %v1864
        %2116 = vst [vmem:[%s2069] ss:$9 sm:$0xff] %v1961
        %2117 = vst [vmem:[%s2071] ss:$9 sm:$0xff] %v1962
        %v2118 = vld [vmem:[#allocation1] sm:$0xff]
        %2119 = vst [vmem:[#allocation1] ss:$9 sm:$0xff] %v1963
        %2120 = vst [vmem:[%s2059] ss:$9 sm:$0xff] %v1964
        %2121 = vst [vmem:[%s2061] ss:$9 sm:$0xff] %v1965
        %2122 = vst [vmem:[%s2063] ss:$9 sm:$0xff] %v1966
        %2123 = vst [vmem:[%s2065] ss:$9 sm:$0xff] %v1967
        %2124 = vst [vmem:[%s2067] ss:$9 sm:$0xff] %v1865
        %2125 = vst [vmem:[%s2069] ss:$9 sm:$0xff] %v1866
        %2126 = vst [vmem:[%s2071] ss:$9 sm:$0xff] %v1968
        %v2127 = vld [vmem:[#allocation1] sm:$0xff]
        %2128 = vst [vmem:[#allocation1] ss:$9 sm:$0xff] %v1969
        %2129 = vst [vmem:[%s2059] ss:$9 sm:$0xff] %v1970
        %2130 = vst [vmem:[%s2061] ss:$9 sm:$0xff] %v1971
        %2131 = vst [vmem:[%s2063] ss:$9 sm:$0xff] %v1972
        %2132 = vst [vmem:[%s2065] ss:$9 sm:$0xff] %v1973
        %2133 = vst [vmem:[%s2067] ss:$9 sm:$0xff] %v1974
        %2134 = vst [vmem:[%s2069] ss:$9 sm:$0xff] %v1867
        %2135 = vst [vmem:[%s2071] ss:$9 sm:$0xff] %v1868
        %v2136 = vld [vmem:[#allocation1] sm:$0xff]
        %2137 = vst [vmem:[#allocation1] ss:$9 sm:$0xff] %v1975
        %2138 = vst [vmem:[%s2059] ss:$9 sm:$0xff] %v1976
        %2139 = vst [vmem:[%s2061] ss:$9 sm:$0xff] %v1977
        %2140 = vst [vmem:[%s2063] ss:$9 sm:$0xff] %v1978
        %2141 = vst [vmem:[%s2065] ss:$9 sm:$0xff] %v1979
        %2142 = vst [vmem:[%s2067] ss:$9 sm:$0xff] %v1980
        %2143 = vst [vmem:[%s2069] ss:$9 sm:$0xff] %v1981
        %2144 = vst [vmem:[%s2071] ss:$9 sm:$0xff] %v1869
        %v2145 = vld [vmem:[#allocation1] sm:$0xff]
        %2146 = vst [vmem:[#allocation1] ss:$9 sm:$0xff] %v1870
        %2147 = vst [vmem:[%s2059] ss:$9 sm:$0xff] %v1982
        %2148 = vst [vmem:[%s2061] ss:$9 sm:$0xff] %v1983
        %2149 = vst [vmem:[%s2063] ss:$9 sm:$0xff] %v1984
        %2150 = vst [vmem:[%s2065] ss:$9 sm:$0xff] %v1985
        %2151 = vst [vmem:[%s2067] ss:$9 sm:$0xff] %v1986
        %2152 = vst [vmem:[%s2069] ss:$9 sm:$0xff] %v1987
        %2153 = vst [vmem:[%s2071] ss:$9 sm:$0xff] %v1988
        %v2154 = vld [vmem:[#allocation1] sm:$0xff]
        %2155 = vst [vmem:[#allocation1] ss:$9 sm:$0xff] %v1871
        %2156 = vst [vmem:[%s2059] ss:$9 sm:$0xff] %v1872
        %2157 = vst [vmem:[%s2061] ss:$9 sm:$0xff] %v1989
        %2158 = vst [vmem:[%s2063] ss:$9 sm:$0xff] %v1990
        %2159 = vst [vmem:[%s2065] ss:$9 sm:$0xff] %v1991
        %2160 = vst [vmem:[%s2067] ss:$9 sm:$0xff] %v1992
        %2161 = vst [vmem:[%s2069] ss:$9 sm:$0xff] %v1993
        %2162 = vst [vmem:[%s2071] ss:$9 sm:$0xff] %v1994
        %v2163 = vld [vmem:[#allocation1] sm:$0xff]
        %2164 = vst [vmem:[#allocation1] ss:$9 sm:$0xff] %v1995
        %2165 = vst [vmem:[%s2059] ss:$9 sm:$0xff] %v1873
        %2166 = vst [vmem:[%s2061] ss:$9 sm:$0xff] %v1874
        %2167 = vst [vmem:[%s2063] ss:$9 sm:$0xff] %v1996
        %2168 = vst [vmem:[%s2065] ss:$9 sm:$0xff] %v1997
        %2169 = vst [vmem:[%s2067] ss:$9 sm:$0xff] %v1998
        %2170 = vst [vmem:[%s2069] ss:$9 sm:$0xff] %v1999
        %2171 = vst [vmem:[%s2071] ss:$9 sm:$0xff] %v2000
        %v2172 = vld [vmem:[#allocation1] sm:$0xff]
        %2173 = vst [vmem:[#allocation1] ss:$9 sm:$0xff] %v2001
        %2174 = vst [vmem:[%s2059] ss:$9 sm:$0xff] %v2002
        %2175 = vst [vmem:[%s2061] ss:$9 sm:$0xff] %v1875
        %2176 = vst [vmem:[%s2063] ss:$9 sm:$0xff] %v1876
        %2177 = vst [vmem:[%s2065] ss:$9 sm:$0xff] %v2003
        %2178 = vst [vmem:[%s2067] ss:$9 sm:$0xff] %v2004
        %2179 = vst [vmem:[%s2069] ss:$9 sm:$0xff] %v2005
        %2180 = vst [vmem:[%s2071] ss:$9 sm:$0xff] %v2006
        %v2181 = vld [vmem:[#allocation1] sm:$0xff]
        %2182 = vst [vmem:[#allocation1] ss:$9 sm:$0xff] %v2007
        %2183 = vst [vmem:[%s2059] ss:$9 sm:$0xff] %v2008
        %2184 = vst [vmem:[%s2061] ss:$9 sm:$0xff] %v2009
        %2185 = vst [vmem:[%s2063] ss:$9 sm:$0xff] %v1877
        %2186 = vst [vmem:[%s2065] ss:$9 sm:$0xff] %v1878
        %2187 = vst [vmem:[%s2067] ss:$9 sm:$0xff] %v2010
        %2188 = vst [vmem:[%s2069] ss:$9 sm:$0xff] %v2011
        %2189 = vst [vmem:[%s2071] ss:$9 sm:$0xff] %v2012
        %v2190 = vld [vmem:[#allocation1] sm:$0xff]
        %2191 = vst [vmem:[#allocation1] ss:$9 sm:$0xff] %v2013
        %2192 = vst [vmem:[%s2059] ss:$9 sm:$0xff] %v2014
        %2193 = vst [vmem:[%s2061] ss:$9 sm:$0xff] %v2015
        %2194 = vst [vmem:[%s2063] ss:$9 sm:$0xff] %v2016
        %2195 = vst [vmem:[%s2065] ss:$9 sm:$0xff] %v1879
        %2196 = vst [vmem:[%s2067] ss:$9 sm:$0xff] %v1880
        %2197 = vst [vmem:[%s2069] ss:$9 sm:$0xff] %v2017
        %2198 = vst [vmem:[%s2071] ss:$9 sm:$0xff] %v2018
        %v2199 = vld [vmem:[#allocation1] sm:$0xff]
        %2200 = vst [vmem:[#allocation1] ss:$9 sm:$0xff] %v2019
        %2201 = vst [vmem:[%s2059] ss:$9 sm:$0xff] %v2020
        %2202 = vst [vmem:[%s2061] ss:$9 sm:$0xff] %v2021
        %2203 = vst [vmem:[%s2063] ss:$9 sm:$0xff] %v2022
        %2204 = vst [vmem:[%s2065] ss:$9 sm:$0xff] %v2023
        %2205 = vst [vmem:[%s2067] ss:$9 sm:$0xff] %v1881
        %2206 = vst [vmem:[%s2069] ss:$9 sm:$0xff] %v1882
        %2207 = vst [vmem:[%s2071] ss:$9 sm:$0xff] %v2024
        %v2208 = vld [vmem:[#allocation1] sm:$0xff]
        %2209 = vst [vmem:[#allocation1] ss:$9 sm:$0xff] %v2025
        %2210 = vst [vmem:[%s2059] ss:$9 sm:$0xff] %v2026
        %2211 = vst [vmem:[%s2061] ss:$9 sm:$0xff] %v2027
        %2212 = vst [vmem:[%s2063] ss:$9 sm:$0xff] %v2028
        %2213 = vst [vmem:[%s2065] ss:$9 sm:$0xff] %v2029
        %2214 = vst [vmem:[%s2067] ss:$9 sm:$0xff] %v2030
        %2215 = vst [vmem:[%s2069] ss:$9 sm:$0xff] %v1883
        %2216 = vst [vmem:[%s2071] ss:$9 sm:$0xff] %v1884
        %v2217 = vld [vmem:[#allocation1] sm:$0xff]
        %2218 = vst [vmem:[#allocation1] ss:$9 sm:$0xff] %v2031
        %2219 = vst [vmem:[%s2059] ss:$9 sm:$0xff] %v2032
        %2220 = vst [vmem:[%s2061] ss:$9 sm:$0xff] %v2033
        %2221 = vst [vmem:[%s2063] ss:$9 sm:$0xff] %v2034
        %2222 = vst [vmem:[%s2065] ss:$9 sm:$0xff] %v2035
        %2223 = vst [vmem:[%s2067] ss:$9 sm:$0xff] %v2036
        %2224 = vst [vmem:[%s2069] ss:$9 sm:$0xff] %v2037
        %2225 = vst [vmem:[%s2071] ss:$9 sm:$0xff] %v1885
        %v2226 = vld [vmem:[#allocation1] sm:$0xff]
        %2227 = vst [vmem:[#allocation1] ss:$9 sm:$0xff] %v1886
        %2228 = vst [vmem:[%s2059] ss:$9 sm:$0xff] %v2038
        %2229 = vst [vmem:[%s2061] ss:$9 sm:$0xff] %v2039
        %2230 = vst [vmem:[%s2063] ss:$9 sm:$0xff] %v2040
        %2231 = vst [vmem:[%s2065] ss:$9 sm:$0xff] %v2041
        %2232 = vst [vmem:[%s2067] ss:$9 sm:$0xff] %v2042
        %2233 = vst [vmem:[%s2069] ss:$9 sm:$0xff] %v2043
        %2234 = vst [vmem:[%s2071] ss:$9 sm:$0xff] %v2044
        %v2235 = vld [vmem:[#allocation1] sm:$0xff]
        %2236 = vst [vmem:[#allocation1] ss:$9 sm:$0xff] %v1887
        %2237 = vst [vmem:[%s2059] ss:$9 sm:$0xff] %v1888
        %2238 = vst [vmem:[%s2061] ss:$9 sm:$0xff] %v2045
        %2239 = vst [vmem:[%s2063] ss:$9 sm:$0xff] %v2046
        %2240 = vst [vmem:[%s2065] ss:$9 sm:$0xff] %v2047
        %2241 = vst [vmem:[%s2067] ss:$9 sm:$0xff] %v2048
        %2242 = vst [vmem:[%s2069] ss:$9 sm:$0xff] %v2049
        %2243 = vst [vmem:[%s2071] ss:$9 sm:$0xff] %v2050
        %v2244 = vld [vmem:[#allocation1] sm:$0xff]
        %2245 = vst [vmem:[#allocation1] ss:$9 sm:$0xff] %v2051
        %2246 = vst [vmem:[%s2059] ss:$9 sm:$0xff] %v1889
        %v2247 = vld [vmem:[#allocation1] sm:$0xff]
        %v2248 = vsel %vm191, %v2073, 0
        %v2250 = vsel %vm191, %v2082, 0
        %v2252 = vsel %vm191, %v2091, 0
        %v2254 = vsel %vm191, %v2100, 0
        %v2256 = vsel %vm191, %v2109, 0
        %v2258 = vsel %vm191, %v2118, 0
        %v2260 = vsel %vm191, %v2127, 0
        %v2262 = vsel %vm191, %v2136, 0
        %v2264 = vsel %vm191, %v2145, 0
        %v2266 = vsel %vm191, %v2154, 0
        %v2268 = vsel %vm191, %v2163, 0
        %v2270 = vsel %vm191, %v2172, 0
        %v2272 = vsel %vm191, %v2181, 0
        %v2274 = vsel %vm191, %v2190, 0
        %v2276 = vsel %vm191, %v2199, 0
        %v2278 = vsel %vm191, %v2208, 0
        %v2280 = vsel %vm191, %v2217, 0
        %v2282 = vsel %vm191, %v2226, 0
        %v2284 = vsel %vm191, %v2235, 0
        %v2286 = vsel %vm191, %v2244, 0
        %v2288 = vsel %vm191, %v2247, 0
        %v2291 = vsel %vm915, %v2057, 0
        %2293 = vmatpush.msra.mxu0 0.0
        %2294 = vmatpush.msra.mxu0 0.0
        %2295 = vmatpush.msra.mxu0 0.0
        %2296 = vmatpush.msra.mxu0 0.0
        %2297 = vmatpush.msra.mxu0 0.0
        %2298 = vmatpush.msra.mxu0 0.0
        %2299 = vmatpush.msra.mxu0 0.0
        %2300 = vmatpush.msra.mxu0 0.0
        %2301 = vmatpush.msra.mxu0 0.0
        %2302 = vmatpush.msra.mxu0 0.0
        %2303 = vmatpush.msra.mxu0 0.0
        %2304 = vmatpush.msra.mxu0 %v2291
        %2305 = vmatpush.msra.mxu0 %v2056
        %2306 = vmatpush.msra.mxu0 %v2055
        %2307 = vmatpush.msra.mxu0 %v2054
        %2308 = vmatpush.msra.mxu0 %v2053
        %2309 = vmatmul.f32.gmra.mxu0 %v2248
        %v2310 = vpop.f32.mrf.mxu0
        %v2311 = vadd.f32 0.0, %v2310
        %2312 = vmatmul.f32.gmra.mxu0 %v2250
        %v2313 = vpop.f32.mrf.mxu0
        %v2314 = vadd.f32 0.0, %v2313
        %2315 = vmatmul.f32.gmra.mxu0 %v2252
        %v2316 = vpop.f32.mrf.mxu0
        %v2317 = vadd.f32 0.0, %v2316
        %2318 = vmatmul.f32.gmra.mxu0 %v2254
        %v2319 = vpop.f32.mrf.mxu0
        %v2320 = vadd.f32 0.0, %v2319
        %2321 = vmatmul.f32.gmra.mxu0 %v2256
        %v2322 = vpop.f32.mrf.mxu0
        %v2323 = vadd.f32 0.0, %v2322
        %2324 = vmatmul.f32.gmra.mxu0 %v2258
        %v2325 = vpop.f32.mrf.mxu0
        %v2326 = vadd.f32 0.0, %v2325
        %2327 = vmatmul.f32.gmra.mxu0 %v2260
        %v2328 = vpop.f32.mrf.mxu0
        %v2329 = vadd.f32 0.0, %v2328
        %2330 = vmatmul.f32.gmra.mxu0 %v2262
        %v2331 = vpop.f32.mrf.mxu0
        %v2332 = vadd.f32 0.0, %v2331
        %2333 = vmatmul.f32.gmra.mxu0 %v2264
        %v2334 = vpop.f32.mrf.mxu0
        %v2335 = vadd.f32 0.0, %v2334
        %2336 = vmatmul.f32.gmra.mxu0 %v2266
        %v2337 = vpop.f32.mrf.mxu0
        %v2338 = vadd.f32 0.0, %v2337
        %2339 = vmatmul.f32.gmra.mxu0 %v2268
        %v2340 = vpop.f32.mrf.mxu0
        %v2341 = vadd.f32 0.0, %v2340
        %2342 = vmatmul.f32.gmra.mxu0 %v2270
        %v2343 = vpop.f32.mrf.mxu0
        %v2344 = vadd.f32 0.0, %v2343
        %2345 = vmatmul.f32.gmra.mxu0 %v2272
        %v2346 = vpop.f32.mrf.mxu0
        %v2347 = vadd.f32 0.0, %v2346
        %2348 = vmatmul.f32.gmra.mxu0 %v2274
        %v2349 = vpop.f32.mrf.mxu0
        %v2350 = vadd.f32 0.0, %v2349
        %2351 = vmatmul.f32.gmra.mxu0 %v2276
        %v2352 = vpop.f32.mrf.mxu0
        %v2353 = vadd.f32 0.0, %v2352
        %2354 = vmatmul.f32.gmra.mxu0 %v2278
        %v2355 = vpop.f32.mrf.mxu0
        %v2356 = vadd.f32 0.0, %v2355
        %2357 = vmatmul.f32.gmra.mxu0 %v2280
        %v2358 = vpop.f32.mrf.mxu0
        %v2359 = vadd.f32 0.0, %v2358
        %2360 = vmatmul.f32.gmra.mxu0 %v2282
        %v2361 = vpop.f32.mrf.mxu0
        %v2362 = vadd.f32 0.0, %v2361
        %2363 = vmatmul.f32.gmra.mxu0 %v2284
        %v2364 = vpop.f32.mrf.mxu0
        %v2365 = vadd.f32 0.0, %v2364
        %2366 = vmatmul.f32.gmra.mxu0 %v2286
        %v2367 = vpop.f32.mrf.mxu0
        %v2368 = vadd.f32 0.0, %v2367
        %2369 = vmatmul.f32.gmra.mxu0 %v2288
        %v2370 = vpop.f32.mrf.mxu0
        %v2371 = vadd.f32 0.0, %v2370
        %2372 = vdwg.mxu0
        %v2373 = vadd.f32 %v1833, %v2311
        %v2374 = vadd.f32 %v1834, %v2314
        %v2375 = vadd.f32 %v1835, %v2317
        %v2376 = vadd.f32 %v1836, %v2320
        %v2377 = vadd.f32 %v1837, %v2323
        %v2378 = vadd.f32 %v1838, %v2326
        %v2379 = vadd.f32 %v1839, %v2329
        %v2380 = vadd.f32 %v1840, %v2332
        %v2381 = vadd.f32 %v1841, %v2335
        %v2382 = vadd.f32 %v1842, %v2338
        %v2383 = vadd.f32 %v1843, %v2341
        %v2384 = vadd.f32 %v1844, %v2344
        %v2385 = vadd.f32 %v1845, %v2347
        %v2386 = vadd.f32 %v1846, %v2350
        %v2387 = vadd.f32 %v1847, %v2353
        %v2388 = vadd.f32 %v1848, %v2356
        %v2389 = vadd.f32 %v1849, %v2359
        %v2390 = vadd.f32 %v1850, %v2362
        %v2391 = vadd.f32 %v1851, %v2365
        %v2392 = vadd.f32 %v1852, %v2368
        %v2393 = vadd.f32 %v1853, %v2371
        %v2394 = vmax.f32 %v2373, 0.0
        %v2395 = vmax.f32 %v2374, 0.0
        %v2396 = vmax.f32 %v2375, 0.0
        %v2397 = vmax.f32 %v2376, 0.0
        %v2398 = vmax.f32 %v2377, 0.0
        %v2399 = vmax.f32 %v2378, 0.0
        %v2400 = vmax.f32 %v2379, 0.0
        %v2401 = vmax.f32 %v2380, 0.0
        %v2402 = vmax.f32 %v2381, 0.0
        %v2403 = vmax.f32 %v2382, 0.0
        %v2404 = vmax.f32 %v2383, 0.0
        %v2405 = vmax.f32 %v2384, 0.0
        %v2406 = vmax.f32 %v2385, 0.0
        %v2407 = vmax.f32 %v2386, 0.0
        %v2408 = vmax.f32 %v2387, 0.0
        %v2409 = vmax.f32 %v2388, 0.0
        %v2410 = vmax.f32 %v2389, 0.0
        %v2411 = vmax.f32 %v2390, 0.0
        %v2412 = vmax.f32 %v2391, 0.0
        %v2413 = vmax.f32 %v2392, 0.0
        %v2414 = vmax.f32 %v2393, 0.0
        %v2436 = vrot.slane %v2394, 1
        %v2437 = vrot.slane %v2394, 2
        %v2438 = vrot.slane %v2394, 3
        %v2439 = vrot.slane %v2394, 4
        %v2440 = vrot.slane %v2394, 5
        %v2441 = vrot.slane %v2394, 6
        %v2442 = vrot.slane %v2394, 7
        %v2443 = vrot.slane %v2395, 1
        %v2444 = vrot.slane %v2395, 2
        %v2445 = vrot.slane %v2395, 3
        %v2446 = vrot.slane %v2395, 4
        %v2447 = vrot.slane %v2395, 5
        %v2448 = vrot.slane %v2395, 6
        %v2449 = vrot.slane %v2395, 7
        %v2450 = vrot.slane %v2396, 1
        %v2451 = vrot.slane %v2396, 2
        %v2452 = vrot.slane %v2396, 3
        %v2453 = vrot.slane %v2396, 4
        %v2454 = vrot.slane %v2396, 5
        %v2455 = vrot.slane %v2396, 6
        %v2456 = vrot.slane %v2396, 7
        %v2457 = vrot.slane %v2397, 1
        %v2458 = vrot.slane %v2397, 2
        %v2459 = vrot.slane %v2397, 3
        %v2460 = vrot.slane %v2397, 4
        %v2461 = vrot.slane %v2397, 5
        %v2462 = vrot.slane %v2397, 6
        %v2463 = vrot.slane %v2397, 7
        %v2464 = vrot.slane %v2398, 1
        %v2465 = vrot.slane %v2398, 2
        %v2466 = vrot.slane %v2398, 3
        %v2467 = vrot.slane %v2398, 4
        %v2468 = vrot.slane %v2398, 5
        %v2469 = vrot.slane %v2398, 6
        %v2470 = vrot.slane %v2398, 7
        %v2471 = vrot.slane %v2399, 1
        %v2472 = vrot.slane %v2399, 2
        %v2473 = vrot.slane %v2399, 3
        %v2474 = vrot.slane %v2399, 4
        %v2475 = vrot.slane %v2399, 5
        %v2476 = vrot.slane %v2399, 6
        %v2477 = vrot.slane %v2399, 7
        %v2478 = vrot.slane %v2400, 1
        %v2479 = vrot.slane %v2400, 2
        %v2480 = vrot.slane %v2400, 3
        %v2481 = vrot.slane %v2400, 4
        %v2482 = vrot.slane %v2400, 5
        %v2483 = vrot.slane %v2400, 6
        %v2484 = vrot.slane %v2400, 7
        %v2485 = vrot.slane %v2401, 1
        %v2486 = vrot.slane %v2401, 2
        %v2487 = vrot.slane %v2401, 3
        %v2488 = vrot.slane %v2401, 4
        %v2489 = vrot.slane %v2401, 5
        %v2490 = vrot.slane %v2401, 6
        %v2491 = vrot.slane %v2401, 7
        %v2492 = vrot.slane %v2402, 1
        %v2493 = vrot.slane %v2402, 2
        %v2494 = vrot.slane %v2402, 3
        %v2495 = vrot.slane %v2402, 4
        %v2496 = vrot.slane %v2402, 5
        %v2497 = vrot.slane %v2402, 6
        %v2498 = vrot.slane %v2402, 7
        %v2499 = vrot.slane %v2403, 1
        %v2500 = vrot.slane %v2403, 2
        %v2501 = vrot.slane %v2403, 3
        %v2502 = vrot.slane %v2403, 4
        %v2503 = vrot.slane %v2403, 5
        %v2504 = vrot.slane %v2403, 6
        %v2505 = vrot.slane %v2403, 7
        %v2506 = vrot.slane %v2404, 1
        %v2507 = vrot.slane %v2404, 2
        %v2508 = vrot.slane %v2404, 3
        %v2509 = vrot.slane %v2404, 4
        %v2510 = vrot.slane %v2404, 5
        %v2511 = vrot.slane %v2404, 6
        %v2512 = vrot.slane %v2404, 7
        %v2513 = vrot.slane %v2405, 1
        %v2514 = vrot.slane %v2405, 2
        %v2515 = vrot.slane %v2405, 3
        %v2516 = vrot.slane %v2405, 4
        %v2517 = vrot.slane %v2405, 5
        %v2518 = vrot.slane %v2405, 6
        %v2519 = vrot.slane %v2405, 7
        %v2520 = vrot.slane %v2406, 1
        %v2521 = vrot.slane %v2406, 2
        %v2522 = vrot.slane %v2406, 3
        %v2523 = vrot.slane %v2406, 4
        %v2524 = vrot.slane %v2406, 5
        %v2525 = vrot.slane %v2406, 6
        %v2526 = vrot.slane %v2406, 7
        %v2527 = vrot.slane %v2407, 1
        %v2528 = vrot.slane %v2407, 2
        %v2529 = vrot.slane %v2407, 3
        %v2530 = vrot.slane %v2407, 4
        %v2531 = vrot.slane %v2407, 5
        %v2532 = vrot.slane %v2407, 6
        %v2533 = vrot.slane %v2407, 7
        %v2534 = vrot.slane %v2408, 1
        %v2535 = vrot.slane %v2408, 2
        %v2536 = vrot.slane %v2408, 3
        %v2537 = vrot.slane %v2408, 4
        %v2538 = vrot.slane %v2408, 5
        %v2539 = vrot.slane %v2408, 6
        %v2540 = vrot.slane %v2408, 7
        %v2541 = vrot.slane %v2409, 1
        %v2542 = vrot.slane %v2409, 2
        %v2543 = vrot.slane %v2409, 3
        %v2544 = vrot.slane %v2409, 4
        %v2545 = vrot.slane %v2409, 5
        %v2546 = vrot.slane %v2409, 6
        %v2547 = vrot.slane %v2409, 7
        %v2548 = vrot.slane %v2410, 1
        %v2549 = vrot.slane %v2410, 2
        %v2550 = vrot.slane %v2410, 3
        %v2551 = vrot.slane %v2410, 4
        %v2552 = vrot.slane %v2410, 5
        %v2553 = vrot.slane %v2410, 6
        %v2554 = vrot.slane %v2410, 7
        %v2555 = vrot.slane %v2411, 1
        %v2556 = vrot.slane %v2411, 2
        %v2557 = vrot.slane %v2411, 3
        %v2558 = vrot.slane %v2411, 4
        %v2559 = vrot.slane %v2411, 5
        %v2560 = vrot.slane %v2411, 6
        %v2561 = vrot.slane %v2411, 7
        %v2562 = vrot.slane %v2412, 1
        %v2563 = vrot.slane %v2412, 2
        %v2564 = vrot.slane %v2412, 3
        %v2565 = vrot.slane %v2412, 4
        %v2566 = vrot.slane %v2412, 5
        %v2567 = vrot.slane %v2412, 6
        %v2568 = vrot.slane %v2412, 7
        %v2569 = vrot.slane %v2413, 1
        %v2570 = vrot.slane %v2413, 2
        %v2571 = vrot.slane %v2413, 3
        %v2572 = vrot.slane %v2413, 4
        %v2573 = vrot.slane %v2413, 5
        %v2574 = vrot.slane %v2413, 6
        %v2575 = vrot.slane %v2413, 7
        %v2576 = vrot.slane %v2414, 1
        %v2577 = vld [vmem:[#allocation3] sm:$0xff]
        %v2578 = vld [vmem:[#allocation3 + $0x8] sm:$0xff]
        %v2579 = vld [vmem:[#allocation3 + $0x10] sm:$0xff]
        %v2580 = vld [vmem:[#allocation3 + $0x18] sm:$0xff]
        %v2581 = vld [vmem:[#allocation3 + $0x20] sm:$0xff]
        %v2582 = vld [vmem:[#allocation3 + $0x28] sm:$0xff]
        %v2583 = vld [vmem:[#allocation3 + $0x30] sm:$0xff]
        %v2584 = vld [vmem:[#allocation3 + $0x38] sm:$0xff]
        %s2585 = scalar_lea.vmem [#allocation3], 64
        %v2586 = vld [vmem:[%s2585] sm:$0xff]
        %v2587 = vld [vmem:[%s2585 + $0x8] sm:$0xff]
        %v2588 = vld [vmem:[%s2585 + $0x10] sm:$0xff]
        %v2589 = vld [vmem:[%s2585 + $0x18] sm:$0xff]
        %v2590 = vld [vmem:[%s2585 + $0x20] sm:$0xff]
        %v2591 = vld [vmem:[%s2585 + $0x28] sm:$0xff]
        %v2592 = vld [vmem:[%s2585 + $0x30] sm:$0xff]
        %v2593 = vld [vmem:[%s2585 + $0x38] sm:$0xff]
        %2594 = vst [vmem:[#allocation1] ss:$9 sm:$0xff] %v2436
        %s2595 = scalar_lea.vmem [#allocation1], 1
        %2596 = vst [vmem:[%s2595] ss:$9 sm:$0xff] %v2437
        %s2597 = scalar_lea.vmem [#allocation1], 2
        %2598 = vst [vmem:[%s2597] ss:$9 sm:$0xff] %v2438
        %s2599 = scalar_lea.vmem [#allocation1], 3
        %2600 = vst [vmem:[%s2599] ss:$9 sm:$0xff] %v2439
        %s2601 = scalar_lea.vmem [#allocation1], 4
        %2602 = vst [vmem:[%s2601] ss:$9 sm:$0xff] %v2440
        %s2603 = scalar_lea.vmem [#allocation1], 5
        %2604 = vst [vmem:[%s2603] ss:$9 sm:$0xff] %v2441
        %s2605 = scalar_lea.vmem [#allocation1], 6
        %2606 = vst [vmem:[%s2605] ss:$9 sm:$0xff] %v2442
        %s2607 = scalar_lea.vmem [#allocation1], 7
        %2608 = vst [vmem:[%s2607] ss:$9 sm:$0xff] %v2395
        %v2609 = vld [vmem:[#allocation1] sm:$0xff]
        %2610 = vst [vmem:[#allocation1] ss:$9 sm:$0xff] %v2444
        %2611 = vst [vmem:[%s2595] ss:$9 sm:$0xff] %v2445
        %2612 = vst [vmem:[%s2597] ss:$9 sm:$0xff] %v2446
        %2613 = vst [vmem:[%s2599] ss:$9 sm:$0xff] %v2447
        %2614 = vst [vmem:[%s2601] ss:$9 sm:$0xff] %v2448
        %2615 = vst [vmem:[%s2603] ss:$9 sm:$0xff] %v2449
        %2616 = vst [vmem:[%s2605] ss:$9 sm:$0xff] %v2396
        %2617 = vst [vmem:[%s2607] ss:$9 sm:$0xff] %v2450
        %v2618 = vld [vmem:[#allocation1] sm:$0xff]
        %2619 = vst [vmem:[#allocation1] ss:$9 sm:$0xff] %v2452
        %2620 = vst [vmem:[%s2595] ss:$9 sm:$0xff] %v2453
        %2621 = vst [vmem:[%s2597] ss:$9 sm:$0xff] %v2454
        %2622 = vst [vmem:[%s2599] ss:$9 sm:$0xff] %v2455
        %2623 = vst [vmem:[%s2601] ss:$9 sm:$0xff] %v2456
        %2624 = vst [vmem:[%s2603] ss:$9 sm:$0xff] %v2397
        %2625 = vst [vmem:[%s2605] ss:$9 sm:$0xff] %v2457
        %2626 = vst [vmem:[%s2607] ss:$9 sm:$0xff] %v2458
        %v2627 = vld [vmem:[#allocation1] sm:$0xff]
        %2628 = vst [vmem:[#allocation1] ss:$9 sm:$0xff] %v2460
        %2629 = vst [vmem:[%s2595] ss:$9 sm:$0xff] %v2461
        %2630 = vst [vmem:[%s2597] ss:$9 sm:$0xff] %v2462
        %2631 = vst [vmem:[%s2599] ss:$9 sm:$0xff] %v2463
        %2632 = vst [vmem:[%s2601] ss:$9 sm:$0xff] %v2398
        %2633 = vst [vmem:[%s2603] ss:$9 sm:$0xff] %v2464
        %2634 = vst [vmem:[%s2605] ss:$9 sm:$0xff] %v2465
        %2635 = vst [vmem:[%s2607] ss:$9 sm:$0xff] %v2466
        %v2636 = vld [vmem:[#allocation1] sm:$0xff]
        %2637 = vst [vmem:[#allocation1] ss:$9 sm:$0xff] %v2468
        %2638 = vst [vmem:[%s2595] ss:$9 sm:$0xff] %v2469
        %2639 = vst [vmem:[%s2597] ss:$9 sm:$0xff] %v2470
        %2640 = vst [vmem:[%s2599] ss:$9 sm:$0xff] %v2399
        %2641 = vst [vmem:[%s2601] ss:$9 sm:$0xff] %v2471
        %2642 = vst [vmem:[%s2603] ss:$9 sm:$0xff] %v2472
        %2643 = vst [vmem:[%s2605] ss:$9 sm:$0xff] %v2473
        %2644 = vst [vmem:[%s2607] ss:$9 sm:$0xff] %v2474
        %v2645 = vld [vmem:[#allocation1] sm:$0xff]
        %2646 = vst [vmem:[#allocation1] ss:$9 sm:$0xff] %v2476
        %2647 = vst [vmem:[%s2595] ss:$9 sm:$0xff] %v2477
        %2648 = vst [vmem:[%s2597] ss:$9 sm:$0xff] %v2400
        %2649 = vst [vmem:[%s2599] ss:$9 sm:$0xff] %v2478
        %2650 = vst [vmem:[%s2601] ss:$9 sm:$0xff] %v2479
        %2651 = vst [vmem:[%s2603] ss:$9 sm:$0xff] %v2480
        %2652 = vst [vmem:[%s2605] ss:$9 sm:$0xff] %v2481
        %2653 = vst [vmem:[%s2607] ss:$9 sm:$0xff] %v2482
        %v2654 = vld [vmem:[#allocation1] sm:$0xff]
        %2655 = vst [vmem:[#allocation1] ss:$9 sm:$0xff] %v2484
        %2656 = vst [vmem:[%s2595] ss:$9 sm:$0xff] %v2401
        %2657 = vst [vmem:[%s2597] ss:$9 sm:$0xff] %v2485
        %2658 = vst [vmem:[%s2599] ss:$9 sm:$0xff] %v2486
        %2659 = vst [vmem:[%s2601] ss:$9 sm:$0xff] %v2487
        %2660 = vst [vmem:[%s2603] ss:$9 sm:$0xff] %v2488
        %2661 = vst [vmem:[%s2605] ss:$9 sm:$0xff] %v2489
        %2662 = vst [vmem:[%s2607] ss:$9 sm:$0xff] %v2490
        %v2663 = vld [vmem:[#allocation1] sm:$0xff]
        %2664 = vst [vmem:[#allocation1] ss:$9 sm:$0xff] %v2402
        %2665 = vst [vmem:[%s2595] ss:$9 sm:$0xff] %v2492
        %2666 = vst [vmem:[%s2597] ss:$9 sm:$0xff] %v2493
        %2667 = vst [vmem:[%s2599] ss:$9 sm:$0xff] %v2494
        %2668 = vst [vmem:[%s2601] ss:$9 sm:$0xff] %v2495
        %2669 = vst [vmem:[%s2603] ss:$9 sm:$0xff] %v2496
        %2670 = vst [vmem:[%s2605] ss:$9 sm:$0xff] %v2497
        %2671 = vst [vmem:[%s2607] ss:$9 sm:$0xff] %v2498
        %v2672 = vld [vmem:[#allocation1] sm:$0xff]
        %2673 = vst [vmem:[#allocation1] ss:$9 sm:$0xff] %v2507
        %2674 = vst [vmem:[%s2595] ss:$9 sm:$0xff] %v2508
        %2675 = vst [vmem:[%s2597] ss:$9 sm:$0xff] %v2509
        %2676 = vst [vmem:[%s2599] ss:$9 sm:$0xff] %v2510
        %2677 = vst [vmem:[%s2601] ss:$9 sm:$0xff] %v2511
        %2678 = vst [vmem:[%s2603] ss:$9 sm:$0xff] %v2512
        %2679 = vst [vmem:[%s2605] ss:$9 sm:$0xff] %v2405
        %2680 = vst [vmem:[%s2607] ss:$9 sm:$0xff] %v2513
        %v2681 = vld [vmem:[#allocation1] sm:$0xff]
        %2682 = vst [vmem:[#allocation1] ss:$9 sm:$0xff] %v2515
        %2683 = vst [vmem:[%s2595] ss:$9 sm:$0xff] %v2516
        %2684 = vst [vmem:[%s2597] ss:$9 sm:$0xff] %v2517
        %2685 = vst [vmem:[%s2599] ss:$9 sm:$0xff] %v2518
        %2686 = vst [vmem:[%s2601] ss:$9 sm:$0xff] %v2519
        %2687 = vst [vmem:[%s2603] ss:$9 sm:$0xff] %v2406
        %2688 = vst [vmem:[%s2605] ss:$9 sm:$0xff] %v2520
        %2689 = vst [vmem:[%s2607] ss:$9 sm:$0xff] %v2521
        %v2690 = vld [vmem:[#allocation1] sm:$0xff]
        %2691 = vst [vmem:[#allocation1] ss:$9 sm:$0xff] %v2523
        %2692 = vst [vmem:[%s2595] ss:$9 sm:$0xff] %v2524
        %2693 = vst [vmem:[%s2597] ss:$9 sm:$0xff] %v2525
        %2694 = vst [vmem:[%s2599] ss:$9 sm:$0xff] %v2526
        %2695 = vst [vmem:[%s2601] ss:$9 sm:$0xff] %v2407
        %2696 = vst [vmem:[%s2603] ss:$9 sm:$0xff] %v2527
        %2697 = vst [vmem:[%s2605] ss:$9 sm:$0xff] %v2528
        %2698 = vst [vmem:[%s2607] ss:$9 sm:$0xff] %v2529
        %v2699 = vld [vmem:[#allocation1] sm:$0xff]
        %2700 = vst [vmem:[#allocation1] ss:$9 sm:$0xff] %v2531
        %2701 = vst [vmem:[%s2595] ss:$9 sm:$0xff] %v2532
        %2702 = vst [vmem:[%s2597] ss:$9 sm:$0xff] %v2533
        %2703 = vst [vmem:[%s2599] ss:$9 sm:$0xff] %v2408
        %2704 = vst [vmem:[%s2601] ss:$9 sm:$0xff] %v2534
        %2705 = vst [vmem:[%s2603] ss:$9 sm:$0xff] %v2535
        %2706 = vst [vmem:[%s2605] ss:$9 sm:$0xff] %v2536
        %2707 = vst [vmem:[%s2607] ss:$9 sm:$0xff] %v2537
        %v2708 = vld [vmem:[#allocation1] sm:$0xff]
        %2709 = vst [vmem:[#allocation1] ss:$9 sm:$0xff] %v2539
        %2710 = vst [vmem:[%s2595] ss:$9 sm:$0xff] %v2540
        %2711 = vst [vmem:[%s2597] ss:$9 sm:$0xff] %v2409
        %2712 = vst [vmem:[%s2599] ss:$9 sm:$0xff] %v2541
        %2713 = vst [vmem:[%s2601] ss:$9 sm:$0xff] %v2542
        %2714 = vst [vmem:[%s2603] ss:$9 sm:$0xff] %v2543
        %2715 = vst [vmem:[%s2605] ss:$9 sm:$0xff] %v2544
        %2716 = vst [vmem:[%s2607] ss:$9 sm:$0xff] %v2545
        %v2717 = vld [vmem:[#allocation1] sm:$0xff]
        %2718 = vst [vmem:[#allocation1] ss:$9 sm:$0xff] %v2547
        %2719 = vst [vmem:[%s2595] ss:$9 sm:$0xff] %v2410
        %2720 = vst [vmem:[%s2597] ss:$9 sm:$0xff] %v2548
        %2721 = vst [vmem:[%s2599] ss:$9 sm:$0xff] %v2549
        %2722 = vst [vmem:[%s2601] ss:$9 sm:$0xff] %v2550
        %2723 = vst [vmem:[%s2603] ss:$9 sm:$0xff] %v2551
        %2724 = vst [vmem:[%s2605] ss:$9 sm:$0xff] %v2552
        %2725 = vst [vmem:[%s2607] ss:$9 sm:$0xff] %v2553
        %v2726 = vld [vmem:[#allocation1] sm:$0xff]
        %2727 = vst [vmem:[#allocation1] ss:$9 sm:$0xff] %v2411
        %2728 = vst [vmem:[%s2595] ss:$9 sm:$0xff] %v2555
        %2729 = vst [vmem:[%s2597] ss:$9 sm:$0xff] %v2556
        %2730 = vst [vmem:[%s2599] ss:$9 sm:$0xff] %v2557
        %2731 = vst [vmem:[%s2601] ss:$9 sm:$0xff] %v2558
        %2732 = vst [vmem:[%s2603] ss:$9 sm:$0xff] %v2559
        %2733 = vst [vmem:[%s2605] ss:$9 sm:$0xff] %v2560
        %2734 = vst [vmem:[%s2607] ss:$9 sm:$0xff] %v2561
        %v2735 = vld [vmem:[#allocation1] sm:$0xff]
        %2736 = vst [vmem:[#allocation1] ss:$9 sm:$0xff] %v2562
        %2737 = vst [vmem:[%s2595] ss:$9 sm:$0xff] %v2563
        %2738 = vst [vmem:[%s2597] ss:$9 sm:$0xff] %v2564
        %2739 = vst [vmem:[%s2599] ss:$9 sm:$0xff] %v2565
        %2740 = vst [vmem:[%s2601] ss:$9 sm:$0xff] %v2566
        %2741 = vst [vmem:[%s2603] ss:$9 sm:$0xff] %v2567
        %2742 = vst [vmem:[%s2605] ss:$9 sm:$0xff] %v2568
        %2743 = vst [vmem:[%s2607] ss:$9 sm:$0xff] %v2413
        %v2744 = vld [vmem:[#allocation1] sm:$0xff]
        %vm2745 = vcmask 523264
        %v2746 = vsel %vm2745, %v2609, 0
        %v2748 = vsel %vm2745, %v2618, 0
        %v2750 = vsel %vm2745, %v2627, 0
        %v2752 = vsel %vm2745, %v2636, 0
        %v2754 = vsel %vm2745, %v2645, 0
        %v2756 = vsel %vm2745, %v2654, 0
        %v2758 = vsel %vm2745, %v2663, 0
        %v2760 = vsel %vm2745, %v2672, 0
        %v2762 = vsel %vm2745, %v2681, 0
        %v2764 = vsel %vm2745, %v2690, 0
        %v2766 = vsel %vm2745, %v2699, 0
        %v2768 = vsel %vm2745, %v2708, 0
        %v2770 = vsel %vm2745, %v2717, 0
        %v2772 = vsel %vm2745, %v2726, 0
        %v2774 = vsel %vm2745, %v2735, 0
        %v2776 = vsel %vm2745, %v2744, 0
        %2778 = vmatpush.msra.mxu0 0.0
        %2779 = vmatpush.msra.mxu0 0.0
        %2780 = vmatpush.msra.mxu0 0.0
        %2781 = vmatpush.msra.mxu0 0.0
        %2782 = vmatpush.msra.mxu0 0.0
        %2783 = vmatpush.msra.mxu0 0.0
        %2784 = vmatpush.msra.mxu0 0.0
        %2785 = vmatpush.msra.mxu0 0.0
        %2786 = vmatpush.msra.mxu0 %v2593
        %2787 = vmatpush.msra.mxu0 %v2592
        %2788 = vmatpush.msra.mxu0 %v2591
        %2789 = vmatpush.msra.mxu0 %v2590
        %2790 = vmatpush.msra.mxu0 %v2589
        %2791 = vmatpush.msra.mxu0 %v2588
        %2792 = vmatpush.msra.mxu0 %v2587
        %2793 = vmatpush.msra.mxu0 %v2586
        %2794 = vmatmul.f32.gmra.mxu0 %v2746
        %v2795 = vpop.f32.mrf.mxu0
        %v2796 = vadd.f32 0.0, %v2795
        %2797 = vmatmul.f32.gmra.mxu0 %v2748
        %v2798 = vpop.f32.mrf.mxu0
        %v2799 = vadd.f32 0.0, %v2798
        %2800 = vmatmul.f32.gmra.mxu0 %v2750
        %v2801 = vpop.f32.mrf.mxu0
        %v2802 = vadd.f32 0.0, %v2801
        %2803 = vmatmul.f32.gmra.mxu0 %v2752
        %v2804 = vpop.f32.mrf.mxu0
        %v2805 = vadd.f32 0.0, %v2804
        %2806 = vmatmul.f32.gmra.mxu0 %v2754
        %v2807 = vpop.f32.mrf.mxu0
        %v2808 = vadd.f32 0.0, %v2807
        %2809 = vmatmul.f32.gmra.mxu0 %v2756
        %v2810 = vpop.f32.mrf.mxu0
        %v2811 = vadd.f32 0.0, %v2810
        %2812 = vmatmul.f32.gmra.mxu0 %v2758
        %v2813 = vpop.f32.mrf.mxu0
        %v2814 = vadd.f32 0.0, %v2813
        %2815 = vmatmul.f32.gmra.mxu0 %v2760
        %v2816 = vpop.f32.mrf.mxu0
        %v2817 = vadd.f32 0.0, %v2816
        %2818 = vmatmul.f32.gmra.mxu0 %v2762
        %v2819 = vpop.f32.mrf.mxu0
        %v2820 = vadd.f32 0.0, %v2819
        %2821 = vmatmul.f32.gmra.mxu0 %v2764
        %v2822 = vpop.f32.mrf.mxu0
        %v2823 = vadd.f32 0.0, %v2822
        %2824 = vmatmul.f32.gmra.mxu0 %v2766
        %v2825 = vpop.f32.mrf.mxu0
        %v2826 = vadd.f32 0.0, %v2825
        %2827 = vmatmul.f32.gmra.mxu0 %v2768
        %v2828 = vpop.f32.mrf.mxu0
        %v2829 = vadd.f32 0.0, %v2828
        %2830 = vmatmul.f32.gmra.mxu0 %v2770
        %v2831 = vpop.f32.mrf.mxu0
        %v2832 = vadd.f32 0.0, %v2831
        %2833 = vmatmul.f32.gmra.mxu0 %v2772
        %v2834 = vpop.f32.mrf.mxu0
        %v2835 = vadd.f32 0.0, %v2834
        %2836 = vmatmul.f32.gmra.mxu0 %v2774
        %v2837 = vpop.f32.mrf.mxu0
        %v2838 = vadd.f32 0.0, %v2837
        %2839 = vmatmul.f32.gmra.mxu0 %v2776
        %v2840 = vpop.f32.mrf.mxu0
        %v2841 = vadd.f32 0.0, %v2840
        %2842 = vdwg.mxu0
        %2843 = vst [vmem:[#allocation1] ss:$9 sm:$0xff] %v2394
        %s2844 = scalar_lea.vmem [#allocation1], 1
        %2845 = vst [vmem:[%s2844] ss:$9 sm:$0xff] %v2436
        %s2846 = scalar_lea.vmem [#allocation1], 2
        %2847 = vst [vmem:[%s2846] ss:$9 sm:$0xff] %v2437
        %s2848 = scalar_lea.vmem [#allocation1], 3
        %2849 = vst [vmem:[%s2848] ss:$9 sm:$0xff] %v2438
        %s2850 = scalar_lea.vmem [#allocation1], 4
        %2851 = vst [vmem:[%s2850] ss:$9 sm:$0xff] %v2439
        %s2852 = scalar_lea.vmem [#allocation1], 5
        %2853 = vst [vmem:[%s2852] ss:$9 sm:$0xff] %v2440
        %s2854 = scalar_lea.vmem [#allocation1], 6
        %2855 = vst [vmem:[%s2854] ss:$9 sm:$0xff] %v2441
        %s2856 = scalar_lea.vmem [#allocation1], 7
        %2857 = vst [vmem:[%s2856] ss:$9 sm:$0xff] %v2442
        %v2858 = vld [vmem:[#allocation1] sm:$0xff]
        %2859 = vst [vmem:[#allocation1] ss:$9 sm:$0xff] %v2443
        %2860 = vst [vmem:[%s2844] ss:$9 sm:$0xff] %v2444
        %2861 = vst [vmem:[%s2846] ss:$9 sm:$0xff] %v2445
        %2862 = vst [vmem:[%s2848] ss:$9 sm:$0xff] %v2446
        %2863 = vst [vmem:[%s2850] ss:$9 sm:$0xff] %v2447
        %2864 = vst [vmem:[%s2852] ss:$9 sm:$0xff] %v2448
        %2865 = vst [vmem:[%s2854] ss:$9 sm:$0xff] %v2449
        %2866 = vst [vmem:[%s2856] ss:$9 sm:$0xff] %v2396
        %v2867 = vld [vmem:[#allocation1] sm:$0xff]
        %2868 = vst [vmem:[#allocation1] ss:$9 sm:$0xff] %v2451
        %2869 = vst [vmem:[%s2844] ss:$9 sm:$0xff] %v2452
        %2870 = vst [vmem:[%s2846] ss:$9 sm:$0xff] %v2453
        %2871 = vst [vmem:[%s2848] ss:$9 sm:$0xff] %v2454
        %2872 = vst [vmem:[%s2850] ss:$9 sm:$0xff] %v2455
        %2873 = vst [vmem:[%s2852] ss:$9 sm:$0xff] %v2456
        %2874 = vst [vmem:[%s2854] ss:$9 sm:$0xff] %v2397
        %2875 = vst [vmem:[%s2856] ss:$9 sm:$0xff] %v2457
        %v2876 = vld [vmem:[#allocation1] sm:$0xff]
        %2877 = vst [vmem:[#allocation1] ss:$9 sm:$0xff] %v2459
        %2878 = vst [vmem:[%s2844] ss:$9 sm:$0xff] %v2460
        %2879 = vst [vmem:[%s2846] ss:$9 sm:$0xff] %v2461
        %2880 = vst [vmem:[%s2848] ss:$9 sm:$0xff] %v2462
        %2881 = vst [vmem:[%s2850] ss:$9 sm:$0xff] %v2463
        %2882 = vst [vmem:[%s2852] ss:$9 sm:$0xff] %v2398
        %2883 = vst [vmem:[%s2854] ss:$9 sm:$0xff] %v2464
        %2884 = vst [vmem:[%s2856] ss:$9 sm:$0xff] %v2465
        %v2885 = vld [vmem:[#allocation1] sm:$0xff]
        %2886 = vst [vmem:[#allocation1] ss:$9 sm:$0xff] %v2467
        %2887 = vst [vmem:[%s2844] ss:$9 sm:$0xff] %v2468
        %2888 = vst [vmem:[%s2846] ss:$9 sm:$0xff] %v2469
        %2889 = vst [vmem:[%s2848] ss:$9 sm:$0xff] %v2470
        %2890 = vst [vmem:[%s2850] ss:$9 sm:$0xff] %v2399
        %2891 = vst [vmem:[%s2852] ss:$9 sm:$0xff] %v2471
        %2892 = vst [vmem:[%s2854] ss:$9 sm:$0xff] %v2472
        %2893 = vst [vmem:[%s2856] ss:$9 sm:$0xff] %v2473
        %v2894 = vld [vmem:[#allocation1] sm:$0xff]
        %2895 = vst [vmem:[#allocation1] ss:$9 sm:$0xff] %v2475
        %2896 = vst [vmem:[%s2844] ss:$9 sm:$0xff] %v2476
        %2897 = vst [vmem:[%s2846] ss:$9 sm:$0xff] %v2477
        %2898 = vst [vmem:[%s2848] ss:$9 sm:$0xff] %v2400
        %2899 = vst [vmem:[%s2850] ss:$9 sm:$0xff] %v2478
        %2900 = vst [vmem:[%s2852] ss:$9 sm:$0xff] %v2479
        %2901 = vst [vmem:[%s2854] ss:$9 sm:$0xff] %v2480
        %2902 = vst [vmem:[%s2856] ss:$9 sm:$0xff] %v2481
        %v2903 = vld [vmem:[#allocation1] sm:$0xff]
        %2904 = vst [vmem:[#allocation1] ss:$9 sm:$0xff] %v2483
        %2905 = vst [vmem:[%s2844] ss:$9 sm:$0xff] %v2484
        %2906 = vst [vmem:[%s2846] ss:$9 sm:$0xff] %v2401
        %2907 = vst [vmem:[%s2848] ss:$9 sm:$0xff] %v2485
        %2908 = vst [vmem:[%s2850] ss:$9 sm:$0xff] %v2486
        %2909 = vst [vmem:[%s2852] ss:$9 sm:$0xff] %v2487
        %2910 = vst [vmem:[%s2854] ss:$9 sm:$0xff] %v2488
        %2911 = vst [vmem:[%s2856] ss:$9 sm:$0xff] %v2489
        %v2912 = vld [vmem:[#allocation1] sm:$0xff]
        %2913 = vst [vmem:[#allocation1] ss:$9 sm:$0xff] %v2491
        %2914 = vst [vmem:[%s2844] ss:$9 sm:$0xff] %v2402
        %2915 = vst [vmem:[%s2846] ss:$9 sm:$0xff] %v2492
        %2916 = vst [vmem:[%s2848] ss:$9 sm:$0xff] %v2493
        %2917 = vst [vmem:[%s2850] ss:$9 sm:$0xff] %v2494
        %2918 = vst [vmem:[%s2852] ss:$9 sm:$0xff] %v2495
        %2919 = vst [vmem:[%s2854] ss:$9 sm:$0xff] %v2496
        %2920 = vst [vmem:[%s2856] ss:$9 sm:$0xff] %v2497
        %v2921 = vld [vmem:[#allocation1] sm:$0xff]
        %2922 = vst [vmem:[#allocation1] ss:$9 sm:$0xff] %v2506
        %2923 = vst [vmem:[%s2844] ss:$9 sm:$0xff] %v2507
        %2924 = vst [vmem:[%s2846] ss:$9 sm:$0xff] %v2508
        %2925 = vst [vmem:[%s2848] ss:$9 sm:$0xff] %v2509
        %2926 = vst [vmem:[%s2850] ss:$9 sm:$0xff] %v2510
        %2927 = vst [vmem:[%s2852] ss:$9 sm:$0xff] %v2511
        %2928 = vst [vmem:[%s2854] ss:$9 sm:$0xff] %v2512
        %2929 = vst [vmem:[%s2856] ss:$9 sm:$0xff] %v2405
        %v2930 = vld [vmem:[#allocation1] sm:$0xff]
        %2931 = vst [vmem:[#allocation1] ss:$9 sm:$0xff] %v2514
        %2932 = vst [vmem:[%s2844] ss:$9 sm:$0xff] %v2515
        %2933 = vst [vmem:[%s2846] ss:$9 sm:$0xff] %v2516
        %2934 = vst [vmem:[%s2848] ss:$9 sm:$0xff] %v2517
        %2935 = vst [vmem:[%s2850] ss:$9 sm:$0xff] %v2518
        %2936 = vst [vmem:[%s2852] ss:$9 sm:$0xff] %v2519
        %2937 = vst [vmem:[%s2854] ss:$9 sm:$0xff] %v2406
        %2938 = vst [vmem:[%s2856] ss:$9 sm:$0xff] %v2520
        %v2939 = vld [vmem:[#allocation1] sm:$0xff]
        %2940 = vst [vmem:[#allocation1] ss:$9 sm:$0xff] %v2522
        %2941 = vst [vmem:[%s2844] ss:$9 sm:$0xff] %v2523
        %2942 = vst [vmem:[%s2846] ss:$9 sm:$0xff] %v2524
        %2943 = vst [vmem:[%s2848] ss:$9 sm:$0xff] %v2525
        %2944 = vst [vmem:[%s2850] ss:$9 sm:$0xff] %v2526
        %2945 = vst [vmem:[%s2852] ss:$9 sm:$0xff] %v2407
        %2946 = vst [vmem:[%s2854] ss:$9 sm:$0xff] %v2527
        %2947 = vst [vmem:[%s2856] ss:$9 sm:$0xff] %v2528
        %v2948 = vld [vmem:[#allocation1] sm:$0xff]
        %2949 = vst [vmem:[#allocation1] ss:$9 sm:$0xff] %v2530
        %2950 = vst [vmem:[%s2844] ss:$9 sm:$0xff] %v2531
        %2951 = vst [vmem:[%s2846] ss:$9 sm:$0xff] %v2532
        %2952 = vst [vmem:[%s2848] ss:$9 sm:$0xff] %v2533
        %2953 = vst [vmem:[%s2850] ss:$9 sm:$0xff] %v2408
        %2954 = vst [vmem:[%s2852] ss:$9 sm:$0xff] %v2534
        %2955 = vst [vmem:[%s2854] ss:$9 sm:$0xff] %v2535
        %2956 = vst [vmem:[%s2856] ss:$9 sm:$0xff] %v2536
        %v2957 = vld [vmem:[#allocation1] sm:$0xff]
        %2958 = vst [vmem:[#allocation1] ss:$9 sm:$0xff] %v2538
        %2959 = vst [vmem:[%s2844] ss:$9 sm:$0xff] %v2539
        %2960 = vst [vmem:[%s2846] ss:$9 sm:$0xff] %v2540
        %2961 = vst [vmem:[%s2848] ss:$9 sm:$0xff] %v2409
        %2962 = vst [vmem:[%s2850] ss:$9 sm:$0xff] %v2541
        %2963 = vst [vmem:[%s2852] ss:$9 sm:$0xff] %v2542
        %2964 = vst [vmem:[%s2854] ss:$9 sm:$0xff] %v2543
        %2965 = vst [vmem:[%s2856] ss:$9 sm:$0xff] %v2544
        %v2966 = vld [vmem:[#allocation1] sm:$0xff]
        %2967 = vst [vmem:[#allocation1] ss:$9 sm:$0xff] %v2546
        %2968 = vst [vmem:[%s2844] ss:$9 sm:$0xff] %v2547
        %2969 = vst [vmem:[%s2846] ss:$9 sm:$0xff] %v2410
        %2970 = vst [vmem:[%s2848] ss:$9 sm:$0xff] %v2548
        %2971 = vst [vmem:[%s2850] ss:$9 sm:$0xff] %v2549
        %2972 = vst [vmem:[%s2852] ss:$9 sm:$0xff] %v2550
        %2973 = vst [vmem:[%s2854] ss:$9 sm:$0xff] %v2551
        %2974 = vst [vmem:[%s2856] ss:$9 sm:$0xff] %v2552
        %v2975 = vld [vmem:[#allocation1] sm:$0xff]
        %2976 = vst [vmem:[#allocation1] ss:$9 sm:$0xff] %v2554
        %2977 = vst [vmem:[%s2844] ss:$9 sm:$0xff] %v2411
        %2978 = vst [vmem:[%s2846] ss:$9 sm:$0xff] %v2555
        %2979 = vst [vmem:[%s2848] ss:$9 sm:$0xff] %v2556
        %2980 = vst [vmem:[%s2850] ss:$9 sm:$0xff] %v2557
        %2981 = vst [vmem:[%s2852] ss:$9 sm:$0xff] %v2558
        %2982 = vst [vmem:[%s2854] ss:$9 sm:$0xff] %v2559
        %2983 = vst [vmem:[%s2856] ss:$9 sm:$0xff] %v2560
        %v2984 = vld [vmem:[#allocation1] sm:$0xff]
        %2985 = vst [vmem:[#allocation1] ss:$9 sm:$0xff] %v2412
        %2986 = vst [vmem:[%s2844] ss:$9 sm:$0xff] %v2562
        %2987 = vst [vmem:[%s2846] ss:$9 sm:$0xff] %v2563
        %2988 = vst [vmem:[%s2848] ss:$9 sm:$0xff] %v2564
        %2989 = vst [vmem:[%s2850] ss:$9 sm:$0xff] %v2565
        %2990 = vst [vmem:[%s2852] ss:$9 sm:$0xff] %v2566
        %2991 = vst [vmem:[%s2854] ss:$9 sm:$0xff] %v2567
        %2992 = vst [vmem:[%s2856] ss:$9 sm:$0xff] %v2568
        %v2993 = vld [vmem:[#allocation1] sm:$0xff]
        %v2994 = vsel %vm2745, %v2858, 0
        %v2996 = vsel %vm2745, %v2867, 0
        %v2998 = vsel %vm2745, %v2876, 0
        %v3000 = vsel %vm2745, %v2885, 0
        %v3002 = vsel %vm2745, %v2894, 0
        %v3004 = vsel %vm2745, %v2903, 0
        %v3006 = vsel %vm2745, %v2912, 0
        %v3008 = vsel %vm2745, %v2921, 0
        %v3010 = vsel %vm2745, %v2930, 0
        %v3012 = vsel %vm2745, %v2939, 0
        %v3014 = vsel %vm2745, %v2948, 0
        %v3016 = vsel %vm2745, %v2957, 0
        %v3018 = vsel %vm2745, %v2966, 0
        %v3020 = vsel %vm2745, %v2975, 0
        %v3022 = vsel %vm2745, %v2984, 0
        %v3024 = vsel %vm2745, %v2993, 0
        %3026 = vmatpush.msra.mxu0 0.0
        %3027 = vmatpush.msra.mxu0 0.0
        %3028 = vmatpush.msra.mxu0 0.0
        %3029 = vmatpush.msra.mxu0 0.0
        %3030 = vmatpush.msra.mxu0 0.0
        %3031 = vmatpush.msra.mxu0 0.0
        %3032 = vmatpush.msra.mxu0 0.0
        %3033 = vmatpush.msra.mxu0 0.0
        %3034 = vmatpush.msra.mxu0 %v2584
        %3035 = vmatpush.msra.mxu0 %v2583
        %3036 = vmatpush.msra.mxu0 %v2582
        %3037 = vmatpush.msra.mxu0 %v2581
        %3038 = vmatpush.msra.mxu0 %v2580
        %3039 = vmatpush.msra.mxu0 %v2579
        %3040 = vmatpush.msra.mxu0 %v2578
        %3041 = vmatpush.msra.mxu0 %v2577
        %3042 = vmatmul.f32.gmra.mxu0 %v2994
        %v3043 = vpop.f32.mrf.mxu0
        %v3044 = vadd.f32 %v2796, %v3043
        %3045 = vmatmul.f32.gmra.mxu0 %v2996
        %v3046 = vpop.f32.mrf.mxu0
        %v3047 = vadd.f32 %v2799, %v3046
        %3048 = vmatmul.f32.gmra.mxu0 %v2998
        %v3049 = vpop.f32.mrf.mxu0
        %v3050 = vadd.f32 %v2802, %v3049
        %3051 = vmatmul.f32.gmra.mxu0 %v3000
        %v3052 = vpop.f32.mrf.mxu0
        %v3053 = vadd.f32 %v2805, %v3052
        %3054 = vmatmul.f32.gmra.mxu0 %v3002
        %v3055 = vpop.f32.mrf.mxu0
        %v3056 = vadd.f32 %v2808, %v3055
        %3057 = vmatmul.f32.gmra.mxu0 %v3004
        %v3058 = vpop.f32.mrf.mxu0
        %v3059 = vadd.f32 %v2811, %v3058
        %3060 = vmatmul.f32.gmra.mxu0 %v3006
        %v3061 = vpop.f32.mrf.mxu0
        %v3062 = vadd.f32 %v2814, %v3061
        %3063 = vmatmul.f32.gmra.mxu0 %v3008
        %v3064 = vpop.f32.mrf.mxu0
        %v3065 = vadd.f32 %v2817, %v3064
        %3066 = vmatmul.f32.gmra.mxu0 %v3010
        %v3067 = vpop.f32.mrf.mxu0
        %v3068 = vadd.f32 %v2820, %v3067
        %3069 = vmatmul.f32.gmra.mxu0 %v3012
        %v3070 = vpop.f32.mrf.mxu0
        %v3071 = vadd.f32 %v2823, %v3070
        %3072 = vmatmul.f32.gmra.mxu0 %v3014
        %v3073 = vpop.f32.mrf.mxu0
        %v3074 = vadd.f32 %v2826, %v3073
        %3075 = vmatmul.f32.gmra.mxu0 %v3016
        %v3076 = vpop.f32.mrf.mxu0
        %v3077 = vadd.f32 %v2829, %v3076
        %3078 = vmatmul.f32.gmra.mxu0 %v3018
        %v3079 = vpop.f32.mrf.mxu0
        %v3080 = vadd.f32 %v2832, %v3079
        %3081 = vmatmul.f32.gmra.mxu0 %v3020
        %v3082 = vpop.f32.mrf.mxu0
        %v3083 = vadd.f32 %v2835, %v3082
        %3084 = vmatmul.f32.gmra.mxu0 %v3022
        %v3085 = vpop.f32.mrf.mxu0
        %v3086 = vadd.f32 %v2838, %v3085
        %3087 = vmatmul.f32.gmra.mxu0 %v3024
        %v3088 = vpop.f32.mrf.mxu0
        %v3089 = vadd.f32 %v2841, %v3088
        %3090 = vdwg.mxu0
        %s3091 = scalar_lea.vmem [#allocation3], 128
        %v3092 = vld [vmem:[%s3091] sm:$0xff]
        %v3093 = vld [vmem:[%s3091 + $0x8] sm:$0xff]
        %v3094 = vld [vmem:[%s3091 + $0x10] sm:$0xff]
        %v3095 = vld [vmem:[%s3091 + $0x18] sm:$0xff]
        %v3096 = vld [vmem:[%s3091 + $0x20] sm:$0xff]
        %v3097 = vld [vmem:[%s3091 + $0x28] sm:$0xff]
        %v3098 = vld [vmem:[%s3091 + $0x30] sm:$0xff]
        %v3099 = vld [vmem:[%s3091 + $0x38] sm:$0xff]
        %3100 = vst [vmem:[#allocation1] ss:$9 sm:$0xff] %v2443
        %s3101 = scalar_lea.vmem [#allocation1], 1
        %3102 = vst [vmem:[%s3101] ss:$9 sm:$0xff] %v2444
        %s3103 = scalar_lea.vmem [#allocation1], 2
        %3104 = vst [vmem:[%s3103] ss:$9 sm:$0xff] %v2445
        %s3105 = scalar_lea.vmem [#allocation1], 3
        %3106 = vst [vmem:[%s3105] ss:$9 sm:$0xff] %v2446
        %s3107 = scalar_lea.vmem [#allocation1], 4
        %3108 = vst [vmem:[%s3107] ss:$9 sm:$0xff] %v2447
        %s3109 = scalar_lea.vmem [#allocation1], 5
        %3110 = vst [vmem:[%s3109] ss:$9 sm:$0xff] %v2448
        %s3111 = scalar_lea.vmem [#allocation1], 6
        %3112 = vst [vmem:[%s3111] ss:$9 sm:$0xff] %v2449
        %s3113 = scalar_lea.vmem [#allocation1], 7
        %3114 = vst [vmem:[%s3113] ss:$9 sm:$0xff] %v2396
        %v3115 = vld [vmem:[#allocation1] sm:$0xff]
        %3116 = vst [vmem:[#allocation1] ss:$9 sm:$0xff] %v2451
        %3117 = vst [vmem:[%s3101] ss:$9 sm:$0xff] %v2452
        %3118 = vst [vmem:[%s3103] ss:$9 sm:$0xff] %v2453
        %3119 = vst [vmem:[%s3105] ss:$9 sm:$0xff] %v2454
        %3120 = vst [vmem:[%s3107] ss:$9 sm:$0xff] %v2455
        %3121 = vst [vmem:[%s3109] ss:$9 sm:$0xff] %v2456
        %3122 = vst [vmem:[%s3111] ss:$9 sm:$0xff] %v2397
        %3123 = vst [vmem:[%s3113] ss:$9 sm:$0xff] %v2457
        %v3124 = vld [vmem:[#allocation1] sm:$0xff]
        %3125 = vst [vmem:[#allocation1] ss:$9 sm:$0xff] %v2459
        %3126 = vst [vmem:[%s3101] ss:$9 sm:$0xff] %v2460
        %3127 = vst [vmem:[%s3103] ss:$9 sm:$0xff] %v2461
        %3128 = vst [vmem:[%s3105] ss:$9 sm:$0xff] %v2462
        %3129 = vst [vmem:[%s3107] ss:$9 sm:$0xff] %v2463
        %3130 = vst [vmem:[%s3109] ss:$9 sm:$0xff] %v2398
        %3131 = vst [vmem:[%s3111] ss:$9 sm:$0xff] %v2464
        %3132 = vst [vmem:[%s3113] ss:$9 sm:$0xff] %v2465
        %v3133 = vld [vmem:[#allocation1] sm:$0xff]
        %3134 = vst [vmem:[#allocation1] ss:$9 sm:$0xff] %v2467
        %3135 = vst [vmem:[%s3101] ss:$9 sm:$0xff] %v2468
        %3136 = vst [vmem:[%s3103] ss:$9 sm:$0xff] %v2469
        %3137 = vst [vmem:[%s3105] ss:$9 sm:$0xff] %v2470
        %3138 = vst [vmem:[%s3107] ss:$9 sm:$0xff] %v2399
        %3139 = vst [vmem:[%s3109] ss:$9 sm:$0xff] %v2471
        %3140 = vst [vmem:[%s3111] ss:$9 sm:$0xff] %v2472
        %3141 = vst [vmem:[%s3113] ss:$9 sm:$0xff] %v2473
        %v3142 = vld [vmem:[#allocation1] sm:$0xff]
        %3143 = vst [vmem:[#allocation1] ss:$9 sm:$0xff] %v2475
        %3144 = vst [vmem:[%s3101] ss:$9 sm:$0xff] %v2476
        %3145 = vst [vmem:[%s3103] ss:$9 sm:$0xff] %v2477
        %3146 = vst [vmem:[%s3105] ss:$9 sm:$0xff] %v2400
        %3147 = vst [vmem:[%s3107] ss:$9 sm:$0xff] %v2478
        %3148 = vst [vmem:[%s3109] ss:$9 sm:$0xff] %v2479
        %3149 = vst [vmem:[%s3111] ss:$9 sm:$0xff] %v2480
        %3150 = vst [vmem:[%s3113] ss:$9 sm:$0xff] %v2481
        %v3151 = vld [vmem:[#allocation1] sm:$0xff]
        %3152 = vst [vmem:[#allocation1] ss:$9 sm:$0xff] %v2483
        %3153 = vst [vmem:[%s3101] ss:$9 sm:$0xff] %v2484
        %3154 = vst [vmem:[%s3103] ss:$9 sm:$0xff] %v2401
        %3155 = vst [vmem:[%s3105] ss:$9 sm:$0xff] %v2485
        %3156 = vst [vmem:[%s3107] ss:$9 sm:$0xff] %v2486
        %3157 = vst [vmem:[%s3109] ss:$9 sm:$0xff] %v2487
        %3158 = vst [vmem:[%s3111] ss:$9 sm:$0xff] %v2488
        %3159 = vst [vmem:[%s3113] ss:$9 sm:$0xff] %v2489
        %v3160 = vld [vmem:[#allocation1] sm:$0xff]
        %3161 = vst [vmem:[#allocation1] ss:$9 sm:$0xff] %v2491
        %3162 = vst [vmem:[%s3101] ss:$9 sm:$0xff] %v2402
        %3163 = vst [vmem:[%s3103] ss:$9 sm:$0xff] %v2492
        %3164 = vst [vmem:[%s3105] ss:$9 sm:$0xff] %v2493
        %3165 = vst [vmem:[%s3107] ss:$9 sm:$0xff] %v2494
        %3166 = vst [vmem:[%s3109] ss:$9 sm:$0xff] %v2495
        %3167 = vst [vmem:[%s3111] ss:$9 sm:$0xff] %v2496
        %3168 = vst [vmem:[%s3113] ss:$9 sm:$0xff] %v2497
        %v3169 = vld [vmem:[#allocation1] sm:$0xff]
        %3170 = vst [vmem:[#allocation1] ss:$9 sm:$0xff] %v2403
        %3171 = vst [vmem:[%s3101] ss:$9 sm:$0xff] %v2499
        %3172 = vst [vmem:[%s3103] ss:$9 sm:$0xff] %v2500
        %3173 = vst [vmem:[%s3105] ss:$9 sm:$0xff] %v2501
        %3174 = vst [vmem:[%s3107] ss:$9 sm:$0xff] %v2502
        %3175 = vst [vmem:[%s3109] ss:$9 sm:$0xff] %v2503
        %3176 = vst [vmem:[%s3111] ss:$9 sm:$0xff] %v2504
        %3177 = vst [vmem:[%s3113] ss:$9 sm:$0xff] %v2505
        %v3178 = vld [vmem:[#allocation1] sm:$0xff]
        %3179 = vst [vmem:[#allocation1] ss:$9 sm:$0xff] %v2514
        %3180 = vst [vmem:[%s3101] ss:$9 sm:$0xff] %v2515
        %3181 = vst [vmem:[%s3103] ss:$9 sm:$0xff] %v2516
        %3182 = vst [vmem:[%s3105] ss:$9 sm:$0xff] %v2517
        %3183 = vst [vmem:[%s3107] ss:$9 sm:$0xff] %v2518
        %3184 = vst [vmem:[%s3109] ss:$9 sm:$0xff] %v2519
        %3185 = vst [vmem:[%s3111] ss:$9 sm:$0xff] %v2406
        %3186 = vst [vmem:[%s3113] ss:$9 sm:$0xff] %v2520
        %v3187 = vld [vmem:[#allocation1] sm:$0xff]
        %3188 = vst [vmem:[#allocation1] ss:$9 sm:$0xff] %v2522
        %3189 = vst [vmem:[%s3101] ss:$9 sm:$0xff] %v2523
        %3190 = vst [vmem:[%s3103] ss:$9 sm:$0xff] %v2524
        %3191 = vst [vmem:[%s3105] ss:$9 sm:$0xff] %v2525
        %3192 = vst [vmem:[%s3107] ss:$9 sm:$0xff] %v2526
        %3193 = vst [vmem:[%s3109] ss:$9 sm:$0xff] %v2407
        %3194 = vst [vmem:[%s3111] ss:$9 sm:$0xff] %v2527
        %3195 = vst [vmem:[%s3113] ss:$9 sm:$0xff] %v2528
        %v3196 = vld [vmem:[#allocation1] sm:$0xff]
        %3197 = vst [vmem:[#allocation1] ss:$9 sm:$0xff] %v2530
        %3198 = vst [vmem:[%s3101] ss:$9 sm:$0xff] %v2531
        %3199 = vst [vmem:[%s3103] ss:$9 sm:$0xff] %v2532
        %3200 = vst [vmem:[%s3105] ss:$9 sm:$0xff] %v2533
        %3201 = vst [vmem:[%s3107] ss:$9 sm:$0xff] %v2408
        %3202 = vst [vmem:[%s3109] ss:$9 sm:$0xff] %v2534
        %3203 = vst [vmem:[%s3111] ss:$9 sm:$0xff] %v2535
        %3204 = vst [vmem:[%s3113] ss:$9 sm:$0xff] %v2536
        %v3205 = vld [vmem:[#allocation1] sm:$0xff]
        %3206 = vst [vmem:[#allocation1] ss:$9 sm:$0xff] %v2538
        %3207 = vst [vmem:[%s3101] ss:$9 sm:$0xff] %v2539
        %3208 = vst [vmem:[%s3103] ss:$9 sm:$0xff] %v2540
        %3209 = vst [vmem:[%s3105] ss:$9 sm:$0xff] %v2409
        %3210 = vst [vmem:[%s3107] ss:$9 sm:$0xff] %v2541
        %3211 = vst [vmem:[%s3109] ss:$9 sm:$0xff] %v2542
        %3212 = vst [vmem:[%s3111] ss:$9 sm:$0xff] %v2543
        %3213 = vst [vmem:[%s3113] ss:$9 sm:$0xff] %v2544
        %v3214 = vld [vmem:[#allocation1] sm:$0xff]
        %3215 = vst [vmem:[#allocation1] ss:$9 sm:$0xff] %v2546
        %3216 = vst [vmem:[%s3101] ss:$9 sm:$0xff] %v2547
        %3217 = vst [vmem:[%s3103] ss:$9 sm:$0xff] %v2410
        %3218 = vst [vmem:[%s3105] ss:$9 sm:$0xff] %v2548
        %3219 = vst [vmem:[%s3107] ss:$9 sm:$0xff] %v2549
        %3220 = vst [vmem:[%s3109] ss:$9 sm:$0xff] %v2550
        %3221 = vst [vmem:[%s3111] ss:$9 sm:$0xff] %v2551
        %3222 = vst [vmem:[%s3113] ss:$9 sm:$0xff] %v2552
        %v3223 = vld [vmem:[#allocation1] sm:$0xff]
        %3224 = vst [vmem:[#allocation1] ss:$9 sm:$0xff] %v2554
        %3225 = vst [vmem:[%s3101] ss:$9 sm:$0xff] %v2411
        %3226 = vst [vmem:[%s3103] ss:$9 sm:$0xff] %v2555
        %3227 = vst [vmem:[%s3105] ss:$9 sm:$0xff] %v2556
        %3228 = vst [vmem:[%s3107] ss:$9 sm:$0xff] %v2557
        %3229 = vst [vmem:[%s3109] ss:$9 sm:$0xff] %v2558
        %3230 = vst [vmem:[%s3111] ss:$9 sm:$0xff] %v2559
        %3231 = vst [vmem:[%s3113] ss:$9 sm:$0xff] %v2560
        %v3232 = vld [vmem:[#allocation1] sm:$0xff]
        %3233 = vst [vmem:[#allocation1] ss:$9 sm:$0xff] %v2412
        %3234 = vst [vmem:[%s3101] ss:$9 sm:$0xff] %v2562
        %3235 = vst [vmem:[%s3103] ss:$9 sm:$0xff] %v2563
        %3236 = vst [vmem:[%s3105] ss:$9 sm:$0xff] %v2564
        %3237 = vst [vmem:[%s3107] ss:$9 sm:$0xff] %v2565
        %3238 = vst [vmem:[%s3109] ss:$9 sm:$0xff] %v2566
        %3239 = vst [vmem:[%s3111] ss:$9 sm:$0xff] %v2567
        %3240 = vst [vmem:[%s3113] ss:$9 sm:$0xff] %v2568
        %v3241 = vld [vmem:[#allocation1] sm:$0xff]
        %3242 = vst [vmem:[#allocation1] ss:$9 sm:$0xff] %v2569
        %3243 = vst [vmem:[%s3101] ss:$9 sm:$0xff] %v2570
        %3244 = vst [vmem:[%s3103] ss:$9 sm:$0xff] %v2571
        %3245 = vst [vmem:[%s3105] ss:$9 sm:$0xff] %v2572
        %3246 = vst [vmem:[%s3107] ss:$9 sm:$0xff] %v2573
        %3247 = vst [vmem:[%s3109] ss:$9 sm:$0xff] %v2574
        %3248 = vst [vmem:[%s3111] ss:$9 sm:$0xff] %v2575
        %3249 = vst [vmem:[%s3113] ss:$9 sm:$0xff] %v2414
        %v3250 = vld [vmem:[#allocation1] sm:$0xff]
        %v3251 = vsel %vm2745, %v3115, 0
        %v3253 = vsel %vm2745, %v3124, 0
        %v3255 = vsel %vm2745, %v3133, 0
        %v3257 = vsel %vm2745, %v3142, 0
        %v3259 = vsel %vm2745, %v3151, 0
        %v3261 = vsel %vm2745, %v3160, 0
        %v3263 = vsel %vm2745, %v3169, 0
        %v3265 = vsel %vm2745, %v3178, 0
        %v3267 = vsel %vm2745, %v3187, 0
        %v3269 = vsel %vm2745, %v3196, 0
        %v3271 = vsel %vm2745, %v3205, 0
        %v3273 = vsel %vm2745, %v3214, 0
        %v3275 = vsel %vm2745, %v3223, 0
        %v3277 = vsel %vm2745, %v3232, 0
        %v3279 = vsel %vm2745, %v3241, 0
        %v3281 = vsel %vm2745, %v3250, 0
        %3283 = vmatpush.msra.mxu0 0.0
        %3284 = vmatpush.msra.mxu0 0.0
        %3285 = vmatpush.msra.mxu0 0.0
        %3286 = vmatpush.msra.mxu0 0.0
        %3287 = vmatpush.msra.mxu0 0.0
        %3288 = vmatpush.msra.mxu0 0.0
        %3289 = vmatpush.msra.mxu0 0.0
        %3290 = vmatpush.msra.mxu0 0.0
        %3291 = vmatpush.msra.mxu0 %v3099
        %3292 = vmatpush.msra.mxu0 %v3098
        %3293 = vmatpush.msra.mxu0 %v3097
        %3294 = vmatpush.msra.mxu0 %v3096
        %3295 = vmatpush.msra.mxu0 %v3095
        %3296 = vmatpush.msra.mxu0 %v3094
        %3297 = vmatpush.msra.mxu0 %v3093
        %3298 = vmatpush.msra.mxu0 %v3092
        %3299 = vmatmul.f32.gmra.mxu0 %v3251
        %v3300 = vpop.f32.mrf.mxu0
        %v3301 = vadd.f32 0.0, %v3300
        %3302 = vmatmul.f32.gmra.mxu0 %v3253
        %v3303 = vpop.f32.mrf.mxu0
        %v3304 = vadd.f32 0.0, %v3303
        %3305 = vmatmul.f32.gmra.mxu0 %v3255
        %v3306 = vpop.f32.mrf.mxu0
        %v3307 = vadd.f32 0.0, %v3306
        %3308 = vmatmul.f32.gmra.mxu0 %v3257
        %v3309 = vpop.f32.mrf.mxu0
        %v3310 = vadd.f32 0.0, %v3309
        %3311 = vmatmul.f32.gmra.mxu0 %v3259
        %v3312 = vpop.f32.mrf.mxu0
        %v3313 = vadd.f32 0.0, %v3312
        %3314 = vmatmul.f32.gmra.mxu0 %v3261
        %v3315 = vpop.f32.mrf.mxu0
        %v3316 = vadd.f32 0.0, %v3315
        %3317 = vmatmul.f32.gmra.mxu0 %v3263
        %v3318 = vpop.f32.mrf.mxu0
        %v3319 = vadd.f32 0.0, %v3318
        %3320 = vmatmul.f32.gmra.mxu0 %v3265
        %v3321 = vpop.f32.mrf.mxu0
        %v3322 = vadd.f32 0.0, %v3321
        %3323 = vmatmul.f32.gmra.mxu0 %v3267
        %v3324 = vpop.f32.mrf.mxu0
        %v3325 = vadd.f32 0.0, %v3324
        %3326 = vmatmul.f32.gmra.mxu0 %v3269
        %v3327 = vpop.f32.mrf.mxu0
        %v3328 = vadd.f32 0.0, %v3327
        %3329 = vmatmul.f32.gmra.mxu0 %v3271
        %v3330 = vpop.f32.mrf.mxu0
        %v3331 = vadd.f32 0.0, %v3330
        %3332 = vmatmul.f32.gmra.mxu0 %v3273
        %v3333 = vpop.f32.mrf.mxu0
        %v3334 = vadd.f32 0.0, %v3333
        %3335 = vmatmul.f32.gmra.mxu0 %v3275
        %v3336 = vpop.f32.mrf.mxu0
        %v3337 = vadd.f32 0.0, %v3336
        %3338 = vmatmul.f32.gmra.mxu0 %v3277
        %v3339 = vpop.f32.mrf.mxu0
        %v3340 = vadd.f32 0.0, %v3339
        %3341 = vmatmul.f32.gmra.mxu0 %v3279
        %v3342 = vpop.f32.mrf.mxu0
        %v3343 = vadd.f32 0.0, %v3342
        %3344 = vmatmul.f32.gmra.mxu0 %v3281
        %v3345 = vpop.f32.mrf.mxu0
        %v3346 = vadd.f32 0.0, %v3345
        %3347 = vdwg.mxu0
        %v3348 = vadd.f32 %v3044, %v3301
        %v3349 = vadd.f32 %v3047, %v3304
        %v3350 = vadd.f32 %v3050, %v3307
        %v3351 = vadd.f32 %v3053, %v3310
        %v3352 = vadd.f32 %v3056, %v3313
        %v3353 = vadd.f32 %v3059, %v3316
        %v3354 = vadd.f32 %v3062, %v3319
        %v3355 = vadd.f32 %v3065, %v3322
        %v3356 = vadd.f32 %v3068, %v3325
        %v3357 = vadd.f32 %v3071, %v3328
        %v3358 = vadd.f32 %v3074, %v3331
        %v3359 = vadd.f32 %v3077, %v3334
        %v3360 = vadd.f32 %v3080, %v3337
        %v3361 = vadd.f32 %v3083, %v3340
        %v3362 = vadd.f32 %v3086, %v3343
        %v3363 = vadd.f32 %v3089, %v3346
        %s3364 = scalar_lea.vmem [#allocation3], 192
        %v3365 = vld [vmem:[%s3364] sm:$0xff]
        %v3366 = vld [vmem:[%s3364 + $0x8] sm:$0xff]
        %v3367 = vld [vmem:[%s3364 + $0x10] sm:$0xff]
        %v3368 = vld [vmem:[%s3364 + $0x18] sm:$0xff]
        %v3369 = vld [vmem:[%s3364 + $0x20] sm:$0xff]
        %v3370 = vld [vmem:[%s3364 + $0x28] sm:$0xff]
        %v3371 = vld [vmem:[%s3364 + $0x30] sm:$0xff]
        %v3372 = vld [vmem:[%s3364 + $0x38] sm:$0xff]
        %3373 = vst [vmem:[#allocation1] ss:$9 sm:$0xff] %v2444
        %s3374 = scalar_lea.vmem [#allocation1], 1
        %3375 = vst [vmem:[%s3374] ss:$9 sm:$0xff] %v2445
        %s3376 = scalar_lea.vmem [#allocation1], 2
        %3377 = vst [vmem:[%s3376] ss:$9 sm:$0xff] %v2446
        %s3378 = scalar_lea.vmem [#allocation1], 3
        %3379 = vst [vmem:[%s3378] ss:$9 sm:$0xff] %v2447
        %s3380 = scalar_lea.vmem [#allocation1], 4
        %3381 = vst [vmem:[%s3380] ss:$9 sm:$0xff] %v2448
        %s3382 = scalar_lea.vmem [#allocation1], 5
        %3383 = vst [vmem:[%s3382] ss:$9 sm:$0xff] %v2449
        %s3384 = scalar_lea.vmem [#allocation1], 6
        %3385 = vst [vmem:[%s3384] ss:$9 sm:$0xff] %v2396
        %s3386 = scalar_lea.vmem [#allocation1], 7
        %3387 = vst [vmem:[%s3386] ss:$9 sm:$0xff] %v2450
        %v3388 = vld [vmem:[#allocation1] sm:$0xff]
        %3389 = vst [vmem:[#allocation1] ss:$9 sm:$0xff] %v2452
        %3390 = vst [vmem:[%s3374] ss:$9 sm:$0xff] %v2453
        %3391 = vst [vmem:[%s3376] ss:$9 sm:$0xff] %v2454
        %3392 = vst [vmem:[%s3378] ss:$9 sm:$0xff] %v2455
        %3393 = vst [vmem:[%s3380] ss:$9 sm:$0xff] %v2456
        %3394 = vst [vmem:[%s3382] ss:$9 sm:$0xff] %v2397
        %3395 = vst [vmem:[%s3384] ss:$9 sm:$0xff] %v2457
        %3396 = vst [vmem:[%s3386] ss:$9 sm:$0xff] %v2458
        %v3397 = vld [vmem:[#allocation1] sm:$0xff]
        %3398 = vst [vmem:[#allocation1] ss:$9 sm:$0xff] %v2460
        %3399 = vst [vmem:[%s3374] ss:$9 sm:$0xff] %v2461
        %3400 = vst [vmem:[%s3376] ss:$9 sm:$0xff] %v2462
        %3401 = vst [vmem:[%s3378] ss:$9 sm:$0xff] %v2463
        %3402 = vst [vmem:[%s3380] ss:$9 sm:$0xff] %v2398
        %3403 = vst [vmem:[%s3382] ss:$9 sm:$0xff] %v2464
        %3404 = vst [vmem:[%s3384] ss:$9 sm:$0xff] %v2465
        %3405 = vst [vmem:[%s3386] ss:$9 sm:$0xff] %v2466
        %v3406 = vld [vmem:[#allocation1] sm:$0xff]
        %3407 = vst [vmem:[#allocation1] ss:$9 sm:$0xff] %v2468
        %3408 = vst [vmem:[%s3374] ss:$9 sm:$0xff] %v2469
        %3409 = vst [vmem:[%s3376] ss:$9 sm:$0xff] %v2470
        %3410 = vst [vmem:[%s3378] ss:$9 sm:$0xff] %v2399
        %3411 = vst [vmem:[%s3380] ss:$9 sm:$0xff] %v2471
        %3412 = vst [vmem:[%s3382] ss:$9 sm:$0xff] %v2472
        %3413 = vst [vmem:[%s3384] ss:$9 sm:$0xff] %v2473
        %3414 = vst [vmem:[%s3386] ss:$9 sm:$0xff] %v2474
        %v3415 = vld [vmem:[#allocation1] sm:$0xff]
        %3416 = vst [vmem:[#allocation1] ss:$9 sm:$0xff] %v2476
        %3417 = vst [vmem:[%s3374] ss:$9 sm:$0xff] %v2477
        %3418 = vst [vmem:[%s3376] ss:$9 sm:$0xff] %v2400
        %3419 = vst [vmem:[%s3378] ss:$9 sm:$0xff] %v2478
        %3420 = vst [vmem:[%s3380] ss:$9 sm:$0xff] %v2479
        %3421 = vst [vmem:[%s3382] ss:$9 sm:$0xff] %v2480
        %3422 = vst [vmem:[%s3384] ss:$9 sm:$0xff] %v2481
        %3423 = vst [vmem:[%s3386] ss:$9 sm:$0xff] %v2482
        %v3424 = vld [vmem:[#allocation1] sm:$0xff]
        %3425 = vst [vmem:[#allocation1] ss:$9 sm:$0xff] %v2484
        %3426 = vst [vmem:[%s3374] ss:$9 sm:$0xff] %v2401
        %3427 = vst [vmem:[%s3376] ss:$9 sm:$0xff] %v2485
        %3428 = vst [vmem:[%s3378] ss:$9 sm:$0xff] %v2486
        %3429 = vst [vmem:[%s3380] ss:$9 sm:$0xff] %v2487
        %3430 = vst [vmem:[%s3382] ss:$9 sm:$0xff] %v2488
        %3431 = vst [vmem:[%s3384] ss:$9 sm:$0xff] %v2489
        %3432 = vst [vmem:[%s3386] ss:$9 sm:$0xff] %v2490
        %v3433 = vld [vmem:[#allocation1] sm:$0xff]
        %3434 = vst [vmem:[#allocation1] ss:$9 sm:$0xff] %v2402
        %3435 = vst [vmem:[%s3374] ss:$9 sm:$0xff] %v2492
        %3436 = vst [vmem:[%s3376] ss:$9 sm:$0xff] %v2493
        %3437 = vst [vmem:[%s3378] ss:$9 sm:$0xff] %v2494
        %3438 = vst [vmem:[%s3380] ss:$9 sm:$0xff] %v2495
        %3439 = vst [vmem:[%s3382] ss:$9 sm:$0xff] %v2496
        %3440 = vst [vmem:[%s3384] ss:$9 sm:$0xff] %v2497
        %3441 = vst [vmem:[%s3386] ss:$9 sm:$0xff] %v2498
        %v3442 = vld [vmem:[#allocation1] sm:$0xff]
        %3443 = vst [vmem:[#allocation1] ss:$9 sm:$0xff] %v2499
        %3444 = vst [vmem:[%s3374] ss:$9 sm:$0xff] %v2500
        %3445 = vst [vmem:[%s3376] ss:$9 sm:$0xff] %v2501
        %3446 = vst [vmem:[%s3378] ss:$9 sm:$0xff] %v2502
        %3447 = vst [vmem:[%s3380] ss:$9 sm:$0xff] %v2503
        %3448 = vst [vmem:[%s3382] ss:$9 sm:$0xff] %v2504
        %3449 = vst [vmem:[%s3384] ss:$9 sm:$0xff] %v2505
        %3450 = vst [vmem:[%s3386] ss:$9 sm:$0xff] %v2404
        %v3451 = vld [vmem:[#allocation1] sm:$0xff]
        %3452 = vst [vmem:[#allocation1] ss:$9 sm:$0xff] %v2515
        %3453 = vst [vmem:[%s3374] ss:$9 sm:$0xff] %v2516
        %3454 = vst [vmem:[%s3376] ss:$9 sm:$0xff] %v2517
        %3455 = vst [vmem:[%s3378] ss:$9 sm:$0xff] %v2518
        %3456 = vst [vmem:[%s3380] ss:$9 sm:$0xff] %v2519
        %3457 = vst [vmem:[%s3382] ss:$9 sm:$0xff] %v2406
        %3458 = vst [vmem:[%s3384] ss:$9 sm:$0xff] %v2520
        %3459 = vst [vmem:[%s3386] ss:$9 sm:$0xff] %v2521
        %v3460 = vld [vmem:[#allocation1] sm:$0xff]
        %3461 = vst [vmem:[#allocation1] ss:$9 sm:$0xff] %v2523
        %3462 = vst [vmem:[%s3374] ss:$9 sm:$0xff] %v2524
        %3463 = vst [vmem:[%s3376] ss:$9 sm:$0xff] %v2525
        %3464 = vst [vmem:[%s3378] ss:$9 sm:$0xff] %v2526
        %3465 = vst [vmem:[%s3380] ss:$9 sm:$0xff] %v2407
        %3466 = vst [vmem:[%s3382] ss:$9 sm:$0xff] %v2527
        %3467 = vst [vmem:[%s3384] ss:$9 sm:$0xff] %v2528
        %3468 = vst [vmem:[%s3386] ss:$9 sm:$0xff] %v2529
        %v3469 = vld [vmem:[#allocation1] sm:$0xff]
        %3470 = vst [vmem:[#allocation1] ss:$9 sm:$0xff] %v2531
        %3471 = vst [vmem:[%s3374] ss:$9 sm:$0xff] %v2532
        %3472 = vst [vmem:[%s3376] ss:$9 sm:$0xff] %v2533
        %3473 = vst [vmem:[%s3378] ss:$9 sm:$0xff] %v2408
        %3474 = vst [vmem:[%s3380] ss:$9 sm:$0xff] %v2534
        %3475 = vst [vmem:[%s3382] ss:$9 sm:$0xff] %v2535
        %3476 = vst [vmem:[%s3384] ss:$9 sm:$0xff] %v2536
        %3477 = vst [vmem:[%s3386] ss:$9 sm:$0xff] %v2537
        %v3478 = vld [vmem:[#allocation1] sm:$0xff]
        %3479 = vst [vmem:[#allocation1] ss:$9 sm:$0xff] %v2539
        %3480 = vst [vmem:[%s3374] ss:$9 sm:$0xff] %v2540
        %3481 = vst [vmem:[%s3376] ss:$9 sm:$0xff] %v2409
        %3482 = vst [vmem:[%s3378] ss:$9 sm:$0xff] %v2541
        %3483 = vst [vmem:[%s3380] ss:$9 sm:$0xff] %v2542
        %3484 = vst [vmem:[%s3382] ss:$9 sm:$0xff] %v2543
        %3485 = vst [vmem:[%s3384] ss:$9 sm:$0xff] %v2544
        %3486 = vst [vmem:[%s3386] ss:$9 sm:$0xff] %v2545
        %v3487 = vld [vmem:[#allocation1] sm:$0xff]
        %3488 = vst [vmem:[#allocation1] ss:$9 sm:$0xff] %v2547
        %3489 = vst [vmem:[%s3374] ss:$9 sm:$0xff] %v2410
        %3490 = vst [vmem:[%s3376] ss:$9 sm:$0xff] %v2548
        %3491 = vst [vmem:[%s3378] ss:$9 sm:$0xff] %v2549
        %3492 = vst [vmem:[%s3380] ss:$9 sm:$0xff] %v2550
        %3493 = vst [vmem:[%s3382] ss:$9 sm:$0xff] %v2551
        %3494 = vst [vmem:[%s3384] ss:$9 sm:$0xff] %v2552
        %3495 = vst [vmem:[%s3386] ss:$9 sm:$0xff] %v2553
        %v3496 = vld [vmem:[#allocation1] sm:$0xff]
        %3497 = vst [vmem:[#allocation1] ss:$9 sm:$0xff] %v2411
        %3498 = vst [vmem:[%s3374] ss:$9 sm:$0xff] %v2555
        %3499 = vst [vmem:[%s3376] ss:$9 sm:$0xff] %v2556
        %3500 = vst [vmem:[%s3378] ss:$9 sm:$0xff] %v2557
        %3501 = vst [vmem:[%s3380] ss:$9 sm:$0xff] %v2558
        %3502 = vst [vmem:[%s3382] ss:$9 sm:$0xff] %v2559
        %3503 = vst [vmem:[%s3384] ss:$9 sm:$0xff] %v2560
        %3504 = vst [vmem:[%s3386] ss:$9 sm:$0xff] %v2561
        %v3505 = vld [vmem:[#allocation1] sm:$0xff]
        %3506 = vst [vmem:[#allocation1] ss:$9 sm:$0xff] %v2562
        %3507 = vst [vmem:[%s3374] ss:$9 sm:$0xff] %v2563
        %3508 = vst [vmem:[%s3376] ss:$9 sm:$0xff] %v2564
        %3509 = vst [vmem:[%s3378] ss:$9 sm:$0xff] %v2565
        %3510 = vst [vmem:[%s3380] ss:$9 sm:$0xff] %v2566
        %3511 = vst [vmem:[%s3382] ss:$9 sm:$0xff] %v2567
        %3512 = vst [vmem:[%s3384] ss:$9 sm:$0xff] %v2568
        %3513 = vst [vmem:[%s3386] ss:$9 sm:$0xff] %v2413
        %v3514 = vld [vmem:[#allocation1] sm:$0xff]
        %3515 = vst [vmem:[#allocation1] ss:$9 sm:$0xff] %v2570
        %3516 = vst [vmem:[%s3374] ss:$9 sm:$0xff] %v2571
        %3517 = vst [vmem:[%s3376] ss:$9 sm:$0xff] %v2572
        %3518 = vst [vmem:[%s3378] ss:$9 sm:$0xff] %v2573
        %3519 = vst [vmem:[%s3380] ss:$9 sm:$0xff] %v2574
        %3520 = vst [vmem:[%s3382] ss:$9 sm:$0xff] %v2575
        %3521 = vst [vmem:[%s3384] ss:$9 sm:$0xff] %v2414
        %3522 = vst [vmem:[%s3386] ss:$9 sm:$0xff] %v2576
        %v3523 = vld [vmem:[#allocation1] sm:$0xff]
        %v3524 = vsel %vm2745, %v3388, 0
        %v3526 = vsel %vm2745, %v3397, 0
        %v3528 = vsel %vm2745, %v3406, 0
        %v3530 = vsel %vm2745, %v3415, 0
        %v3532 = vsel %vm2745, %v3424, 0
        %v3534 = vsel %vm2745, %v3433, 0
        %v3536 = vsel %vm2745, %v3442, 0
        %v3538 = vsel %vm2745, %v3451, 0
        %v3540 = vsel %vm2745, %v3460, 0
        %v3542 = vsel %vm2745, %v3469, 0
        %v3544 = vsel %vm2745, %v3478, 0
        %v3546 = vsel %vm2745, %v3487, 0
        %v3548 = vsel %vm2745, %v3496, 0
        %v3550 = vsel %vm2745, %v3505, 0
        %v3552 = vsel %vm2745, %v3514, 0
        %v3554 = vsel %vm2745, %v3523, 0
        %3556 = vmatpush.msra.mxu0 0.0
        %3557 = vmatpush.msra.mxu0 0.0
        %3558 = vmatpush.msra.mxu0 0.0
        %3559 = vmatpush.msra.mxu0 0.0
        %3560 = vmatpush.msra.mxu0 0.0
        %3561 = vmatpush.msra.mxu0 0.0
        %3562 = vmatpush.msra.mxu0 0.0
        %3563 = vmatpush.msra.mxu0 0.0
        %3564 = vmatpush.msra.mxu0 %v3372
        %3565 = vmatpush.msra.mxu0 %v3371
        %3566 = vmatpush.msra.mxu0 %v3370
        %3567 = vmatpush.msra.mxu0 %v3369
        %3568 = vmatpush.msra.mxu0 %v3368
        %3569 = vmatpush.msra.mxu0 %v3367
        %3570 = vmatpush.msra.mxu0 %v3366
        %3571 = vmatpush.msra.mxu0 %v3365
        %3572 = vmatmul.f32.gmra.mxu0 %v3524
        %v3573 = vpop.f32.mrf.mxu0
        %v3574 = vadd.f32 0.0, %v3573
        %3575 = vmatmul.f32.gmra.mxu0 %v3526
        %v3576 = vpop.f32.mrf.mxu0
        %v3577 = vadd.f32 0.0, %v3576
        %3578 = vmatmul.f32.gmra.mxu0 %v3528
        %v3579 = vpop.f32.mrf.mxu0
        %v3580 = vadd.f32 0.0, %v3579
        %3581 = vmatmul.f32.gmra.mxu0 %v3530
        %v3582 = vpop.f32.mrf.mxu0
        %v3583 = vadd.f32 0.0, %v3582
        %3584 = vmatmul.f32.gmra.mxu0 %v3532
        %v3585 = vpop.f32.mrf.mxu0
        %v3586 = vadd.f32 0.0, %v3585
        %3587 = vmatmul.f32.gmra.mxu0 %v3534
        %v3588 = vpop.f32.mrf.mxu0
        %v3589 = vadd.f32 0.0, %v3588
        %3590 = vmatmul.f32.gmra.mxu0 %v3536
        %v3591 = vpop.f32.mrf.mxu0
        %v3592 = vadd.f32 0.0, %v3591
        %3593 = vmatmul.f32.gmra.mxu0 %v3538
        %v3594 = vpop.f32.mrf.mxu0
        %v3595 = vadd.f32 0.0, %v3594
        %3596 = vmatmul.f32.gmra.mxu0 %v3540
        %v3597 = vpop.f32.mrf.mxu0
        %v3598 = vadd.f32 0.0, %v3597
        %3599 = vmatmul.f32.gmra.mxu0 %v3542
        %v3600 = vpop.f32.mrf.mxu0
        %v3601 = vadd.f32 0.0, %v3600
        %3602 = vmatmul.f32.gmra.mxu0 %v3544
        %v3603 = vpop.f32.mrf.mxu0
        %v3604 = vadd.f32 0.0, %v3603
        %3605 = vmatmul.f32.gmra.mxu0 %v3546
        %v3606 = vpop.f32.mrf.mxu0
        %v3607 = vadd.f32 0.0, %v3606
        %3608 = vmatmul.f32.gmra.mxu0 %v3548
        %v3609 = vpop.f32.mrf.mxu0
        %v3610 = vadd.f32 0.0, %v3609
        %3611 = vmatmul.f32.gmra.mxu0 %v3550
        %v3612 = vpop.f32.mrf.mxu0
        %v3613 = vadd.f32 0.0, %v3612
        %3614 = vmatmul.f32.gmra.mxu0 %v3552
        %v3615 = vpop.f32.mrf.mxu0
        %v3616 = vadd.f32 0.0, %v3615
        %3617 = vmatmul.f32.gmra.mxu0 %v3554
        %v3618 = vpop.f32.mrf.mxu0
        %v3619 = vadd.f32 0.0, %v3618
        %3620 = vdwg.mxu0
        %v3621 = vadd.f32 %v3348, %v3574
        %v3622 = vadd.f32 %v3349, %v3577
        %v3623 = vadd.f32 %v3350, %v3580
        %v3624 = vadd.f32 %v3351, %v3583
        %v3625 = vadd.f32 %v3352, %v3586
        %v3626 = vadd.f32 %v3353, %v3589
        %v3627 = vadd.f32 %v3354, %v3592
        %v3628 = vadd.f32 %v3355, %v3595
        %v3629 = vadd.f32 %v3356, %v3598
        %v3630 = vadd.f32 %v3357, %v3601
        %v3631 = vadd.f32 %v3358, %v3604
        %v3632 = vadd.f32 %v3359, %v3607
        %v3633 = vadd.f32 %v3360, %v3610
        %v3634 = vadd.f32 %v3361, %v3613
        %v3635 = vadd.f32 %v3362, %v3616
        %v3636 = vadd.f32 %v3363, %v3619
        %v3637 = vmax.f32 %v3621, 0.0
        %v3638 = vmax.f32 %v3622, 0.0
        %v3639 = vmax.f32 %v3623, 0.0
        %v3640 = vmax.f32 %v3624, 0.0
        %v3641 = vmax.f32 %v3625, 0.0
        %v3642 = vmax.f32 %v3626, 0.0
        %v3643 = vmax.f32 %v3627, 0.0
        %v3644 = vmax.f32 %v3628, 0.0
        %v3645 = vmax.f32 %v3629, 0.0
        %v3646 = vmax.f32 %v3630, 0.0
        %v3647 = vmax.f32 %v3631, 0.0
        %v3648 = vmax.f32 %v3632, 0.0
        %v3649 = vmax.f32 %v3633, 0.0
        %v3650 = vmax.f32 %v3634, 0.0
        %v3651 = vmax.f32 %v3635, 0.0
        %v3652 = vmax.f32 %v3636, 0.0
        %v3669 = vrot.slane %v3637, 2
        %v3670 = vrot.slane %v3637, 4
        %v3671 = vrot.slane %v3637, 6
        %v3672 = vrot.slane %v3638, 2
        %v3673 = vrot.slane %v3638, 4
        %v3674 = vrot.slane %v3638, 6
        %v3675 = vrot.slane %v3639, 2
        %v3676 = vrot.slane %v3639, 4
        %v3677 = vrot.slane %v3639, 6
        %v3678 = vrot.slane %v3640, 2
        %v3679 = vrot.slane %v3640, 4
        %v3680 = vrot.slane %v3640, 6
        %v3681 = vrot.slane %v3641, 2
        %v3682 = vrot.slane %v3641, 4
        %v3683 = vrot.slane %v3641, 6
        %v3684 = vrot.slane %v3642, 2
        %v3685 = vrot.slane %v3642, 4
        %v3686 = vrot.slane %v3642, 6
        %v3687 = vrot.slane %v3643, 2
        %v3688 = vrot.slane %v3643, 4
        %v3689 = vrot.slane %v3643, 6
        %v3690 = vrot.slane %v3644, 2
        %v3691 = vrot.slane %v3644, 4
        %v3692 = vrot.slane %v3644, 6
        %v3693 = vrot.slane %v3645, 2
        %v3694 = vrot.slane %v3645, 4
        %v3695 = vrot.slane %v3645, 6
        %v3696 = vrot.slane %v3646, 2
        %v3697 = vrot.slane %v3646, 4
        %v3698 = vrot.slane %v3646, 6
        %v3699 = vrot.slane %v3647, 2
        %v3700 = vrot.slane %v3647, 4
        %v3701 = vrot.slane %v3647, 6
        %v3702 = vrot.slane %v3648, 2
        %v3703 = vrot.slane %v3648, 4
        %v3704 = vrot.slane %v3648, 6
        %v3705 = vrot.slane %v3649, 2
        %v3706 = vrot.slane %v3649, 4
        %v3707 = vrot.slane %v3649, 6
        %v3708 = vrot.slane %v3650, 2
        %v3709 = vrot.slane %v3650, 4
        %v3710 = vrot.slane %v3650, 6
        %v3711 = vrot.slane %v3651, 2
        %v3712 = vrot.slane %v3651, 4
        %v3713 = vrot.slane %v3651, 6
        %v3714 = vrot.slane %v3652, 2
        %v3715 = vrot.slane %v3652, 4
        %v3716 = vrot.slane %v3652, 6
        %v3765 = vrot.slane %v3637, 7
        %v3766 = vrot.slane %v3765, 2
        %v3767 = vrot.slane %v3669, 7
        %v3768 = vrot.slane %v3767, 2
        %v3769 = vrot.slane %v3670, 7
        %v3770 = vrot.slane %v3769, 2
        %v3771 = vrot.slane %v3671, 7
        %v3772 = vrot.slane %v3771, 2
        %v3773 = vrot.slane %v3638, 7
        %v3774 = vrot.slane %v3773, 2
        %v3775 = vrot.slane %v3672, 7
        %v3776 = vrot.slane %v3775, 2
        %v3777 = vrot.slane %v3673, 7
        %v3778 = vrot.slane %v3777, 2
        %v3779 = vrot.slane %v3674, 7
        %v3780 = vrot.slane %v3779, 2
        %v3781 = vrot.slane %v3639, 7
        %v3782 = vrot.slane %v3781, 2
        %v3783 = vrot.slane %v3675, 7
        %v3784 = vrot.slane %v3783, 2
        %v3785 = vrot.slane %v3676, 7
        %v3786 = vrot.slane %v3785, 2
        %v3787 = vrot.slane %v3677, 7
        %v3788 = vrot.slane %v3787, 2
        %v3789 = vrot.slane %v3640, 7
        %v3790 = vrot.slane %v3789, 2
        %v3791 = vrot.slane %v3678, 7
        %v3792 = vrot.slane %v3791, 2
        %v3793 = vrot.slane %v3679, 7
        %v3794 = vrot.slane %v3793, 2
        %v3795 = vrot.slane %v3680, 7
        %v3796 = vrot.slane %v3795, 2
        %v3797 = vrot.slane %v3641, 7
        %v3798 = vrot.slane %v3797, 2
        %v3799 = vrot.slane %v3681, 7
        %v3800 = vrot.slane %v3799, 2
        %v3801 = vrot.slane %v3682, 7
        %v3802 = vrot.slane %v3801, 2
        %v3803 = vrot.slane %v3683, 7
        %v3804 = vrot.slane %v3803, 2
        %v3805 = vrot.slane %v3642, 7
        %v3806 = vrot.slane %v3805, 2
        %v3807 = vrot.slane %v3684, 7
        %v3808 = vrot.slane %v3807, 2
        %v3809 = vrot.slane %v3685, 7
        %v3810 = vrot.slane %v3809, 2
        %v3811 = vrot.slane %v3686, 7
        %v3812 = vrot.slane %v3811, 2
        %v3813 = vrot.slane %v3643, 7
        %v3814 = vrot.slane %v3813, 2
        %v3815 = vrot.slane %v3687, 7
        %v3816 = vrot.slane %v3815, 2
        %v3817 = vrot.slane %v3688, 7
        %v3818 = vrot.slane %v3817, 2
        %v3819 = vrot.slane %v3689, 7
        %v3820 = vrot.slane %v3819, 2
        %v3821 = vrot.slane %v3644, 7
        %v3822 = vrot.slane %v3821, 2
        %v3823 = vrot.slane %v3690, 7
        %v3824 = vrot.slane %v3823, 2
        %v3825 = vrot.slane %v3691, 7
        %v3826 = vrot.slane %v3825, 2
        %v3827 = vrot.slane %v3692, 7
        %v3828 = vrot.slane %v3827, 2
        %v3829 = vrot.slane %v3645, 7
        %v3830 = vrot.slane %v3829, 2
        %v3831 = vrot.slane %v3693, 7
        %v3832 = vrot.slane %v3831, 2
        %v3833 = vrot.slane %v3694, 7
        %v3834 = vrot.slane %v3833, 2
        %v3835 = vrot.slane %v3695, 7
        %v3836 = vrot.slane %v3835, 2
        %v3837 = vrot.slane %v3646, 7
        %v3838 = vrot.slane %v3837, 2
        %v3839 = vrot.slane %v3696, 7
        %v3840 = vrot.slane %v3839, 2
        %v3841 = vrot.slane %v3697, 7
        %v3842 = vrot.slane %v3841, 2
        %v3843 = vrot.slane %v3698, 7
        %v3844 = vrot.slane %v3843, 2
        %v3845 = vrot.slane %v3647, 7
        %v3846 = vrot.slane %v3845, 2
        %v3847 = vrot.slane %v3699, 7
        %v3848 = vrot.slane %v3847, 2
        %v3849 = vrot.slane %v3700, 7
        %v3850 = vrot.slane %v3849, 2
        %v3851 = vrot.slane %v3701, 7
        %v3852 = vrot.slane %v3851, 2
        %v3853 = vrot.slane %v3648, 7
        %v3854 = vrot.slane %v3853, 2
        %v3855 = vrot.slane %v3702, 7
        %v3856 = vrot.slane %v3855, 2
        %v3857 = vrot.slane %v3703, 7
        %v3858 = vrot.slane %v3857, 2
        %v3859 = vrot.slane %v3704, 7
        %v3860 = vrot.slane %v3859, 2
        %v3861 = vrot.slane %v3649, 7
        %v3862 = vrot.slane %v3861, 2
        %v3863 = vrot.slane %v3705, 7
        %v3864 = vrot.slane %v3863, 2
        %v3865 = vrot.slane %v3706, 7
        %v3866 = vrot.slane %v3865, 2
        %v3867 = vrot.slane %v3707, 7
        %v3868 = vrot.slane %v3867, 2
        %v3869 = vrot.slane %v3650, 7
        %v3870 = vrot.slane %v3869, 2
        %v3871 = vrot.slane %v3708, 7
        %v3872 = vrot.slane %v3871, 2
        %v3873 = vrot.slane %v3709, 7
        %v3874 = vrot.slane %v3873, 2
        %v3875 = vrot.slane %v3710, 7
        %v3876 = vrot.slane %v3875, 2
        %v3877 = vrot.slane %v3651, 7
        %v3878 = vrot.slane %v3877, 2
        %v3879 = vrot.slane %v3711, 7
        %v3880 = vrot.slane %v3879, 2
        %v3881 = vrot.slane %v3712, 7
        %v3882 = vrot.slane %v3881, 2
        %v3883 = vrot.slane %v3713, 7
        %v3884 = vrot.slane %v3883, 2
        %v3885 = vrot.slane %v3652, 7
        %v3886 = vrot.slane %v3885, 2
        %v3887 = vrot.slane %v3714, 7
        %v3888 = vrot.slane %v3887, 2
        %v3889 = vrot.slane %v3715, 7
        %v3890 = vrot.slane %v3889, 2
        %v3891 = vrot.slane %v3716, 7
        %v3892 = vrot.slane %v3891, 2
        %v3957 = vadd.f32 %v3637, %v3766
        %v3958 = vadd.f32 %v3669, %v3768
        %v3959 = vadd.f32 %v3670, %v3770
        %v3960 = vadd.f32 %v3671, %v3772
        %v3961 = vadd.f32 %v3638, %v3774
        %v3962 = vadd.f32 %v3672, %v3776
        %v3963 = vadd.f32 %v3673, %v3778
        %v3964 = vadd.f32 %v3674, %v3780
        %v3965 = vadd.f32 %v3639, %v3782
        %v3966 = vadd.f32 %v3675, %v3784
        %v3967 = vadd.f32 %v3676, %v3786
        %v3968 = vadd.f32 %v3677, %v3788
        %v3969 = vadd.f32 %v3640, %v3790
        %v3970 = vadd.f32 %v3678, %v3792
        %v3971 = vadd.f32 %v3679, %v3794
        %v3972 = vadd.f32 %v3680, %v3796
        %v3973 = vadd.f32 %v3641, %v3798
        %v3974 = vadd.f32 %v3681, %v3800
        %v3975 = vadd.f32 %v3682, %v3802
        %v3976 = vadd.f32 %v3683, %v3804
        %v3977 = vadd.f32 %v3642, %v3806
        %v3978 = vadd.f32 %v3684, %v3808
        %v3979 = vadd.f32 %v3685, %v3810
        %v3980 = vadd.f32 %v3686, %v3812
        %v3981 = vadd.f32 %v3643, %v3814
        %v3982 = vadd.f32 %v3687, %v3816
        %v3983 = vadd.f32 %v3688, %v3818
        %v3984 = vadd.f32 %v3689, %v3820
        %v3985 = vadd.f32 %v3644, %v3822
        %v3986 = vadd.f32 %v3690, %v3824
        %v3987 = vadd.f32 %v3691, %v3826
        %v3988 = vadd.f32 %v3692, %v3828
        %v3989 = vadd.f32 %v3645, %v3830
        %v3990 = vadd.f32 %v3693, %v3832
        %v3991 = vadd.f32 %v3694, %v3834
        %v3992 = vadd.f32 %v3695, %v3836
        %v3993 = vadd.f32 %v3646, %v3838
        %v3994 = vadd.f32 %v3696, %v3840
        %v3995 = vadd.f32 %v3697, %v3842
        %v3996 = vadd.f32 %v3698, %v3844
        %v3997 = vadd.f32 %v3647, %v3846
        %v3998 = vadd.f32 %v3699, %v3848
        %v3999 = vadd.f32 %v3700, %v3850
        %v4000 = vadd.f32 %v3701, %v3852
        %v4001 = vadd.f32 %v3648, %v3854
        %v4002 = vadd.f32 %v3702, %v3856
        %v4003 = vadd.f32 %v3703, %v3858
        %v4004 = vadd.f32 %v3704, %v3860
        %v4005 = vadd.f32 %v3649, %v3862
        %v4006 = vadd.f32 %v3705, %v3864
        %v4007 = vadd.f32 %v3706, %v3866
        %v4008 = vadd.f32 %v3707, %v3868
        %v4009 = vadd.f32 %v3650, %v3870
        %v4010 = vadd.f32 %v3708, %v3872
        %v4011 = vadd.f32 %v3709, %v3874
        %v4012 = vadd.f32 %v3710, %v3876
        %v4013 = vadd.f32 %v3651, %v3878
        %v4014 = vadd.f32 %v3711, %v3880
        %v4015 = vadd.f32 %v3712, %v3882
        %v4016 = vadd.f32 %v3713, %v3884
        %v4017 = vadd.f32 %v3652, %v3886
        %v4018 = vadd.f32 %v3714, %v3888
        %v4019 = vadd.f32 %v3715, %v3890
        %v4020 = vadd.f32 %v3716, %v3892
        %v4021 = vadd.f32 %v3957, %v3961
        %v4022 = vadd.f32 %v3958, %v3962
        %v4023 = vadd.f32 %v3959, %v3963
        %v4024 = vadd.f32 %v3960, %v3964
        %v4025 = vadd.f32 %v3965, %v3969
        %v4026 = vadd.f32 %v3966, %v3970
        %v4027 = vadd.f32 %v3967, %v3971
        %v4028 = vadd.f32 %v3968, %v3972
        %v4029 = vadd.f32 %v3973, %v3977
        %v4030 = vadd.f32 %v3974, %v3978
        %v4031 = vadd.f32 %v3975, %v3979
        %v4032 = vadd.f32 %v3976, %v3980
        %v4033 = vadd.f32 %v3981, %v3985
        %v4034 = vadd.f32 %v3982, %v3986
        %v4035 = vadd.f32 %v3983, %v3987
        %v4036 = vadd.f32 %v3984, %v3988
        %v4037 = vadd.f32 %v3989, %v3993
        %v4038 = vadd.f32 %v3990, %v3994
        %v4039 = vadd.f32 %v3991, %v3995
        %v4040 = vadd.f32 %v3992, %v3996
        %v4041 = vadd.f32 %v3997, %v4001
        %v4042 = vadd.f32 %v3998, %v4002
        %v4043 = vadd.f32 %v3999, %v4003
        %v4044 = vadd.f32 %v4000, %v4004
        %v4045 = vadd.f32 %v4005, %v4009
        %v4046 = vadd.f32 %v4006, %v4010
        %v4047 = vadd.f32 %v4007, %v4011
        %v4048 = vadd.f32 %v4008, %v4012
        %v4049 = vadd.f32 %v4013, %v4017
        %v4050 = vadd.f32 %v4014, %v4018
        %v4051 = vadd.f32 %v4015, %v4019
        %v4052 = vadd.f32 %v4016, %v4020
        %v4085 = vperm.slane %v4021, 0
        %v4086 = vperm.slane %v4022, 0
        %v4087 = vperm.slane %v4023, 0
        %v4088 = vperm.slane %v4024, 0
        %v4089 = vperm.slane %v4025, 0
        %v4090 = vperm.slane %v4026, 0
        %v4091 = vperm.slane %v4027, 0
        %v4092 = vperm.slane %v4028, 0
        %v4093 = vperm.slane %v4029, 0
        %v4094 = vperm.slane %v4030, 0
        %v4095 = vperm.slane %v4031, 0
        %v4096 = vperm.slane %v4032, 0
        %v4097 = vperm.slane %v4033, 0
        %v4098 = vperm.slane %v4034, 0
        %v4099 = vperm.slane %v4035, 0
        %v4100 = vperm.slane %v4036, 0
        %v4101 = vperm.slane %v4037, 0
        %v4102 = vperm.slane %v4038, 0
        %v4103 = vperm.slane %v4039, 0
        %v4104 = vperm.slane %v4040, 0
        %v4105 = vperm.slane %v4041, 0
        %v4106 = vperm.slane %v4042, 0
        %v4107 = vperm.slane %v4043, 0
        %v4108 = vperm.slane %v4044, 0
        %v4109 = vperm.slane %v4045, 0
        %v4110 = vperm.slane %v4046, 0
        %v4111 = vperm.slane %v4047, 0
        %v4112 = vperm.slane %v4048, 0
        %v4113 = vperm.slane %v4049, 0
        %v4114 = vperm.slane %v4050, 0
        %v4115 = vperm.slane %v4051, 0
        %v4116 = vperm.slane %v4052, 0
        %vm4117 = vcmask 1041409
        %v4118 = vsel %vm4117, %v4086, %v4085
        %vm4119 = vcmask 1042434
        %v4120 = vsel %vm4119, %v4087, %v4118
        %vm4121 = vcmask 1043459
        %v4122 = vsel %vm4121, %v4088, %v4120
        %vm4123 = vcmask 1044484
        %v4124 = vsel %vm4123, %v4089, %v4122
        %vm4125 = vcmask 1045509
        %v4126 = vsel %vm4125, %v4090, %v4124
        %vm4127 = vcmask 1046534
        %v4128 = vsel %vm4127, %v4091, %v4126
        %vm4129 = vcmask 1047559
        %v4130 = vsel %vm4129, %v4092, %v4128
        %v4131 = vsel %vm4117, %v4094, %v4093
        %v4132 = vsel %vm4119, %v4095, %v4131
        %v4133 = vsel %vm4121, %v4096, %v4132
        %v4134 = vsel %vm4123, %v4097, %v4133
        %v4135 = vsel %vm4125, %v4098, %v4134
        %v4136 = vsel %vm4127, %v4099, %v4135
        %v4137 = vsel %vm4129, %v4100, %v4136
        %v4138 = vsel %vm4117, %v4102, %v4101
        %v4139 = vsel %vm4119, %v4103, %v4138
        %v4140 = vsel %vm4121, %v4104, %v4139
        %v4141 = vsel %vm4123, %v4105, %v4140
        %v4142 = vsel %vm4125, %v4106, %v4141
        %v4143 = vsel %vm4127, %v4107, %v4142
        %v4144 = vsel %vm4129, %v4108, %v4143
        %v4145 = vsel %vm4117, %v4110, %v4109
        %v4146 = vsel %vm4119, %v4111, %v4145
        %v4147 = vsel %vm4121, %v4112, %v4146
        %v4148 = vsel %vm4123, %v4113, %v4147
        %v4149 = vsel %vm4125, %v4114, %v4148
        %v4150 = vsel %vm4127, %v4115, %v4149
        %v4151 = vsel %vm4129, %v4116, %v4150
        %4156 = vxpose.xlu0.b32.start [1/16] %v4130, 128
        %4157 = vxpose.xlu0.b32.cont [2/16] %v4137, 128
        %4158 = vxpose.xlu0.b32.cont [3/16] 0.0, 128
        %4159 = vxpose.xlu0.b32.cont [4/16] 0.0, 128
        %4160 = vxpose.xlu0.b32.cont [5/16] 0.0, 128
        %4161 = vxpose.xlu0.b32.cont [6/16] 0.0, 128
        %4162 = vxpose.xlu0.b32.cont [7/16] 0.0, 128
        %4163 = vxpose.xlu0.b32.cont [8/16] 0.0, 128
        %4164 = vxpose.xlu0.b32.cont [9/16] 0.0, 128
        %4165 = vxpose.xlu0.b32.cont [10/16] 0.0, 128
        %4166 = vxpose.xlu0.b32.cont [11/16] 0.0, 128
        %4167 = vxpose.xlu0.b32.cont [12/16] 0.0, 128
        %4168 = vxpose.xlu0.b32.cont [13/16] 0.0, 128
        %4169 = vxpose.xlu0.b32.cont [14/16] 0.0, 128
        %4170 = vxpose.xlu0.b32.cont [15/16] 0.0, 128
        %4171 = vxpose.xlu0.b32.end [16/16] 0.0, 128
        %v4172 = vpop.trf.xlu0
        %v4173 = vpop.trf.xlu0
        %v4174 = vpop.trf.xlu0
        %v4175 = vpop.trf.xlu0
        %v4176 = vpop.trf.xlu0
        %v4177 = vpop.trf.xlu0
        %v4178 = vpop.trf.xlu0
        %v4179 = vpop.trf.xlu0
        %v4180 = vpop.trf.xlu0
        %v4181 = vpop.trf.xlu0
        %v4182 = vpop.trf.xlu0
        %v4183 = vpop.trf.xlu0
        %v4184 = vpop.trf.xlu0
        %v4185 = vpop.trf.xlu0
        %v4186 = vpop.trf.xlu0
        %v4187 = vpop.trf.xlu0
        %4188 = vxpose.xlu0.b32.start [1/16] %v4144, 128
        %4189 = vxpose.xlu0.b32.cont [2/16] %v4151, 128
        %4190 = vxpose.xlu0.b32.cont [3/16] 0.0, 128
        %4191 = vxpose.xlu0.b32.cont [4/16] 0.0, 128
        %4192 = vxpose.xlu0.b32.cont [5/16] 0.0, 128
        %4193 = vxpose.xlu0.b32.cont [6/16] 0.0, 128
        %4194 = vxpose.xlu0.b32.cont [7/16] 0.0, 128
        %4195 = vxpose.xlu0.b32.cont [8/16] 0.0, 128
        %4196 = vxpose.xlu0.b32.cont [9/16] 0.0, 128
        %4197 = vxpose.xlu0.b32.cont [10/16] 0.0, 128
        %4198 = vxpose.xlu0.b32.cont [11/16] 0.0, 128
        %4199 = vxpose.xlu0.b32.cont [12/16] 0.0, 128
        %4200 = vxpose.xlu0.b32.cont [13/16] 0.0, 128
        %4201 = vxpose.xlu0.b32.cont [14/16] 0.0, 128
        %4202 = vxpose.xlu0.b32.cont [15/16] 0.0, 128
        %4203 = vxpose.xlu0.b32.end [16/16] 0.0, 128
        %v4204 = vpop.trf.xlu0
        %v4205 = vpop.trf.xlu0
        %v4206 = vpop.trf.xlu0
        %v4207 = vpop.trf.xlu0
        %v4208 = vpop.trf.xlu0
        %v4209 = vpop.trf.xlu0
        %v4210 = vpop.trf.xlu0
        %v4211 = vpop.trf.xlu0
        %v4212 = vpop.trf.xlu0
        %v4213 = vpop.trf.xlu0
        %v4214 = vpop.trf.xlu0
        %v4215 = vpop.trf.xlu0
        %v4216 = vpop.trf.xlu0
        %v4217 = vpop.trf.xlu0
        %v4218 = vpop.trf.xlu0
        %v4219 = vpop.trf.xlu0
        %v4220 = vrot.slane %v4172, 4
        %vm4221 = vcmask 1047556
        %v4222 = vsel %vm4221, 0.0, %v4220
        %v4224 = vunpack.c.l.s4 1983009808
        %v4225 = vunpack.c.0.s8 %v4224
        %v4226 = vperm.slane %v4172, %v4225
        %v4228 = vunpack.c.l.s4 1983009808
        %v4229 = vunpack.c.0.s8 %v4228
        %v4230 = vperm.slane %v4222, %v4229
        %v4231 = vrot.slane %v4204, 4
        %v4232 = vsel %vm4221, 0.0, %v4231
        %v4234 = vunpack.c.l.s4 1983009808
        %v4235 = vunpack.c.0.s8 %v4234
        %v4236 = vperm.slane %v4204, %v4235
        %v4238 = vunpack.c.l.s4 1983009808
        %v4239 = vunpack.c.0.s8 %v4238
        %v4240 = vperm.slane %v4232, %v4239
        %v4241 = vrot.slane %v4236, 4
        %v4242 = vsel %vm4221, %v4241, %v4226
        %v4243 = vrot.slane %v4226, 4
        %v4244 = vsel %vm4221, %v4236, %v4243
        %v4246 = vunpack.c.l.s4 1934713408
        %v4247 = vunpack.c.0.s8 %v4246
        %v4248 = vperm.slane %v4242, %v4247
        %v4250 = vunpack.c.l.s4 1934713408
        %v4251 = vunpack.c.0.s8 %v4250
        %v4252 = vperm.slane %v4244, %v4251
        %v4253 = vrot.slane %v4240, 4
        %v4254 = vsel %vm4221, %v4253, %v4230
        %v4255 = vrot.slane %v4230, 4
        %v4256 = vsel %vm4221, %v4240, %v4255
        %v4258 = vunpack.c.l.s4 1934713408
        %v4259 = vunpack.c.0.s8 %v4258
        %v4260 = vperm.slane %v4254, %v4259
        %v4262 = vunpack.c.l.s4 1934713408
        %v4263 = vunpack.c.0.s8 %v4262
        %v4264 = vperm.slane %v4256, %v4263
        %v4265 = vrot.slane %v4248, 4
        %v4266 = vsel %vm4221, 0.0, %v4265
        %v4267 = vrot.slane %v4252, 4
        %v4268 = vsel %vm4221, 0.0, %v4267
        %v4269 = vrot.slane %v4260, 4
        %v4270 = vsel %vm4221, 0.0, %v4269
        %v4271 = vrot.slane %v4264, 4
        %v4272 = vsel %vm4221, 0.0, %v4271
        %v4273 = vrot.slane %v4173, 4
        %v4274 = vsel %vm4221, 0.0, %v4273
        %v4276 = vunpack.c.l.s4 1983009808
        %v4277 = vunpack.c.0.s8 %v4276
        %v4278 = vperm.slane %v4173, %v4277
        %v4280 = vunpack.c.l.s4 1983009808
        %v4281 = vunpack.c.0.s8 %v4280
        %v4282 = vperm.slane %v4274, %v4281
        %v4283 = vrot.slane %v4205, 4
        %v4284 = vsel %vm4221, 0.0, %v4283
        %v4286 = vunpack.c.l.s4 1983009808
        %v4287 = vunpack.c.0.s8 %v4286
        %v4288 = vperm.slane %v4205, %v4287
        %v4290 = vunpack.c.l.s4 1983009808
        %v4291 = vunpack.c.0.s8 %v4290
        %v4292 = vperm.slane %v4284, %v4291
        %v4293 = vrot.slane %v4288, 4
        %v4294 = vsel %vm4221, %v4293, %v4278
        %v4295 = vrot.slane %v4278, 4
        %v4296 = vsel %vm4221, %v4288, %v4295
        %v4298 = vunpack.c.l.s4 1934713408
        %v4299 = vunpack.c.0.s8 %v4298
        %v4300 = vperm.slane %v4294, %v4299
        %v4302 = vunpack.c.l.s4 1934713408
        %v4303 = vunpack.c.0.s8 %v4302
        %v4304 = vperm.slane %v4296, %v4303
        %v4305 = vrot.slane %v4292, 4
        %v4306 = vsel %vm4221, %v4305, %v4282
        %v4307 = vrot.slane %v4282, 4
        %v4308 = vsel %vm4221, %v4292, %v4307
        %v4310 = vunpack.c.l.s4 1934713408
        %v4311 = vunpack.c.0.s8 %v4310
        %v4312 = vperm.slane %v4306, %v4311
        %v4314 = vunpack.c.l.s4 1934713408
        %v4315 = vunpack.c.0.s8 %v4314
        %v4316 = vperm.slane %v4308, %v4315
        %v4317 = vrot.slane %v4300, 4
        %v4318 = vsel %vm4221, 0.0, %v4317
        %v4319 = vrot.slane %v4304, 4
        %v4320 = vsel %vm4221, 0.0, %v4319
        %v4321 = vrot.slane %v4312, 4
        %v4322 = vsel %vm4221, 0.0, %v4321
        %v4323 = vrot.slane %v4316, 4
        %v4324 = vsel %vm4221, 0.0, %v4323
        %v4325 = vrot.slane %v4174, 4
        %v4326 = vsel %vm4221, 0.0, %v4325
        %v4328 = vunpack.c.l.s4 1983009808
        %v4329 = vunpack.c.0.s8 %v4328
        %v4330 = vperm.slane %v4174, %v4329
        %v4332 = vunpack.c.l.s4 1983009808
        %v4333 = vunpack.c.0.s8 %v4332
        %v4334 = vperm.slane %v4326, %v4333
        %v4335 = vrot.slane %v4206, 4
        %v4336 = vsel %vm4221, 0.0, %v4335
        %v4338 = vunpack.c.l.s4 1983009808
        %v4339 = vunpack.c.0.s8 %v4338
        %v4340 = vperm.slane %v4206, %v4339
        %v4342 = vunpack.c.l.s4 1983009808
        %v4343 = vunpack.c.0.s8 %v4342
        %v4344 = vperm.slane %v4336, %v4343
        %v4345 = vrot.slane %v4340, 4
        %v4346 = vsel %vm4221, %v4345, %v4330
        %v4347 = vrot.slane %v4330, 4
        %v4348 = vsel %vm4221, %v4340, %v4347
        %v4350 = vunpack.c.l.s4 1934713408
        %v4351 = vunpack.c.0.s8 %v4350
        %v4352 = vperm.slane %v4346, %v4351
        %v4354 = vunpack.c.l.s4 1934713408
        %v4355 = vunpack.c.0.s8 %v4354
        %v4356 = vperm.slane %v4348, %v4355
        %v4357 = vrot.slane %v4344, 4
        %v4358 = vsel %vm4221, %v4357, %v4334
        %v4359 = vrot.slane %v4334, 4
        %v4360 = vsel %vm4221, %v4344, %v4359
        %v4362 = vunpack.c.l.s4 1934713408
        %v4363 = vunpack.c.0.s8 %v4362
        %v4364 = vperm.slane %v4358, %v4363
        %v4366 = vunpack.c.l.s4 1934713408
        %v4367 = vunpack.c.0.s8 %v4366
        %v4368 = vperm.slane %v4360, %v4367
        %v4369 = vrot.slane %v4352, 4
        %v4370 = vsel %vm4221, 0.0, %v4369
        %v4371 = vrot.slane %v4356, 4
        %v4372 = vsel %vm4221, 0.0, %v4371
        %v4373 = vrot.slane %v4364, 4
        %v4374 = vsel %vm4221, 0.0, %v4373
        %v4375 = vrot.slane %v4368, 4
        %v4376 = vsel %vm4221, 0.0, %v4375
        %v4377 = vrot.slane %v4175, 4
        %v4378 = vsel %vm4221, 0.0, %v4377
        %v4380 = vunpack.c.l.s4 1983009808
        %v4381 = vunpack.c.0.s8 %v4380
        %v4382 = vperm.slane %v4175, %v4381
        %v4384 = vunpack.c.l.s4 1983009808
        %v4385 = vunpack.c.0.s8 %v4384
        %v4386 = vperm.slane %v4378, %v4385
        %v4387 = vrot.slane %v4207, 4
        %v4388 = vsel %vm4221, 0.0, %v4387
        %v4390 = vunpack.c.l.s4 1983009808
        %v4391 = vunpack.c.0.s8 %v4390
        %v4392 = vperm.slane %v4207, %v4391
        %v4394 = vunpack.c.l.s4 1983009808
        %v4395 = vunpack.c.0.s8 %v4394
        %v4396 = vperm.slane %v4388, %v4395
        %v4397 = vrot.slane %v4392, 4
        %v4398 = vsel %vm4221, %v4397, %v4382
        %v4399 = vrot.slane %v4382, 4
        %v4400 = vsel %vm4221, %v4392, %v4399
        %v4402 = vunpack.c.l.s4 1934713408
        %v4403 = vunpack.c.0.s8 %v4402
        %v4404 = vperm.slane %v4398, %v4403
        %v4406 = vunpack.c.l.s4 1934713408
        %v4407 = vunpack.c.0.s8 %v4406
        %v4408 = vperm.slane %v4400, %v4407
        %v4409 = vrot.slane %v4396, 4
        %v4410 = vsel %vm4221, %v4409, %v4386
        %v4411 = vrot.slane %v4386, 4
        %v4412 = vsel %vm4221, %v4396, %v4411
        %v4414 = vunpack.c.l.s4 1934713408
        %v4415 = vunpack.c.0.s8 %v4414
        %v4416 = vperm.slane %v4410, %v4415
        %v4418 = vunpack.c.l.s4 1934713408
        %v4419 = vunpack.c.0.s8 %v4418
        %v4420 = vperm.slane %v4412, %v4419
        %v4421 = vrot.slane %v4404, 4
        %v4422 = vsel %vm4221, 0.0, %v4421
        %v4423 = vrot.slane %v4408, 4
        %v4424 = vsel %vm4221, 0.0, %v4423
        %v4425 = vrot.slane %v4416, 4
        %v4426 = vsel %vm4221, 0.0, %v4425
        %v4427 = vrot.slane %v4420, 4
        %v4428 = vsel %vm4221, 0.0, %v4427
        %v4429 = vrot.slane %v4176, 4
        %v4430 = vsel %vm4221, 0.0, %v4429
        %v4432 = vunpack.c.l.s4 1983009808
        %v4433 = vunpack.c.0.s8 %v4432
        %v4434 = vperm.slane %v4176, %v4433
        %v4436 = vunpack.c.l.s4 1983009808
        %v4437 = vunpack.c.0.s8 %v4436
        %v4438 = vperm.slane %v4430, %v4437
        %v4439 = vrot.slane %v4208, 4
        %v4440 = vsel %vm4221, 0.0, %v4439
        %v4442 = vunpack.c.l.s4 1983009808
        %v4443 = vunpack.c.0.s8 %v4442
        %v4444 = vperm.slane %v4208, %v4443
        %v4446 = vunpack.c.l.s4 1983009808
        %v4447 = vunpack.c.0.s8 %v4446
        %v4448 = vperm.slane %v4440, %v4447
        %v4449 = vrot.slane %v4444, 4
        %v4450 = vsel %vm4221, %v4449, %v4434
        %v4451 = vrot.slane %v4434, 4
        %v4452 = vsel %vm4221, %v4444, %v4451
        %v4454 = vunpack.c.l.s4 1934713408
        %v4455 = vunpack.c.0.s8 %v4454
        %v4456 = vperm.slane %v4450, %v4455
        %v4458 = vunpack.c.l.s4 1934713408
        %v4459 = vunpack.c.0.s8 %v4458
        %v4460 = vperm.slane %v4452, %v4459
        %v4461 = vrot.slane %v4448, 4
        %v4462 = vsel %vm4221, %v4461, %v4438
        %v4463 = vrot.slane %v4438, 4
        %v4464 = vsel %vm4221, %v4448, %v4463
        %v4466 = vunpack.c.l.s4 1934713408
        %v4467 = vunpack.c.0.s8 %v4466
        %v4468 = vperm.slane %v4462, %v4467
        %v4470 = vunpack.c.l.s4 1934713408
        %v4471 = vunpack.c.0.s8 %v4470
        %v4472 = vperm.slane %v4464, %v4471
        %v4473 = vrot.slane %v4456, 4
        %v4474 = vsel %vm4221, 0.0, %v4473
        %v4475 = vrot.slane %v4460, 4
        %v4476 = vsel %vm4221, 0.0, %v4475
        %v4477 = vrot.slane %v4468, 4
        %v4478 = vsel %vm4221, 0.0, %v4477
        %v4479 = vrot.slane %v4472, 4
        %v4480 = vsel %vm4221, 0.0, %v4479
        %v4481 = vrot.slane %v4177, 4
        %v4482 = vsel %vm4221, 0.0, %v4481
        %v4484 = vunpack.c.l.s4 1983009808
        %v4485 = vunpack.c.0.s8 %v4484
        %v4486 = vperm.slane %v4177, %v4485
        %v4488 = vunpack.c.l.s4 1983009808
        %v4489 = vunpack.c.0.s8 %v4488
        %v4490 = vperm.slane %v4482, %v4489
        %v4491 = vrot.slane %v4209, 4
        %v4492 = vsel %vm4221, 0.0, %v4491
        %v4494 = vunpack.c.l.s4 1983009808
        %v4495 = vunpack.c.0.s8 %v4494
        %v4496 = vperm.slane %v4209, %v4495
        %v4498 = vunpack.c.l.s4 1983009808
        %v4499 = vunpack.c.0.s8 %v4498
        %v4500 = vperm.slane %v4492, %v4499
        %v4501 = vrot.slane %v4496, 4
        %v4502 = vsel %vm4221, %v4501, %v4486
        %v4503 = vrot.slane %v4486, 4
        %v4504 = vsel %vm4221, %v4496, %v4503
        %v4506 = vunpack.c.l.s4 1934713408
        %v4507 = vunpack.c.0.s8 %v4506
        %v4508 = vperm.slane %v4502, %v4507
        %v4510 = vunpack.c.l.s4 1934713408
        %v4511 = vunpack.c.0.s8 %v4510
        %v4512 = vperm.slane %v4504, %v4511
        %v4513 = vrot.slane %v4500, 4
        %v4514 = vsel %vm4221, %v4513, %v4490
        %v4515 = vrot.slane %v4490, 4
        %v4516 = vsel %vm4221, %v4500, %v4515
        %v4518 = vunpack.c.l.s4 1934713408
        %v4519 = vunpack.c.0.s8 %v4518
        %v4520 = vperm.slane %v4514, %v4519
        %v4522 = vunpack.c.l.s4 1934713408
        %v4523 = vunpack.c.0.s8 %v4522
        %v4524 = vperm.slane %v4516, %v4523
        %v4525 = vrot.slane %v4508, 4
        %v4526 = vsel %vm4221, 0.0, %v4525
        %v4527 = vrot.slane %v4512, 4
        %v4528 = vsel %vm4221, 0.0, %v4527
        %v4529 = vrot.slane %v4520, 4
        %v4530 = vsel %vm4221, 0.0, %v4529
        %v4531 = vrot.slane %v4524, 4
        %v4532 = vsel %vm4221, 0.0, %v4531
        %v4533 = vrot.slane %v4178, 4
        %v4534 = vsel %vm4221, 0.0, %v4533
        %v4536 = vunpack.c.l.s4 1983009808
        %v4537 = vunpack.c.0.s8 %v4536
        %v4538 = vperm.slane %v4178, %v4537
        %v4540 = vunpack.c.l.s4 1983009808
        %v4541 = vunpack.c.0.s8 %v4540
        %v4542 = vperm.slane %v4534, %v4541
        %v4543 = vrot.slane %v4210, 4
        %v4544 = vsel %vm4221, 0.0, %v4543
        %v4546 = vunpack.c.l.s4 1983009808
        %v4547 = vunpack.c.0.s8 %v4546
        %v4548 = vperm.slane %v4210, %v4547
        %v4550 = vunpack.c.l.s4 1983009808
        %v4551 = vunpack.c.0.s8 %v4550
        %v4552 = vperm.slane %v4544, %v4551
        %v4553 = vrot.slane %v4548, 4
        %v4554 = vsel %vm4221, %v4553, %v4538
        %v4555 = vrot.slane %v4538, 4
        %v4556 = vsel %vm4221, %v4548, %v4555
        %v4558 = vunpack.c.l.s4 1934713408
        %v4559 = vunpack.c.0.s8 %v4558
        %v4560 = vperm.slane %v4554, %v4559
        %v4562 = vunpack.c.l.s4 1934713408
        %v4563 = vunpack.c.0.s8 %v4562
        %v4564 = vperm.slane %v4556, %v4563
        %v4565 = vrot.slane %v4552, 4
        %v4566 = vsel %vm4221, %v4565, %v4542
        %v4567 = vrot.slane %v4542, 4
        %v4568 = vsel %vm4221, %v4552, %v4567
        %v4570 = vunpack.c.l.s4 1934713408
        %v4571 = vunpack.c.0.s8 %v4570
        %v4572 = vperm.slane %v4566, %v4571
        %v4574 = vunpack.c.l.s4 1934713408
        %v4575 = vunpack.c.0.s8 %v4574
        %v4576 = vperm.slane %v4568, %v4575
        %v4577 = vrot.slane %v4560, 4
        %v4578 = vsel %vm4221, 0.0, %v4577
        %v4579 = vrot.slane %v4564, 4
        %v4580 = vsel %vm4221, 0.0, %v4579
        %v4581 = vrot.slane %v4572, 4
        %v4582 = vsel %vm4221, 0.0, %v4581
        %v4583 = vrot.slane %v4576, 4
        %v4584 = vsel %vm4221, 0.0, %v4583
        %v4585 = vrot.slane %v4179, 4
        %v4586 = vsel %vm4221, 0.0, %v4585
        %v4588 = vunpack.c.l.s4 1983009808
        %v4589 = vunpack.c.0.s8 %v4588
        %v4590 = vperm.slane %v4179, %v4589
        %v4592 = vunpack.c.l.s4 1983009808
        %v4593 = vunpack.c.0.s8 %v4592
        %v4594 = vperm.slane %v4586, %v4593
        %v4595 = vrot.slane %v4211, 4
        %v4596 = vsel %vm4221, 0.0, %v4595
        %v4598 = vunpack.c.l.s4 1983009808
        %v4599 = vunpack.c.0.s8 %v4598
        %v4600 = vperm.slane %v4211, %v4599
        %v4602 = vunpack.c.l.s4 1983009808
        %v4603 = vunpack.c.0.s8 %v4602
        %v4604 = vperm.slane %v4596, %v4603
        %v4605 = vrot.slane %v4600, 4
        %v4606 = vsel %vm4221, %v4605, %v4590
        %v4607 = vrot.slane %v4590, 4
        %v4608 = vsel %vm4221, %v4600, %v4607
        %v4610 = vunpack.c.l.s4 1934713408
        %v4611 = vunpack.c.0.s8 %v4610
        %v4612 = vperm.slane %v4606, %v4611
        %v4614 = vunpack.c.l.s4 1934713408
        %v4615 = vunpack.c.0.s8 %v4614
        %v4616 = vperm.slane %v4608, %v4615
        %v4617 = vrot.slane %v4604, 4
        %v4618 = vsel %vm4221, %v4617, %v4594
        %v4619 = vrot.slane %v4594, 4
        %v4620 = vsel %vm4221, %v4604, %v4619
        %v4622 = vunpack.c.l.s4 1934713408
        %v4623 = vunpack.c.0.s8 %v4622
        %v4624 = vperm.slane %v4618, %v4623
        %v4626 = vunpack.c.l.s4 1934713408
        %v4627 = vunpack.c.0.s8 %v4626
        %v4628 = vperm.slane %v4620, %v4627
        %v4629 = vrot.slane %v4612, 4
        %v4630 = vsel %vm4221, 0.0, %v4629
        %v4631 = vrot.slane %v4616, 4
        %v4632 = vsel %vm4221, 0.0, %v4631
        %v4633 = vrot.slane %v4624, 4
        %v4634 = vsel %vm4221, 0.0, %v4633
        %v4635 = vrot.slane %v4628, 4
        %v4636 = vsel %vm4221, 0.0, %v4635
        %4638 = vrot.lane.b32.xlu0 %v4266, 16
        %v4639 = vpop.permute.xlu0 %4638
        %4642 = vrot.lane.b32.xlu0 %v4252, 32
        %v4643 = vpop.permute.xlu0 %4642
        %4646 = vrot.lane.b32.xlu0 %v4268, 48
        %v4647 = vpop.permute.xlu0 %4646
        %4650 = vrot.lane.b32.xlu0 %v4260, 64
        %v4651 = vpop.permute.xlu0 %4650
        %4654 = vrot.lane.b32.xlu0 %v4270, 80
        %v4655 = vpop.permute.xlu0 %4654
        %4658 = vrot.lane.b32.xlu0 %v4264, 96
        %v4659 = vpop.permute.xlu0 %4658
        %4662 = vrot.lane.b32.xlu0 %v4272, 112
        %v4663 = vpop.permute.xlu0 %4662
        %4666 = vrot.lane.b32.xlu0 %v4318, 16
        %v4667 = vpop.permute.xlu0 %4666
        %4670 = vrot.lane.b32.xlu0 %v4304, 32
        %v4671 = vpop.permute.xlu0 %4670
        %4674 = vrot.lane.b32.xlu0 %v4320, 48
        %v4675 = vpop.permute.xlu0 %4674
        %4678 = vrot.lane.b32.xlu0 %v4312, 64
        %v4679 = vpop.permute.xlu0 %4678
        %4682 = vrot.lane.b32.xlu0 %v4322, 80
        %v4683 = vpop.permute.xlu0 %4682
        %4686 = vrot.lane.b32.xlu0 %v4316, 96
        %v4687 = vpop.permute.xlu0 %4686
        %4690 = vrot.lane.b32.xlu0 %v4324, 112
        %v4691 = vpop.permute.xlu0 %4690
        %4694 = vrot.lane.b32.xlu0 %v4370, 16
        %v4695 = vpop.permute.xlu0 %4694
        %4698 = vrot.lane.b32.xlu0 %v4356, 32
        %v4699 = vpop.permute.xlu0 %4698
        %4702 = vrot.lane.b32.xlu0 %v4372, 48
        %v4703 = vpop.permute.xlu0 %4702
        %4706 = vrot.lane.b32.xlu0 %v4364, 64
        %v4707 = vpop.permute.xlu0 %4706
        %4710 = vrot.lane.b32.xlu0 %v4374, 80
        %v4711 = vpop.permute.xlu0 %4710
        %4714 = vrot.lane.b32.xlu0 %v4368, 96
        %v4715 = vpop.permute.xlu0 %4714
        %4718 = vrot.lane.b32.xlu0 %v4376, 112
        %v4719 = vpop.permute.xlu0 %4718
        %4722 = vrot.lane.b32.xlu0 %v4422, 16
        %v4723 = vpop.permute.xlu0 %4722
        %4726 = vrot.lane.b32.xlu0 %v4408, 32
        %v4727 = vpop.permute.xlu0 %4726
        %4730 = vrot.lane.b32.xlu0 %v4424, 48
        %v4731 = vpop.permute.xlu0 %4730
        %4734 = vrot.lane.b32.xlu0 %v4416, 64
        %v4735 = vpop.permute.xlu0 %4734
        %4738 = vrot.lane.b32.xlu0 %v4426, 80
        %v4739 = vpop.permute.xlu0 %4738
        %4742 = vrot.lane.b32.xlu0 %v4420, 96
        %v4743 = vpop.permute.xlu0 %4742
        %4746 = vrot.lane.b32.xlu0 %v4428, 112
        %v4747 = vpop.permute.xlu0 %4746
        %4750 = vrot.lane.b32.xlu0 %v4474, 16
        %v4751 = vpop.permute.xlu0 %4750
        %4754 = vrot.lane.b32.xlu0 %v4460, 32
        %v4755 = vpop.permute.xlu0 %4754
        %4758 = vrot.lane.b32.xlu0 %v4476, 48
        %v4759 = vpop.permute.xlu0 %4758
        %4762 = vrot.lane.b32.xlu0 %v4468, 64
        %v4763 = vpop.permute.xlu0 %4762
        %4766 = vrot.lane.b32.xlu0 %v4478, 80
        %v4767 = vpop.permute.xlu0 %4766
        %4770 = vrot.lane.b32.xlu0 %v4472, 96
        %v4771 = vpop.permute.xlu0 %4770
        %4774 = vrot.lane.b32.xlu0 %v4480, 112
        %v4775 = vpop.permute.xlu0 %4774
        %4778 = vrot.lane.b32.xlu0 %v4526, 16
        %v4779 = vpop.permute.xlu0 %4778
        %4782 = vrot.lane.b32.xlu0 %v4512, 32
        %v4783 = vpop.permute.xlu0 %4782
        %4786 = vrot.lane.b32.xlu0 %v4528, 48
        %v4787 = vpop.permute.xlu0 %4786
        %4790 = vrot.lane.b32.xlu0 %v4520, 64
        %v4791 = vpop.permute.xlu0 %4790
        %4794 = vrot.lane.b32.xlu0 %v4530, 80
        %v4795 = vpop.permute.xlu0 %4794
        %4798 = vrot.lane.b32.xlu0 %v4524, 96
        %v4799 = vpop.permute.xlu0 %4798
        %4802 = vrot.lane.b32.xlu0 %v4532, 112
        %v4803 = vpop.permute.xlu0 %4802
        %4806 = vrot.lane.b32.xlu0 %v4578, 16
        %v4807 = vpop.permute.xlu0 %4806
        %4810 = vrot.lane.b32.xlu0 %v4564, 32
        %v4811 = vpop.permute.xlu0 %4810
        %4814 = vrot.lane.b32.xlu0 %v4580, 48
        %v4815 = vpop.permute.xlu0 %4814
        %4818 = vrot.lane.b32.xlu0 %v4572, 64
        %v4819 = vpop.permute.xlu0 %4818
        %4822 = vrot.lane.b32.xlu0 %v4582, 80
        %v4823 = vpop.permute.xlu0 %4822
        %4826 = vrot.lane.b32.xlu0 %v4576, 96
        %v4827 = vpop.permute.xlu0 %4826
        %4830 = vrot.lane.b32.xlu0 %v4584, 112
        %v4831 = vpop.permute.xlu0 %4830
        %4834 = vrot.lane.b32.xlu0 %v4630, 16
        %v4835 = vpop.permute.xlu0 %4834
        %4838 = vrot.lane.b32.xlu0 %v4616, 32
        %v4839 = vpop.permute.xlu0 %4838
        %4842 = vrot.lane.b32.xlu0 %v4632, 48
        %v4843 = vpop.permute.xlu0 %4842
        %4846 = vrot.lane.b32.xlu0 %v4624, 64
        %v4847 = vpop.permute.xlu0 %4846
        %4850 = vrot.lane.b32.xlu0 %v4634, 80
        %v4851 = vpop.permute.xlu0 %4850
        %4854 = vrot.lane.b32.xlu0 %v4628, 96
        %v4855 = vpop.permute.xlu0 %4854
        %4858 = vrot.lane.b32.xlu0 %v4636, 112
        %v4859 = vpop.permute.xlu0 %4858
        %vm4861 = vcmask 130048
        %v4862 = vsel %vm4861, %v4248, %v4639
        %vm4863 = vcmask 261120
        %v4864 = vsel %vm4863, %v4862, %v4643
        %vm4865 = vcmask 392192
        %v4866 = vsel %vm4865, %v4864, %v4647
        %v4867 = vsel %vm2745, %v4866, %v4651
        %vm4868 = vcmask 654336
        %v4869 = vsel %vm4868, %v4867, %v4655
        %vm4870 = vcmask 785408
        %v4871 = vsel %vm4870, %v4869, %v4659
        %vm4872 = vcmask 916480
        %v4873 = vsel %vm4872, %v4871, %v4663
        %v4874 = vsel %vm4861, %v4300, %v4667
        %v4875 = vsel %vm4863, %v4874, %v4671
        %v4876 = vsel %vm4865, %v4875, %v4675
        %v4877 = vsel %vm2745, %v4876, %v4679
        %v4878 = vsel %vm4868, %v4877, %v4683
        %v4879 = vsel %vm4870, %v4878, %v4687
        %v4880 = vsel %vm4872, %v4879, %v4691
        %v4881 = vsel %vm4861, %v4352, %v4695
        %v4882 = vsel %vm4863, %v4881, %v4699
        %v4883 = vsel %vm4865, %v4882, %v4703
        %v4884 = vsel %vm2745, %v4883, %v4707
        %v4885 = vsel %vm4868, %v4884, %v4711
        %v4886 = vsel %vm4870, %v4885, %v4715
        %v4887 = vsel %vm4872, %v4886, %v4719
        %v4888 = vsel %vm4861, %v4404, %v4723
        %v4889 = vsel %vm4863, %v4888, %v4727
        %v4890 = vsel %vm4865, %v4889, %v4731
        %v4891 = vsel %vm2745, %v4890, %v4735
        %v4892 = vsel %vm4868, %v4891, %v4739
        %v4893 = vsel %vm4870, %v4892, %v4743
        %v4894 = vsel %vm4872, %v4893, %v4747
        %v4895 = vsel %vm4861, %v4456, %v4751
        %v4896 = vsel %vm4863, %v4895, %v4755
        %v4897 = vsel %vm4865, %v4896, %v4759
        %v4898 = vsel %vm2745, %v4897, %v4763
        %v4899 = vsel %vm4868, %v4898, %v4767
        %v4900 = vsel %vm4870, %v4899, %v4771
        %v4901 = vsel %vm4872, %v4900, %v4775
        %v4902 = vsel %vm4861, %v4508, %v4779
        %v4903 = vsel %vm4863, %v4902, %v4783
        %v4904 = vsel %vm4865, %v4903, %v4787
        %v4905 = vsel %vm2745, %v4904, %v4791
        %v4906 = vsel %vm4868, %v4905, %v4795
        %v4907 = vsel %vm4870, %v4906, %v4799
        %v4908 = vsel %vm4872, %v4907, %v4803
        %v4909 = vsel %vm4861, %v4560, %v4807
        %v4910 = vsel %vm4863, %v4909, %v4811
        %v4911 = vsel %vm4865, %v4910, %v4815
        %v4912 = vsel %vm2745, %v4911, %v4819
        %v4913 = vsel %vm4868, %v4912, %v4823
        %v4914 = vsel %vm4870, %v4913, %v4827
        %v4915 = vsel %vm4872, %v4914, %v4831
        %v4916 = vsel %vm4861, %v4612, %v4835
        %v4917 = vsel %vm4863, %v4916, %v4839
        %v4918 = vsel %vm4865, %v4917, %v4843
        %v4919 = vsel %vm2745, %v4918, %v4847
        %v4920 = vsel %vm4868, %v4919, %v4851
        %v4921 = vsel %vm4870, %v4920, %v4855
        %v4922 = vsel %vm4872, %v4921, %v4859
        %v4931 = vrot.slane %v4880, 6
        %v4932 = vrot.slane %v4887, 4
        %v4933 = vrot.slane %v4894, 2
        %v4934 = vrot.slane %v4908, 6
        %v4935 = vrot.slane %v4915, 4
        %v4936 = vrot.slane %v4922, 2
        %vm4937 = vcmask 1041408
        %v4938 = vsel %vm4937, %v4873, %v4931
        %vm4939 = vcmask 1045508
        %v4940 = vsel %vm4939, %v4932, %v4933
        %v4941 = vsel %vm915, %v4938, %v4940
        %v4942 = vsel %vm4937, %v4901, %v4934
        %v4943 = vsel %vm4939, %v4935, %v4936
        %v4944 = vsel %vm915, %v4942, %v4943
        %4947 = vst [vmem:[%s183] sm:$0xff] %v4941
        %4948 = vst [vmem:[%s183 + $0x8] sm:$0xff] %v4944
        %s4949 = sand.u32 %s94, 1
        %s4950 = scalar_lea.sflag [#allocation5], %s4949
        %s4951 = sand.u32 %s94, 1
        %s4952 = smul.addr %s4951, 16
        %s4953 = scalar_lea.vmem [#allocation6], %s4952
        // Predicated region
        $region37: #{tpu_custom_call.1} parent=31 // pred_check
          %p4954 = pneg %p104
        $region38: #{tpu_custom_call.1} parent=31 // pred_check_branch
          %4956 = sbr.rel (%p4954) target = $region40
        $region39: #{tpu_custom_call.1} parent=31 // pred_region
          %4958 = vsyncadd %s4950, 0
          %s4959 = smul.addr %s18, 8
          %s4960 = smul.addr %s4959, 2
          %s4961 = scalar_lea.hbm %s3, %s4960
          %s4963 = sshll.u32 %s4953, 4
          %s4964 = int_to_ptr.vmem [resolvable:$true] %s4963
          %s4965 = sshll.u32 %s4961, 4
          %s4966 = int_to_ptr.hbm [resolvable:$true] %s4965
          %4968 = dma.vmem_to_hbm [thread:$0]  %s4964, 256, %s4966, %s4950
        $region40: #{tpu_custom_call.1} parent=31 // pred_fallthru
          _
      $region32: #{tpu_custom_call.1} parent=5 // pred_fallthru
        _
      %p4969 = scmp.le.s32.totalorder 2, %s13
      // Predicated region
      $region41: #{tpu_custom_call.1} parent=5 // pred_check
        %p4970 = pneg %p4969
      $region42: #{tpu_custom_call.1} parent=5 // pred_check_branch
        %4972 = sbr.rel (%p4970) target = $region44
      $region43: #{tpu_custom_call.1} parent=5 // pred_region
        %s4973 = ssub.s32 %s13, 2
        // Predicated region
        $region45: #{tpu_custom_call.1} parent=43 // pred_check
          %p4974 = pneg %p110
        $region46: #{tpu_custom_call.1} parent=43 // pred_check_branch
          %4976 = sbr.rel (%p4974) target = $region48
        $region47: #{tpu_custom_call.1} parent=43 // pred_region
          %s4977 = sand.u32 %s95, 1
          %s4978 = scalar_lea.sflag [#allocation5], %s4977
          %s4979 = sand.u32 %s95, 1
          %s4980 = smul.addr %s4979, 16
          %s4981 = scalar_lea.vmem [#allocation6], %s4980
          %4983 = dma.done %s4978, 256
        $region48: #{tpu_custom_call.1} parent=43 // pred_fallthru
          _
      $region44: #{tpu_custom_call.1} parent=5 // pred_fallthru
        _
    $region6: #{tpu_custom_call.1} parent=1 // loop_footer
      %s17 = sadd.s32 1, %s13
    $region7: #{tpu_custom_call.1} parent=1 // loop_footer_branch
      %12 = sbr.rel target = $region3
    $region8: #{tpu_custom_call.1} parent=1 // loop_exit
      _
    %4984 = vsyncpa [#allocation4], 1
    %s4985 = scalar_lea.sflag [#allocation4], 1
    %4986 = vsyncpa %s4985, 1
    %4987 = vsyncpa [#allocation5], 1
    %s4988 = scalar_lea.sflag [#allocation5], 1
    %4989 = vsyncpa %s4988, 1

</llo_original>
